<compile_context>
chip_gen: v7x
topology: tpu7x:2x2x1
jax: 0.10.0
libtpu: 0.0.40
codegen_flags: <defaults>
</compile_context>

<pallas_src>
import math
from functools import partial

import jax
import jax.numpy as jnp
from jax import lax
from jax.experimental import pallas as pl
from jax.experimental.pallas import tpu as pltpu


# --------------------------------------------------------------------------- helpers
def _round_up(x, m):
    return ((x + m - 1) // m) * m


def _ceildiv(a, b):
    return -(-a // b)


def _vmem_limit_bytes():
    """Generation-aware scoped-VMEM budget (v5e/v6e: 128 MiB, v7x: 64 MiB physical)."""
    try:
        cap = int(pltpu.get_tpu_info().vmem_capacity_bytes)
        return max(32 << 20, min((cap * 3) // 4, 96 << 20))
    except Exception:
        return 40 << 20


def _pick_tb(n, per_sample_bytes, vmem_limit):
    """Samples per grid step: fill roughly half the VMEM budget."""
    budget = max(vmem_limit // 2, 4 << 20)
    return int(max(1, min(n, budget // max(per_sample_bytes, 1))))


def _taps(wo):
    """(phase, lane_shift) for the 9 taps of a 3x3 stride-2 window, tap index = kh*3+kw."""
    taps = []
    for kh in range(3):
        for kw in range(3):
            phase = (kh % 2) * 2 + (kw % 2)
            shift = (kh // 2) * (wo + 1) + (kw // 2)
            taps.append((phase, shift))
    return tuple(taps)


def _pool_geom(h, w):
    ho, wo = (h + 1) // 2, (w + 1) // 2
    lp = (ho + 1) * (wo + 1)          # flattened phase size (has the +1 halo row/col)
    L = _round_up(lp, 128)            # per-sample lane chunk (no extra shift margin)
    return ho, wo, lp, L


def _phase_split(xc, L, n_pad):
    """Polyphase split of the pad-1 input for 3x3 stride-2 windows.

    xc: (Cp, N, H, W) channels-leading (padded channels zero) ->
    f:  (4*Cp, n_pad*L) where rows [p*Cp:(p+1)*Cp] hold phase p = 2*ph + pw
        (xpad[:, :, ph::2, pw::2] flattened) and sample i occupies lanes [i*L, i*L+lp).
    """
    cp, n, h, w = xc.shape
    ho, wo, lp, _ = _pool_geom(h, w)
    hp, wp = 2 * ho + 2, 2 * wo + 2
    xp = jnp.pad(xc, ((0, 0), (0, 0), (1, hp - h - 1), (1, wp - w - 1)))
    ph = jnp.stack([xp[:, :, a::2, b::2] for a in (0, 1) for b in (0, 1)], axis=0)
    ph = ph.reshape(4, cp, n, lp)
    ph = jnp.pad(ph, ((0, 0), (0, 0), (0, n_pad - n), (0, L - lp)))
    return ph.reshape(4 * cp, n_pad * L)


def _crop_spatial(out2d, n, ho, wo, L):
    """(C, n_pad*L) conv/pool output -> (C, N, Ho, Wo): drop halo column + lane padding."""
    c = out2d.shape[0]
    y = out2d.reshape(c, -1, L)[:, :n, :ho * (wo + 1)]
    y = y.reshape(c, n, ho, wo + 1)[:, :, :, :wo]
    return y


def _roll_left(v, s):
    """v shifted so lane j reads lane j+s (cyclic); wrap only touches discarded lanes."""
    if s == 0:
        return v
    return pltpu.roll(v, (-s) % v.shape[-1], 1)


# --------------------------------------------------------------------------- conv2d (3x3, stride 2, pad 1, no bias)
def _conv_kernel(f_ref, w_ref, o_ref, *, taps, cinp):
    fx = f_ref[...]                                            # (4*Cinp, TB*L)
    parts = [_roll_left(fx[p * cinp:(p + 1) * cinp, :], s) for (p, s) in taps]
    xs = jnp.concatenate(parts, axis=0)                        # (9*Cinp, TB*L)
    o_ref[...] = jnp.dot(w_ref[...], xs,                       # one fat K=9*Cinp dot
                         preferred_element_type=jnp.float32)


def conv2d_s2(xc, w9):
    """Conv2d(k=3, s=2, p=1, bias=False) on channels-leading (Cinp, N, H, W) input."""
    cinp, n, h, w = xc.shape
    coutp, k9 = w9.shape
    assert k9 == 9 * cinp
    ho, wo, _, L = _pool_geom(h, w)
    vmem = _vmem_limit_bytes()
    per_sample = (2 * 4 * cinp + 2 * coutp + 9 * cinp + 4 * cinp) * L * 4
    tb = _pick_tb(n, per_sample, vmem)
    n_pad = tb * _ceildiv(n, tb)
    f = _phase_split(xc, L, n_pad)
    taps = _taps(wo)

    out = pl.pallas_call(
        partial(_conv_kernel, taps=taps, cinp=cinp),
        grid=(n_pad // tb,),
        in_specs=[
            pl.BlockSpec((4 * cinp, tb * L), lambda i: (0, i)),
            pl.BlockSpec((coutp, k9), lambda i: (0, 0)),
        ],
        out_specs=pl.BlockSpec((coutp, tb * L), lambda i: (0, i)),
        out_shape=jax.ShapeDtypeStruct((coutp, n_pad * L), jnp.float32),
        compiler_params=pltpu.CompilerParams(
            dimension_semantics=("parallel",), vmem_limit_bytes=vmem),
    )(f, w9)
    return _crop_spatial(out, n, ho, wo, L)


# --------------------------------------------------------------------------- avgpool (3x3, stride 2, pad 1, count_include_pad)
def _pool_kernel(f_ref, o_ref, *, taps, cp):
    fx = f_ref[...]                                            # (4*Cp, TB*L)
    acc = jnp.zeros(o_ref.shape, jnp.float32)
    for (p, s) in taps:
        acc = acc + _roll_left(fx[p * cp:(p + 1) * cp, :], s)
    o_ref[...] = acc * (1.0 / 9.0)                             # pure VPU, no MXU


def avgpool_s2(xc):
    cp, n, h, w = xc.shape
    ho, wo, _, L = _pool_geom(h, w)
    vmem = _vmem_limit_bytes()
    per_sample = (2 * 4 * cp + 2 * cp + 5 * cp) * L * 4
    tb = _pick_tb(n, per_sample, vmem)
    n_pad = tb * _ceildiv(n, tb)
    f = _phase_split(xc, L, n_pad)
    taps = _taps(wo)

    out = pl.pallas_call(
        partial(_pool_kernel, taps=taps, cp=cp),
        grid=(n_pad // tb,),
        in_specs=[pl.BlockSpec((4 * cp, tb * L), lambda i: (0, i))],
        out_specs=pl.BlockSpec((cp, tb * L), lambda i: (0, i)),
        out_shape=jax.ShapeDtypeStruct((cp, n_pad * L), jnp.float32),
        compiler_params=pltpu.CompilerParams(
            dimension_semantics=("parallel",), vmem_limit_bytes=vmem),
    )(f)
    return _crop_spatial(out, n, ho, wo, L)


# --------------------------------------------------------------------------- fused ResidualBlock stage
def _res_stage_kernel(x_hbm, mask_ref, w_ref, bn_ref, o_ref, *, inv_count):
    # Activation layout: (Cp, N*Lpad) -- channels in sublanes, pixels in lanes.
    # Grid axis = residual-block index; the activation stays resident in o_ref.
    @pl.when(pl.program_id(0) == 0)
    def _():
        pltpu.sync_copy(x_hbm, o_ref)          # HBM -> resident output block (once)

    x0 = o_ref[...]
    maskf = mask_ref[...]                      # (1, M) float 0/1 valid-lane mask
    bnv = bn_ref[0]                            # (Cp, 4) = [g1, b1, g2, b2]
    m = o_ref.shape[-1]

    def conv1d(v, j):
        # Conv1d(k=3, pad=1, no bias): v has zero padding lanes, so the cyclic rolls
        # bring in the required zeros at each sample's sequence boundaries.
        vm = pltpu.roll(v, 1, 1)               # x[l-1]
        vp = pltpu.roll(v, m - 1, 1)           # x[l+1]
        return (jnp.dot(w_ref[0, 3 * j + 0], vm, preferred_element_type=jnp.float32)
                + jnp.dot(w_ref[0, 3 * j + 1], v, preferred_element_type=jnp.float32)
                + jnp.dot(w_ref[0, 3 * j + 2], vp, preferred_element_type=jnp.float32))

    def bnorm(v, g, b):
        # Training-mode BatchNorm1d: batch stats over (N, L), biased variance,
        # single-pass E[x^2]-E[x]^2 over the masked valid lanes.
        vm_ = v * maskf
        s1 = jnp.sum(vm_, axis=1, keepdims=True)
        s2 = jnp.sum(vm_ * vm_, axis=1, keepdims=True)
        mean = s1 * inv_count
        var = jnp.maximum(s2 * inv_count - mean * mean, 0.0)
        return (v - mean) * lax.rsqrt(var + 1e-5) * g + b

    h1 = jnp.maximum(bnorm(conv1d(x0, 0), bnv[:, 0:1], bnv[:, 1:2]), 0.0) * maskf
    h2 = bnorm(conv1d(h1, 1), bnv[:, 2:3], bnv[:, 3:4]) + x0
    o_ref[...] = jnp.maximum(h2, 0.0) * maskf  # keep padding lanes zero (invariant)


def res_stage(xc, stage_params):
    """Chain of ResidualBlocks on (Cp, N, H, W) viewed as (N, C, H*W), one fused call."""
    w_all, bn_all = stage_params               # (B, 6, Cp, Cp), (B, Cp, 4)
    nblocks = w_all.shape[0]
    cp, n, h, w = xc.shape
    l = h * w
    l_pad = _round_up(l + 1, 128)              # >=1 zero lane per sample (conv halo)
    m = n * l_pad
    vmem = _vmem_limit_bytes()
    # TODO(synk): add an L/N tiling fallback (with +/-1 halo) if cp*m*4*~6 exceeds vmem.

    x2d = jnp.pad(xc.reshape(cp, n, l), ((0, 0), (0, 0), (0, l_pad - l))).reshape(cp, m)
    maskf = (jnp.arange(m, dtype=jnp.int32) % l_pad < l).astype(jnp.float32).reshape(1, m)

    out = pl.pallas_call(
        partial(_res_stage_kernel, inv_count=1.0 / float(n * l)),
        grid=(nblocks,),
        in_specs=[
            pl.BlockSpec(memory_space=pl.ANY),               # raw HBM, DMA'd once
            pl.BlockSpec((1, m), lambda b: (0, 0)),
            pl.BlockSpec((1, 6, cp, cp), lambda b: (b, 0, 0, 0)),
            pl.BlockSpec((1, cp, 4), lambda b: (b, 0, 0)),
        ],
        out_specs=pl.BlockSpec((cp, m), lambda b: (0, 0)),
        out_shape=jax.ShapeDtypeStruct((cp, m), jnp.float32),
        compiler_params=pltpu.CompilerParams(
            dimension_semantics=("arbitrary",), vmem_limit_bytes=vmem),
    )(x2d, maskf, w_all, bn_all)

    return out.reshape(cp, n, l_pad)[:, :, :l].reshape(cp, n, h, w)


# --------------------------------------------------------------------------- parameters
def _uniform(key, shape, fan_in):
    bound = 1.0 / math.sqrt(fan_in)
    return jax.random.uniform(key, shape, jnp.float32, -bound, bound)


def _pack_conv2d_w(w, cinp, coutp):
    """(Cout, Cin, 3, 3) -> (Coutp, 9*Cinp), column block t*Cinp:(t+1)*Cinp = tap t."""
    cout, cin = w.shape[0], w.shape[1]
    wt = jnp.transpose(w, (2, 3, 0, 1)).reshape(9, cout, cin)          # [t, co, ci]
    w9 = jnp.zeros((coutp, 9, cinp), jnp.float32).at[:cout, :, :cin].set(
        jnp.transpose(wt, (1, 0, 2)))
    return w9.reshape(coutp, 9 * cinp)


def init_params(key, in_channels, out_channels):
    c1 = out_channels // 2
    keys = iter(jax.random.split(key, 128))

    def stage(c, nblocks):
        cp = _round_up(c, 8)
        w_all = jnp.zeros((nblocks, 6, cp, cp), jnp.float32)
        for b in range(nblocks):
            for j in range(2):
                wt = _uniform(next(keys), (c, c, 3), c * 3)            # Conv1d (Co, Ci, K)
                wpad = jnp.zeros((cp, cp, 3), jnp.float32).at[:c, :c, :].set(wt)
                # [k, co, ci] matrices, matching taps x[l-1], x[l], x[l+1]
                w_all = w_all.at[b, 3 * j:3 * j + 3].set(jnp.transpose(wpad, (2, 0, 1)))
        bn_col = jnp.tile(jnp.array([1.0, 0.0, 1.0, 0.0], jnp.float32)[None], (cp, 1))
        bn_all = jnp.tile(bn_col[None], (nblocks, 1, 1))
        return (w_all, bn_all)

    cin_p = _round_up(in_channels, 8)
    c1_p = _round_up(c1, 8)
    cout_p = _round_up(out_channels, 8)
    return {
        "conv1_w": _pack_conv2d_w(
            _uniform(next(keys), (c1, in_channels, 3, 3), in_channels * 9), cin_p, c1_p),
        "res1": stage(c1, 2),
        "conv2_w": _pack_conv2d_w(
            _uniform(next(keys), (out_channels, c1, 3, 3), c1 * 9), c1_p, cout_p),
        "res2": stage(out_channels, 3),
        "res3": stage(out_channels, 3),
    }


# --------------------------------------------------------------------------- forward
def downsample_forward(x, params, *, out_channels):
    n, cin, h, w = x.shape
    cin_p = _round_up(cin, 8)
    xc = jnp.pad(jnp.transpose(x, (1, 0, 2, 3)),
                 ((0, cin_p - cin), (0, 0), (0, 0), (0, 0)))   # channels-leading, padded
    xc = conv2d_s2(xc, params["conv1_w"])   # (Cp, N, H/2,  W/2)
    xc = res_stage(xc, params["res1"])
    xc = conv2d_s2(xc, params["conv2_w"])   # (Cp, N, H/4,  W/4)
    xc = res_stage(xc, params["res2"])
    xc = avgpool_s2(xc)                     # (Cp, N, H/8,  W/8)
    xc = res_stage(xc, params["res3"])
    xc = avgpool_s2(xc)                     # (Cp, N, H/16, W/16)
    return jnp.transpose(xc[:out_channels], (1, 0, 2, 3))


if __name__ == "__main__":
    key = jax.random.PRNGKey(0)
    kx, kp = jax.random.split(key)

    in_channels, out_channels = 4, 8
    n, h, w = 2, 16, 16
    x = jax.random.normal(kx, (n, in_channels, h, w), jnp.float32)
    params = init_params(kp, in_channels, out_channels)

    fwd = jax.jit(partial(downsample_forward, out_channels=out_channels))
    y = fwd(x, params)
    jax.block_until_ready(y)
    assert y.shape == (n, out_channels, 1, 1), y.shape
    assert bool(jnp.all(jnp.isfinite(y)))
    print("KERNEL_OK")
</pallas_src>

<mosaic_0001>
module attributes {stable_mosaic.version = 11 : i64} {
  func.func @_conv_kernel(%arg0: i32, %arg1: memref<32x256xf32, #tpu.memory_space<vmem>>, %arg2: memref<8x72xf32, #tpu.memory_space<vmem>>, %arg3: memref<8x256xf32, #tpu.memory_space<vmem>>) attributes {dimension_semantics = [#tpu.dimension_semantics<parallel>], iteration_bounds = array<i64: 1>, scalar_prefetch = 0 : i64, scratch_operands = 0 : i64, tpu.core_type = #tpu.core_type<tc>, window_params = [{transform_indices = @transform_0, window_bounds = array<i64: 32, 256>}, {pipeline_mode = #tpu.pipeline_mode<synchronous>, transform_indices = @transform_1, window_bounds = array<i64: 8, 72>}, {transform_indices = @transform_2, window_bounds = array<i64: 8, 256>}]} {
    %c0 = arith.constant 0 : index
    %c0_0 = arith.constant 0 : index
    %0 = vector.load %arg1[%c0, %c0_0] : memref<32x256xf32, #tpu.memory_space<vmem>>, vector<32x256xf32>
    %1 = vector.extract_strided_slice %0 {offsets = [0, 0], sizes = [8, 256], strides = [1, 1]} : vector<32x256xf32> to vector<8x256xf32>
    %2 = vector.extract_strided_slice %0 {offsets = [8, 0], sizes = [8, 256], strides = [1, 1]} : vector<32x256xf32> to vector<8x256xf32>
    %3 = vector.extract_strided_slice %0 {offsets = [0, 0], sizes = [8, 256], strides = [1, 1]} : vector<32x256xf32> to vector<8x256xf32>
    %c255_i32 = arith.constant 255 : i32
    %4 = tpu.dynamic_rotate %3 by %c255_i32 dim 1 : vector<8x256xf32>, i32 -> vector<8x256xf32>
    %5 = vector.extract_strided_slice %0 {offsets = [16, 0], sizes = [8, 256], strides = [1, 1]} : vector<32x256xf32> to vector<8x256xf32>
    %6 = vector.extract_strided_slice %0 {offsets = [24, 0], sizes = [8, 256], strides = [1, 1]} : vector<32x256xf32> to vector<8x256xf32>
    %7 = vector.extract_strided_slice %0 {offsets = [16, 0], sizes = [8, 256], strides = [1, 1]} : vector<32x256xf32> to vector<8x256xf32>
    %c255_i32_1 = arith.constant 255 : i32
    %8 = tpu.dynamic_rotate %7 by %c255_i32_1 dim 1 : vector<8x256xf32>, i32 -> vector<8x256xf32>
    %9 = vector.extract_strided_slice %0 {offsets = [0, 0], sizes = [8, 256], strides = [1, 1]} : vector<32x256xf32> to vector<8x256xf32>
    %c247_i32 = arith.constant 247 : i32
    %10 = tpu.dynamic_rotate %9 by %c247_i32 dim 1 : vector<8x256xf32>, i32 -> vector<8x256xf32>
    %11 = vector.extract_strided_slice %0 {offsets = [8, 0], sizes = [8, 256], strides = [1, 1]} : vector<32x256xf32> to vector<8x256xf32>
    %c247_i32_2 = arith.constant 247 : i32
    %12 = tpu.dynamic_rotate %11 by %c247_i32_2 dim 1 : vector<8x256xf32>, i32 -> vector<8x256xf32>
    %13 = vector.extract_strided_slice %0 {offsets = [0, 0], sizes = [8, 256], strides = [1, 1]} : vector<32x256xf32> to vector<8x256xf32>
    %c246_i32 = arith.constant 246 : i32
    %14 = tpu.dynamic_rotate %13 by %c246_i32 dim 1 : vector<8x256xf32>, i32 -> vector<8x256xf32>
    %15 = tpu.concatenate %1, %2, %4, %5, %6, %8, %10, %12, %14 in 0 : vector<8x256xf32>, vector<8x256xf32>, vector<8x256xf32>, vector<8x256xf32>, vector<8x256xf32>, vector<8x256xf32>, vector<8x256xf32>, vector<8x256xf32>, vector<8x256xf32> -> vector<72x256xf32>
    %c0_3 = arith.constant 0 : index
    %c0_4 = arith.constant 0 : index
    %16 = vector.load %arg2[%c0_3, %c0_4] : memref<8x72xf32, #tpu.memory_space<vmem>>, vector<8x72xf32>
    %cst = arith.constant dense<0.000000e+00> : vector<8x256xf32>
    %17 = tpu.matmul %16, %15, %cst {dimension_numbers = #tpu.dot_dimension_numbers<[1], [0], [0], [1], [0, 0, 1, 1], [], []>} : vector<8x72xf32>, vector<72x256xf32>, vector<8x256xf32> -> vector<8x256xf32>
    %c0_5 = arith.constant 0 : index
    %c0_6 = arith.constant 0 : index
    %18 = vector.load %arg3[%c0_5, %c0_6] : memref<8x256xf32, #tpu.memory_space<vmem>>, vector<8x256xf32>
    tpu.vector_store %arg3[%c0_5, %c0_6], %17 {strides = array<i32>} : memref<8x256xf32, #tpu.memory_space<vmem>>, vector<8x256xf32>,
    return
  }
  func.func @transform_0(%arg0: i32) -> (i32, i32) {
    %c0_i32 = arith.constant 0 : i32
    %c0_i32_0 = arith.constant 0 : i32
    return %c0_i32, %arg0 : i32, i32
  }
  func.func @transform_1(%arg0: i32) -> (i32, i32) {
    %c0_i32 = arith.constant 0 : i32
    %c0_i32_0 = arith.constant 0 : i32
    %c0_i32_1 = arith.constant 0 : i32
    return %c0_i32, %c0_i32_0 : i32, i32
  }
  func.func @transform_2(%arg0: i32) -> (i32, i32) {
    %c0_i32 = arith.constant 0 : i32
    %c0_i32_0 = arith.constant 0 : i32
    return %c0_i32, %arg0 : i32, i32
  }
}

module attributes {stable_mosaic.version = 11 : i64} {
  func.func @_res_stage_kernel(%arg0: i32, %arg1: memref<8x256xf32, #tpu.memory_space<any>>, %arg2: memref<1x256xf32, #tpu.memory_space<vmem>>, %arg3: memref<1x6x8x8xf32, #tpu.memory_space<vmem>>, %arg4: memref<1x8x4xf32, #tpu.memory_space<vmem>>, %arg5: memref<8x256xf32, #tpu.memory_space<vmem>>) attributes {dimension_semantics = [#tpu.dimension_semantics<arbitrary>], iteration_bounds = array<i64: 2>, scalar_prefetch = 0 : i64, scratch_operands = 0 : i64, tpu.core_type = #tpu.core_type<tc>, window_params = [{}, {pipeline_mode = #tpu.pipeline_mode<synchronous>, transform_indices = @transform_1, window_bounds = array<i64: 1, 256>}, {transform_indices = @transform_2, window_bounds = array<i64: 1, 6, 8, 8>}, {transform_indices = @transform_3, window_bounds = array<i64: 1, 8, 4>}, {pipeline_mode = #tpu.pipeline_mode<synchronous>, transform_indices = @transform_4, window_bounds = array<i64: 8, 256>}]} {
    %c0_i32 = arith.constant 0 : i32
    %0 = arith.cmpi eq, %arg0, %c0_i32 : i32
    %1 = arith.extui %0 : i1 to i32
    %c0_i32_0 = arith.constant 0 : i32
    %2 = arith.cmpi ne, %1, %c0_i32_0 : i32
    scf.if %2 {
      "tpu.region"() ({
        %99 = tpu.sem_alloc : memref<!tpu.dma_semaphore, #tpu.memory_space<semaphore_mem>>
        tpu.enqueue_dma source(%arg1 : memref<8x256xf32, #tpu.memory_space<any>>) target(%arg5 : memref<8x256xf32, #tpu.memory_space<vmem>>) target_semaphore(%99 : memref<!tpu.dma_semaphore, #tpu.memory_space<semaphore_mem>>)
        tpu.wait_dma2 semaphore(%99 : memref<!tpu.dma_semaphore, #tpu.memory_space<semaphore_mem>>) src(%arg1 : memref<8x256xf32, #tpu.memory_space<any>>) dst(%arg5 : memref<8x256xf32, #tpu.memory_space<vmem>>)
        tpu.yield
      }) : () -> ()
    } else {
    }
    %c0 = arith.constant 0 : index
    %c0_1 = arith.constant 0 : index
    %3 = vector.load %arg5[%c0, %c0_1] : memref<8x256xf32, #tpu.memory_space<vmem>>, vector<8x256xf32>
    %c0_2 = arith.constant 0 : index
    %c0_3 = arith.constant 0 : index
    %4 = vector.load %arg2[%c0_2, %c0_3] : memref<1x256xf32, #tpu.memory_space<vmem>>, vector<1x256xf32>
    %c0_4 = arith.constant 0 : index
    %c0_5 = arith.constant 0 : index
    %c0_6 = arith.constant 0 : index
    %5 = vector.load %arg4[%c0_4, %c0_5, %c0_6] : memref<1x8x4xf32, #tpu.memory_space<vmem>>, vector<1x8x4xf32>
    %6 = vector.shape_cast %5 : vector<1x8x4xf32> to vector<8x4xf32>
    %c1_i32 = arith.constant 1 : i32
    %7 = tpu.dynamic_rotate %3 by %c1_i32 dim 1 : vector<8x256xf32>, i32 -> vector<8x256xf32>
    %c255_i32 = arith.constant 255 : i32
    %8 = tpu.dynamic_rotate %3 by %c255_i32 dim 1 : vector<8x256xf32>, i32 -> vector<8x256xf32>
    %c0_7 = arith.constant 0 : index
    %c0_8 = arith.constant 0 : index
    %c0_9 = arith.constant 0 : index
    %c0_10 = arith.constant 0 : index
    %9 = vector.load %arg3[%c0_7, %c0_8, %c0_9, %c0_10] : memref<1x6x8x8xf32, #tpu.memory_space<vmem>>, vector<1x1x8x8xf32>
    %10 = vector.shape_cast %9 : vector<1x1x8x8xf32> to vector<8x8xf32>
    %cst = arith.constant dense<0.000000e+00> : vector<8x256xf32>
    %11 = tpu.matmul %10, %7, %cst {dimension_numbers = #tpu.dot_dimension_numbers<[1], [0], [0], [1], [0, 0, 1, 1], [], []>} : vector<8x8xf32>, vector<8x256xf32>, vector<8x256xf32> -> vector<8x256xf32>
    %c0_11 = arith.constant 0 : index
    %c1 = arith.constant 1 : index
    %c0_12 = arith.constant 0 : index
    %c0_13 = arith.constant 0 : index
    %12 = vector.load %arg3[%c0_11, %c1, %c0_12, %c0_13] : memref<1x6x8x8xf32, #tpu.memory_space<vmem>>, vector<1x1x8x8xf32>
    %13 = vector.shape_cast %12 : vector<1x1x8x8xf32> to vector<8x8xf32>
    %cst_14 = arith.constant dense<0.000000e+00> : vector<8x256xf32>
    %14 = tpu.matmul %13, %3, %cst_14 {dimension_numbers = #tpu.dot_dimension_numbers<[1], [0], [0], [1], [0, 0, 1, 1], [], []>} : vector<8x8xf32>, vector<8x256xf32>, vector<8x256xf32> -> vector<8x256xf32>
    %15 = arith.addf %11, %14 : vector<8x256xf32>
    %c0_15 = arith.constant 0 : index
    %c2 = arith.constant 2 : index
    %c0_16 = arith.constant 0 : index
    %c0_17 = arith.constant 0 : index
    %16 = vector.load %arg3[%c0_15, %c2, %c0_16, %c0_17] : memref<1x6x8x8xf32, #tpu.memory_space<vmem>>, vector<1x1x8x8xf32>
    %17 = vector.shape_cast %16 : vector<1x1x8x8xf32> to vector<8x8xf32>
    %cst_18 = arith.constant dense<0.000000e+00> : vector<8x256xf32>
    %18 = tpu.matmul %17, %8, %cst_18 {dimension_numbers = #tpu.dot_dimension_numbers<[1], [0], [0], [1], [0, 0, 1, 1], [], []>} : vector<8x8xf32>, vector<8x256xf32>, vector<8x256xf32> -> vector<8x256xf32>
    %19 = arith.addf %15, %18 : vector<8x256xf32>
    %20 = vector.extract_strided_slice %6 {offsets = [0, 0], sizes = [8, 1], strides = [1, 1]} : vector<8x4xf32> to vector<8x1xf32>
    %21 = vector.extract_strided_slice %6 {offsets = [0, 1], sizes = [8, 1], strides = [1, 1]} : vector<8x4xf32> to vector<8x1xf32>
    %22 = vector.broadcast %4 : vector<1x256xf32> to vector<8x256xf32>
    %23 = arith.mulf %19, %22 : vector<8x256xf32>
    %cst_19 = arith.constant dense<0.000000e+00> : vector<8xf32>
    %24 = vector.multi_reduction <add>, %23, %cst_19 [1] : vector<8x256xf32> to vector<8xf32>
    %25 = vector.shape_cast %24 : vector<8xf32> to vector<8x1xf32>
    %26 = arith.mulf %23, %23 : vector<8x256xf32>
    %cst_20 = arith.constant dense<0.000000e+00> : vector<8xf32>
    %27 = vector.multi_reduction <add>, %26, %cst_20 [1] : vector<8x256xf32> to vector<8xf32>
    %28 = vector.shape_cast %27 : vector<8xf32> to vector<8x1xf32>
    %cst_21 = arith.constant 7.812500e-03 : f32
    %29 = vector.broadcast %cst_21 : f32 to vector<8x1xf32>
    %30 = arith.mulf %25, %29 : vector<8x1xf32>
    %cst_22 = arith.constant 7.812500e-03 : f32
    %31 = vector.broadcast %cst_22 : f32 to vector<8x1xf32>
    %32 = arith.mulf %28, %31 : vector<8x1xf32>
    %33 = arith.mulf %30, %30 : vector<8x1xf32>
    %34 = arith.subf %32, %33 : vector<8x1xf32>
    %cst_23 = arith.constant 0.000000e+00 : f32
    %35 = vector.broadcast %cst_23 : f32 to vector<8x1xf32>
    %36 = arith.maximumf %34, %35 : vector<8x1xf32>
    %37 = vector.broadcast %30 : vector<8x1xf32> to vector<8x256xf32>
    %38 = arith.subf %19, %37 : vector<8x256xf32>
    %cst_24 = arith.constant 9.99999974E-6 : f32
    %39 = vector.broadcast %cst_24 : f32 to vector<8x1xf32>
    %40 = arith.addf %36, %39 : vector<8x1xf32>
    %41 = math.rsqrt %40 : vector<8x1xf32>
    %42 = vector.broadcast %41 : vector<8x1xf32> to vector<8x256xf32>
    %43 = arith.mulf %38, %42 : vector<8x256xf32>
    %44 = vector.broadcast %20 : vector<8x1xf32> to vector<8x256xf32>
    %45 = arith.mulf %43, %44 : vector<8x256xf32>
    %46 = vector.broadcast %21 : vector<8x1xf32> to vector<8x256xf32>
    %47 = arith.addf %45, %46 : vector<8x256xf32>
    %cst_25 = arith.constant 0.000000e+00 : f32
    %48 = vector.broadcast %cst_25 : f32 to vector<8x256xf32>
    %49 = arith.maximumf %47, %48 : vector<8x256xf32>
    %50 = vector.broadcast %4 : vector<1x256xf32> to vector<8x256xf32>
    %51 = arith.mulf %49, %50 : vector<8x256xf32>
    %c1_i32_26 = arith.constant 1 : i32
    %52 = tpu.dynamic_rotate %51 by %c1_i32_26 dim 1 : vector<8x256xf32>, i32 -> vector<8x256xf32>
    %c255_i32_27 = arith.constant 255 : i32
    %53 = tpu.dynamic_rotate %51 by %c255_i32_27 dim 1 : vector<8x256xf32>, i32 -> vector<8x256xf32>
    %c0_28 = arith.constant 0 : index
    %c3 = arith.constant 3 : index
    %c0_29 = arith.constant 0 : index
    %c0_30 = arith.constant 0 : index
    %54 = vector.load %arg3[%c0_28, %c3, %c0_29, %c0_30] : memref<1x6x8x8xf32, #tpu.memory_space<vmem>>, vector<1x1x8x8xf32>
    %55 = vector.shape_cast %54 : vector<1x1x8x8xf32> to vector<8x8xf32>
    %cst_31 = arith.constant dense<0.000000e+00> : vector<8x256xf32>
    %56 = tpu.matmul %55, %52, %cst_31 {dimension_numbers = #tpu.dot_dimension_numbers<[1], [0], [0], [1], [0, 0, 1, 1], [], []>} : vector<8x8xf32>, vector<8x256xf32>, vector<8x256xf32> -> vector<8x256xf32>
    %c0_32 = arith.constant 0 : index
    %c4 = arith.constant 4 : index
    %c0_33 = arith.constant 0 : index
    %c0_34 = arith.constant 0 : index
    %57 = vector.load %arg3[%c0_32, %c4, %c0_33, %c0_34] : memref<1x6x8x8xf32, #tpu.memory_space<vmem>>, vector<1x1x8x8xf32>
    %58 = vector.shape_cast %57 : vector<1x1x8x8xf32> to vector<8x8xf32>
    %cst_35 = arith.constant dense<0.000000e+00> : vector<8x256xf32>
    %59 = tpu.matmul %58, %51, %cst_35 {dimension_numbers = #tpu.dot_dimension_numbers<[1], [0], [0], [1], [0, 0, 1, 1], [], []>} : vector<8x8xf32>, vector<8x256xf32>, vector<8x256xf32> -> vector<8x256xf32>
    %60 = arith.addf %56, %59 : vector<8x256xf32>
    %c0_36 = arith.constant 0 : index
    %c5 = arith.constant 5 : index
    %c0_37 = arith.constant 0 : index
    %c0_38 = arith.constant 0 : index
    %61 = vector.load %arg3[%c0_36, %c5, %c0_37, %c0_38] : memref<1x6x8x8xf32, #tpu.memory_space<vmem>>, vector<1x1x8x8xf32>
    %62 = vector.shape_cast %61 : vector<1x1x8x8xf32> to vector<8x8xf32>
    %cst_39 = arith.constant dense<0.000000e+00> : vector<8x256xf32>
    %63 = tpu.matmul %62, %53, %cst_39 {dimension_numbers = #tpu.dot_dimension_numbers<[1], [0], [0], [1], [0, 0, 1, 1], [], []>} : vector<8x8xf32>, vector<8x256xf32>, vector<8x256xf32> -> vector<8x256xf32>
    %64 = arith.addf %60, %63 : vector<8x256xf32>
    %65 = vector.extract_strided_slice %6 {offsets = [0, 2], sizes = [8, 1], strides = [1, 1]} : vector<8x4xf32> to vector<8x1xf32>
    %66 = vector.extract_strided_slice %6 {offsets = [0, 3], sizes = [8, 1], strides = [1, 1]} : vector<8x4xf32> to vector<8x1xf32>
    %67 = vector.broadcast %4 : vector<1x256xf32> to vector<8x256xf32>
    %68 = arith.mulf %64, %67 : vector<8x256xf32>
    %cst_40 = arith.constant dense<0.000000e+00> : vector<8xf32>
    %69 = vector.multi_reduction <add>, %68, %cst_40 [1] : vector<8x256xf32> to vector<8xf32>
    %70 = vector.shape_cast %69 : vector<8xf32> to vector<8x1xf32>
    %71 = arith.mulf %68, %68 : vector<8x256xf32>
    %cst_41 = arith.constant dense<0.000000e+00> : vector<8xf32>
    %72 = vector.multi_reduction <add>, %71, %cst_41 [1] : vector<8x256xf32> to vector<8xf32>
    %73 = vector.shape_cast %72 : vector<8xf32> to vector<8x1xf32>
    %cst_42 = arith.constant 7.812500e-03 : f32
    %74 = vector.broadcast %cst_42 : f32 to vector<8x1xf32>
    %75 = arith.mulf %70, %74 : vector<8x1xf32>
    %cst_43 = arith.constant 7.812500e-03 : f32
    %76 = vector.broadcast %cst_43 : f32 to vector<8x1xf32>
    %77 = arith.mulf %73, %76 : vector<8x1xf32>
    %78 = arith.mulf %75, %75 : vector<8x1xf32>
    %79 = arith.subf %77, %78 : vector<8x1xf32>
    %cst_44 = arith.constant 0.000000e+00 : f32
    %80 = vector.broadcast %cst_44 : f32 to vector<8x1xf32>
    %81 = arith.maximumf %79, %80 : vector<8x1xf32>
    %82 = vector.broadcast %75 : vector<8x1xf32> to vector<8x256xf32>
    %83 = arith.subf %64, %82 : vector<8x256xf32>
    %cst_45 = arith.constant 9.99999974E-6 : f32
    %84 = vector.broadcast %cst_45 : f32 to vector<8x1xf32>
    %85 = arith.addf %81, %84 : vector<8x1xf32>
    %86 = math.rsqrt %85 : vector<8x1xf32>
    %87 = vector.broadcast %86 : vector<8x1xf32> to vector<8x256xf32>
    %88 = arith.mulf %83, %87 : vector<8x256xf32>
    %89 = vector.broadcast %65 : vector<8x1xf32> to vector<8x256xf32>
    %90 = arith.mulf %88, %89 : vector<8x256xf32>
    %91 = vector.broadcast %66 : vector<8x1xf32> to vector<8x256xf32>
    %92 = arith.addf %90, %91 : vector<8x256xf32>
    %93 = arith.addf %92, %3 : vector<8x256xf32>
    %cst_46 = arith.constant 0.000000e+00 : f32
    %94 = vector.broadcast %cst_46 : f32 to vector<8x256xf32>
    %95 = arith.maximumf %93, %94 : vector<8x256xf32>
    %96 = vector.broadcast %4 : vector<1x256xf32> to vector<8x256xf32>
    %97 = arith.mulf %95, %96 : vector<8x256xf32>
    %c0_47 = arith.constant 0 : index
    %c0_48 = arith.constant 0 : index
    %98 = vector.load %arg5[%c0_47, %c0_48] : memref<8x256xf32, #tpu.memory_space<vmem>>, vector<8x256xf32>
    tpu.vector_store %arg5[%c0_47, %c0_48], %97 {strides = array<i32>} : memref<8x256xf32, #tpu.memory_space<vmem>>, vector<8x256xf32>,
    return
  }
  func.func @transform_1(%arg0: i32) -> (i32, i32) {
    %c0_i32 = arith.constant 0 : i32
    %c0_i32_0 = arith.constant 0 : i32
    %c0_i32_1 = arith.constant 0 : i32
    return %c0_i32, %c0_i32_0 : i32, i32
  }
  func.func @transform_2(%arg0: i32) -> (i32, i32, i32, i32) {
    %c0_i32 = arith.constant 0 : i32
    %c0_i32_0 = arith.constant 0 : i32
    %c0_i32_1 = arith.constant 0 : i32
    %c0_i32_2 = arith.constant 0 : i32
    return %arg0, %c0_i32, %c0_i32_0, %c0_i32_1 : i32, i32, i32, i32
  }
  func.func @transform_3(%arg0: i32) -> (i32, i32, i32) {
    %c0_i32 = arith.constant 0 : i32
    %c0_i32_0 = arith.constant 0 : i32
    %c0_i32_1 = arith.constant 0 : i32
    return %arg0, %c0_i32, %c0_i32_0 : i32, i32, i32
  }
  func.func @transform_4(%arg0: i32) -> (i32, i32) {
    %c0_i32 = arith.constant 0 : i32
    %c0_i32_0 = arith.constant 0 : i32
    %c0_i32_1 = arith.constant 0 : i32
    return %c0_i32, %c0_i32_0 : i32, i32
  }
}

module attributes {stable_mosaic.version = 11 : i64} {
  func.func @_conv_kernel(%arg0: i32, %arg1: memref<32x256xf32, #tpu.memory_space<vmem>>, %arg2: memref<8x72xf32, #tpu.memory_space<vmem>>, %arg3: memref<8x256xf32, #tpu.memory_space<vmem>>) attributes {dimension_semantics = [#tpu.dimension_semantics<parallel>], iteration_bounds = array<i64: 1>, scalar_prefetch = 0 : i64, scratch_operands = 0 : i64, tpu.core_type = #tpu.core_type<tc>, window_params = [{transform_indices = @transform_0, window_bounds = array<i64: 32, 256>}, {pipeline_mode = #tpu.pipeline_mode<synchronous>, transform_indices = @transform_1, window_bounds = array<i64: 8, 72>}, {transform_indices = @transform_2, window_bounds = array<i64: 8, 256>}]} {
    %c0 = arith.constant 0 : index
    %c0_0 = arith.constant 0 : index
    %0 = vector.load %arg1[%c0, %c0_0] : memref<32x256xf32, #tpu.memory_space<vmem>>, vector<32x256xf32>
    %1 = vector.extract_strided_slice %0 {offsets = [0, 0], sizes = [8, 256], strides = [1, 1]} : vector<32x256xf32> to vector<8x256xf32>
    %2 = vector.extract_strided_slice %0 {offsets = [8, 0], sizes = [8, 256], strides = [1, 1]} : vector<32x256xf32> to vector<8x256xf32>
    %3 = vector.extract_strided_slice %0 {offsets = [0, 0], sizes = [8, 256], strides = [1, 1]} : vector<32x256xf32> to vector<8x256xf32>
    %c255_i32 = arith.constant 255 : i32
    %4 = tpu.dynamic_rotate %3 by %c255_i32 dim 1 : vector<8x256xf32>, i32 -> vector<8x256xf32>
    %5 = vector.extract_strided_slice %0 {offsets = [16, 0], sizes = [8, 256], strides = [1, 1]} : vector<32x256xf32> to vector<8x256xf32>
    %6 = vector.extract_strided_slice %0 {offsets = [24, 0], sizes = [8, 256], strides = [1, 1]} : vector<32x256xf32> to vector<8x256xf32>
    %7 = vector.extract_strided_slice %0 {offsets = [16, 0], sizes = [8, 256], strides = [1, 1]} : vector<32x256xf32> to vector<8x256xf32>
    %c255_i32_1 = arith.constant 255 : i32
    %8 = tpu.dynamic_rotate %7 by %c255_i32_1 dim 1 : vector<8x256xf32>, i32 -> vector<8x256xf32>
    %9 = vector.extract_strided_slice %0 {offsets = [0, 0], sizes = [8, 256], strides = [1, 1]} : vector<32x256xf32> to vector<8x256xf32>
    %c251_i32 = arith.constant 251 : i32
    %10 = tpu.dynamic_rotate %9 by %c251_i32 dim 1 : vector<8x256xf32>, i32 -> vector<8x256xf32>
    %11 = vector.extract_strided_slice %0 {offsets = [8, 0], sizes = [8, 256], strides = [1, 1]} : vector<32x256xf32> to vector<8x256xf32>
    %c251_i32_2 = arith.constant 251 : i32
    %12 = tpu.dynamic_rotate %11 by %c251_i32_2 dim 1 : vector<8x256xf32>, i32 -> vector<8x256xf32>
    %13 = vector.extract_strided_slice %0 {offsets = [0, 0], sizes = [8, 256], strides = [1, 1]} : vector<32x256xf32> to vector<8x256xf32>
    %c250_i32 = arith.constant 250 : i32
    %14 = tpu.dynamic_rotate %13 by %c250_i32 dim 1 : vector<8x256xf32>, i32 -> vector<8x256xf32>
    %15 = tpu.concatenate %1, %2, %4, %5, %6, %8, %10, %12, %14 in 0 : vector<8x256xf32>, vector<8x256xf32>, vector<8x256xf32>, vector<8x256xf32>, vector<8x256xf32>, vector<8x256xf32>, vector<8x256xf32>, vector<8x256xf32>, vector<8x256xf32> -> vector<72x256xf32>
    %c0_3 = arith.constant 0 : index
    %c0_4 = arith.constant 0 : index
    %16 = vector.load %arg2[%c0_3, %c0_4] : memref<8x72xf32, #tpu.memory_space<vmem>>, vector<8x72xf32>
    %cst = arith.constant dense<0.000000e+00> : vector<8x256xf32>
    %17 = tpu.matmul %16, %15, %cst {dimension_numbers = #tpu.dot_dimension_numbers<[1], [0], [0], [1], [0, 0, 1, 1], [], []>} : vector<8x72xf32>, vector<72x256xf32>, vector<8x256xf32> -> vector<8x256xf32>
    %c0_5 = arith.constant 0 : index
    %c0_6 = arith.constant 0 : index
    %18 = vector.load %arg3[%c0_5, %c0_6] : memref<8x256xf32, #tpu.memory_space<vmem>>, vector<8x256xf32>
    tpu.vector_store %arg3[%c0_5, %c0_6], %17 {strides = array<i32>} : memref<8x256xf32, #tpu.memory_space<vmem>>, vector<8x256xf32>,
    return
  }
  func.func @transform_0(%arg0: i32) -> (i32, i32) {
    %c0_i32 = arith.constant 0 : i32
    %c0_i32_0 = arith.constant 0 : i32
    return %c0_i32, %arg0 : i32, i32
  }
  func.func @transform_1(%arg0: i32) -> (i32, i32) {
    %c0_i32 = arith.constant 0 : i32
    %c0_i32_0 = arith.constant 0 : i32
    %c0_i32_1 = arith.constant 0 : i32
    return %c0_i32, %c0_i32_0 : i32, i32
  }
  func.func @transform_2(%arg0: i32) -> (i32, i32) {
    %c0_i32 = arith.constant 0 : i32
    %c0_i32_0 = arith.constant 0 : i32
    return %c0_i32, %arg0 : i32, i32
  }
}

module attributes {stable_mosaic.version = 11 : i64} {
  func.func @_res_stage_kernel(%arg0: i32, %arg1: memref<8x256xf32, #tpu.memory_space<any>>, %arg2: memref<1x256xf32, #tpu.memory_space<vmem>>, %arg3: memref<1x6x8x8xf32, #tpu.memory_space<vmem>>, %arg4: memref<1x8x4xf32, #tpu.memory_space<vmem>>, %arg5: memref<8x256xf32, #tpu.memory_space<vmem>>) attributes {dimension_semantics = [#tpu.dimension_semantics<arbitrary>], iteration_bounds = array<i64: 3>, scalar_prefetch = 0 : i64, scratch_operands = 0 : i64, tpu.core_type = #tpu.core_type<tc>, window_params = [{}, {pipeline_mode = #tpu.pipeline_mode<synchronous>, transform_indices = @transform_1, window_bounds = array<i64: 1, 256>}, {transform_indices = @transform_2, window_bounds = array<i64: 1, 6, 8, 8>}, {transform_indices = @transform_3, window_bounds = array<i64: 1, 8, 4>}, {pipeline_mode = #tpu.pipeline_mode<synchronous>, transform_indices = @transform_4, window_bounds = array<i64: 8, 256>}]} {
    %c0_i32 = arith.constant 0 : i32
    %0 = arith.cmpi eq, %arg0, %c0_i32 : i32
    %1 = arith.extui %0 : i1 to i32
    %c0_i32_0 = arith.constant 0 : i32
    %2 = arith.cmpi ne, %1, %c0_i32_0 : i32
    scf.if %2 {
      "tpu.region"() ({
        %99 = tpu.sem_alloc : memref<!tpu.dma_semaphore, #tpu.memory_space<semaphore_mem>>
        tpu.enqueue_dma source(%arg1 : memref<8x256xf32, #tpu.memory_space<any>>) target(%arg5 : memref<8x256xf32, #tpu.memory_space<vmem>>) target_semaphore(%99 : memref<!tpu.dma_semaphore, #tpu.memory_space<semaphore_mem>>)
        tpu.wait_dma2 semaphore(%99 : memref<!tpu.dma_semaphore, #tpu.memory_space<semaphore_mem>>) src(%arg1 : memref<8x256xf32, #tpu.memory_space<any>>) dst(%arg5 : memref<8x256xf32, #tpu.memory_space<vmem>>)
        tpu.yield
      }) : () -> ()
    } else {
    }
    %c0 = arith.constant 0 : index
    %c0_1 = arith.constant 0 : index
    %3 = vector.load %arg5[%c0, %c0_1] : memref<8x256xf32, #tpu.memory_space<vmem>>, vector<8x256xf32>
    %c0_2 = arith.constant 0 : index
    %c0_3 = arith.constant 0 : index
    %4 = vector.load %arg2[%c0_2, %c0_3] : memref<1x256xf32, #tpu.memory_space<vmem>>, vector<1x256xf32>
    %c0_4 = arith.constant 0 : index
    %c0_5 = arith.constant 0 : index
    %c0_6 = arith.constant 0 : index
    %5 = vector.load %arg4[%c0_4, %c0_5, %c0_6] : memref<1x8x4xf32, #tpu.memory_space<vmem>>, vector<1x8x4xf32>
    %6 = vector.shape_cast %5 : vector<1x8x4xf32> to vector<8x4xf32>
    %c1_i32 = arith.constant 1 : i32
    %7 = tpu.dynamic_rotate %3 by %c1_i32 dim 1 : vector<8x256xf32>, i32 -> vector<8x256xf32>
    %c255_i32 = arith.constant 255 : i32
    %8 = tpu.dynamic_rotate %3 by %c255_i32 dim 1 : vector<8x256xf32>, i32 -> vector<8x256xf32>
    %c0_7 = arith.constant 0 : index
    %c0_8 = arith.constant 0 : index
    %c0_9 = arith.constant 0 : index
    %c0_10 = arith.constant 0 : index
    %9 = vector.load %arg3[%c0_7, %c0_8, %c0_9, %c0_10] : memref<1x6x8x8xf32, #tpu.memory_space<vmem>>, vector<1x1x8x8xf32>
    %10 = vector.shape_cast %9 : vector<1x1x8x8xf32> to vector<8x8xf32>
    %cst = arith.constant dense<0.000000e+00> : vector<8x256xf32>
    %11 = tpu.matmul %10, %7, %cst {dimension_numbers = #tpu.dot_dimension_numbers<[1], [0], [0], [1], [0, 0, 1, 1], [], []>} : vector<8x8xf32>, vector<8x256xf32>, vector<8x256xf32> -> vector<8x256xf32>
    %c0_11 = arith.constant 0 : index
    %c1 = arith.constant 1 : index
    %c0_12 = arith.constant 0 : index
    %c0_13 = arith.constant 0 : index
    %12 = vector.load %arg3[%c0_11, %c1, %c0_12, %c0_13] : memref<1x6x8x8xf32, #tpu.memory_space<vmem>>, vector<1x1x8x8xf32>
    %13 = vector.shape_cast %12 : vector<1x1x8x8xf32> to vector<8x8xf32>
    %cst_14 = arith.constant dense<0.000000e+00> : vector<8x256xf32>
    %14 = tpu.matmul %13, %3, %cst_14 {dimension_numbers = #tpu.dot_dimension_numbers<[1], [0], [0], [1], [0, 0, 1, 1], [], []>} : vector<8x8xf32>, vector<8x256xf32>, vector<8x256xf32> -> vector<8x256xf32>
    %15 = arith.addf %11, %14 : vector<8x256xf32>
    %c0_15 = arith.constant 0 : index
    %c2 = arith.constant 2 : index
    %c0_16 = arith.constant 0 : index
    %c0_17 = arith.constant 0 : index
    %16 = vector.load %arg3[%c0_15, %c2, %c0_16, %c0_17] : memref<1x6x8x8xf32, #tpu.memory_space<vmem>>, vector<1x1x8x8xf32>
    %17 = vector.shape_cast %16 : vector<1x1x8x8xf32> to vector<8x8xf32>
    %cst_18 = arith.constant dense<0.000000e+00> : vector<8x256xf32>
    %18 = tpu.matmul %17, %8, %cst_18 {dimension_numbers = #tpu.dot_dimension_numbers<[1], [0], [0], [1], [0, 0, 1, 1], [], []>} : vector<8x8xf32>, vector<8x256xf32>, vector<8x256xf32> -> vector<8x256xf32>
    %19 = arith.addf %15, %18 : vector<8x256xf32>
    %20 = vector.extract_strided_slice %6 {offsets = [0, 0], sizes = [8, 1], strides = [1, 1]} : vector<8x4xf32> to vector<8x1xf32>
    %21 = vector.extract_strided_slice %6 {offsets = [0, 1], sizes = [8, 1], strides = [1, 1]} : vector<8x4xf32> to vector<8x1xf32>
    %22 = vector.broadcast %4 : vector<1x256xf32> to vector<8x256xf32>
    %23 = arith.mulf %19, %22 : vector<8x256xf32>
    %cst_19 = arith.constant dense<0.000000e+00> : vector<8xf32>
    %24 = vector.multi_reduction <add>, %23, %cst_19 [1] : vector<8x256xf32> to vector<8xf32>
    %25 = vector.shape_cast %24 : vector<8xf32> to vector<8x1xf32>
    %26 = arith.mulf %23, %23 : vector<8x256xf32>
    %cst_20 = arith.constant dense<0.000000e+00> : vector<8xf32>
    %27 = vector.multi_reduction <add>, %26, %cst_20 [1] : vector<8x256xf32> to vector<8xf32>
    %28 = vector.shape_cast %27 : vector<8xf32> to vector<8x1xf32>
    %cst_21 = arith.constant 3.125000e-02 : f32
    %29 = vector.broadcast %cst_21 : f32 to vector<8x1xf32>
    %30 = arith.mulf %25, %29 : vector<8x1xf32>
    %cst_22 = arith.constant 3.125000e-02 : f32
    %31 = vector.broadcast %cst_22 : f32 to vector<8x1xf32>
    %32 = arith.mulf %28, %31 : vector<8x1xf32>
    %33 = arith.mulf %30, %30 : vector<8x1xf32>
    %34 = arith.subf %32, %33 : vector<8x1xf32>
    %cst_23 = arith.constant 0.000000e+00 : f32
    %35 = vector.broadcast %cst_23 : f32 to vector<8x1xf32>
    %36 = arith.maximumf %34, %35 : vector<8x1xf32>
    %37 = vector.broadcast %30 : vector<8x1xf32> to vector<8x256xf32>
    %38 = arith.subf %19, %37 : vector<8x256xf32>
    %cst_24 = arith.constant 9.99999974E-6 : f32
    %39 = vector.broadcast %cst_24 : f32 to vector<8x1xf32>
    %40 = arith.addf %36, %39 : vector<8x1xf32>
    %41 = math.rsqrt %40 : vector<8x1xf32>
    %42 = vector.broadcast %41 : vector<8x1xf32> to vector<8x256xf32>
    %43 = arith.mulf %38, %42 : vector<8x256xf32>
    %44 = vector.broadcast %20 : vector<8x1xf32> to vector<8x256xf32>
    %45 = arith.mulf %43, %44 : vector<8x256xf32>
    %46 = vector.broadcast %21 : vector<8x1xf32> to vector<8x256xf32>
    %47 = arith.addf %45, %46 : vector<8x256xf32>
    %cst_25 = arith.constant 0.000000e+00 : f32
    %48 = vector.broadcast %cst_25 : f32 to vector<8x256xf32>
    %49 = arith.maximumf %47, %48 : vector<8x256xf32>
    %50 = vector.broadcast %4 : vector<1x256xf32> to vector<8x256xf32>
    %51 = arith.mulf %49, %50 : vector<8x256xf32>
    %c1_i32_26 = arith.constant 1 : i32
    %52 = tpu.dynamic_rotate %51 by %c1_i32_26 dim 1 : vector<8x256xf32>, i32 -> vector<8x256xf32>
    %c255_i32_27 = arith.constant 255 : i32
    %53 = tpu.dynamic_rotate %51 by %c255_i32_27 dim 1 : vector<8x256xf32>, i32 -> vector<8x256xf32>
    %c0_28 = arith.constant 0 : index
    %c3 = arith.constant 3 : index
    %c0_29 = arith.constant 0 : index
    %c0_30 = arith.constant 0 : index
    %54 = vector.load %arg3[%c0_28, %c3, %c0_29, %c0_30] : memref<1x6x8x8xf32, #tpu.memory_space<vmem>>, vector<1x1x8x8xf32>
    %55 = vector.shape_cast %54 : vector<1x1x8x8xf32> to vector<8x8xf32>
    %cst_31 = arith.constant dense<0.000000e+00> : vector<8x256xf32>
    %56 = tpu.matmul %55, %52, %cst_31 {dimension_numbers = #tpu.dot_dimension_numbers<[1], [0], [0], [1], [0, 0, 1, 1], [], []>} : vector<8x8xf32>, vector<8x256xf32>, vector<8x256xf32> -> vector<8x256xf32>
    %c0_32 = arith.constant 0 : index
    %c4 = arith.constant 4 : index
    %c0_33 = arith.constant 0 : index
    %c0_34 = arith.constant 0 : index
    %57 = vector.load %arg3[%c0_32, %c4, %c0_33, %c0_34] : memref<1x6x8x8xf32, #tpu.memory_space<vmem>>, vector<1x1x8x8xf32>
    %58 = vector.shape_cast %57 : vector<1x1x8x8xf32> to vector<8x8xf32>
    %cst_35 = arith.constant dense<0.000000e+00> : vector<8x256xf32>
    %59 = tpu.matmul %58, %51, %cst_35 {dimension_numbers = #tpu.dot_dimension_numbers<[1], [0], [0], [1], [0, 0, 1, 1], [], []>} : vector<8x8xf32>, vector<8x256xf32>, vector<8x256xf32> -> vector<8x256xf32>
    %60 = arith.addf %56, %59 : vector<8x256xf32>
    %c0_36 = arith.constant 0 : index
    %c5 = arith.constant 5 : index
    %c0_37 = arith.constant 0 : index
    %c0_38 = arith.constant 0 : index
    %61 = vector.load %arg3[%c0_36, %c5, %c0_37, %c0_38] : memref<1x6x8x8xf32, #tpu.memory_space<vmem>>, vector<1x1x8x8xf32>
    %62 = vector.shape_cast %61 : vector<1x1x8x8xf32> to vector<8x8xf32>
    %cst_39 = arith.constant dense<0.000000e+00> : vector<8x256xf32>
    %63 = tpu.matmul %62, %53, %cst_39 {dimension_numbers = #tpu.dot_dimension_numbers<[1], [0], [0], [1], [0, 0, 1, 1], [], []>} : vector<8x8xf32>, vector<8x256xf32>, vector<8x256xf32> -> vector<8x256xf32>
    %64 = arith.addf %60, %63 : vector<8x256xf32>
    %65 = vector.extract_strided_slice %6 {offsets = [0, 2], sizes = [8, 1], strides = [1, 1]} : vector<8x4xf32> to vector<8x1xf32>
    %66 = vector.extract_strided_slice %6 {offsets = [0, 3], sizes = [8, 1], strides = [1, 1]} : vector<8x4xf32> to vector<8x1xf32>
    %67 = vector.broadcast %4 : vector<1x256xf32> to vector<8x256xf32>
    %68 = arith.mulf %64, %67 : vector<8x256xf32>
    %cst_40 = arith.constant dense<0.000000e+00> : vector<8xf32>
    %69 = vector.multi_reduction <add>, %68, %cst_40 [1] : vector<8x256xf32> to vector<8xf32>
    %70 = vector.shape_cast %69 : vector<8xf32> to vector<8x1xf32>
    %71 = arith.mulf %68, %68 : vector<8x256xf32>
    %cst_41 = arith.constant dense<0.000000e+00> : vector<8xf32>
    %72 = vector.multi_reduction <add>, %71, %cst_41 [1] : vector<8x256xf32> to vector<8xf32>
    %73 = vector.shape_cast %72 : vector<8xf32> to vector<8x1xf32>
    %cst_42 = arith.constant 3.125000e-02 : f32
    %74 = vector.broadcast %cst_42 : f32 to vector<8x1xf32>
    %75 = arith.mulf %70, %74 : vector<8x1xf32>
    %cst_43 = arith.constant 3.125000e-02 : f32
    %76 = vector.broadcast %cst_43 : f32 to vector<8x1xf32>
    %77 = arith.mulf %73, %76 : vector<8x1xf32>
    %78 = arith.mulf %75, %75 : vector<8x1xf32>
    %79 = arith.subf %77, %78 : vector<8x1xf32>
    %cst_44 = arith.constant 0.000000e+00 : f32
    %80 = vector.broadcast %cst_44 : f32 to vector<8x1xf32>
    %81 = arith.maximumf %79, %80 : vector<8x1xf32>
    %82 = vector.broadcast %75 : vector<8x1xf32> to vector<8x256xf32>
    %83 = arith.subf %64, %82 : vector<8x256xf32>
    %cst_45 = arith.constant 9.99999974E-6 : f32
    %84 = vector.broadcast %cst_45 : f32 to vector<8x1xf32>
    %85 = arith.addf %81, %84 : vector<8x1xf32>
    %86 = math.rsqrt %85 : vector<8x1xf32>
    %87 = vector.broadcast %86 : vector<8x1xf32> to vector<8x256xf32>
    %88 = arith.mulf %83, %87 : vector<8x256xf32>
    %89 = vector.broadcast %65 : vector<8x1xf32> to vector<8x256xf32>
    %90 = arith.mulf %88, %89 : vector<8x256xf32>
    %91 = vector.broadcast %66 : vector<8x1xf32> to vector<8x256xf32>
    %92 = arith.addf %90, %91 : vector<8x256xf32>
    %93 = arith.addf %92, %3 : vector<8x256xf32>
    %cst_46 = arith.constant 0.000000e+00 : f32
    %94 = vector.broadcast %cst_46 : f32 to vector<8x256xf32>
    %95 = arith.maximumf %93, %94 : vector<8x256xf32>
    %96 = vector.broadcast %4 : vector<1x256xf32> to vector<8x256xf32>
    %97 = arith.mulf %95, %96 : vector<8x256xf32>
    %c0_47 = arith.constant 0 : index
    %c0_48 = arith.constant 0 : index
    %98 = vector.load %arg5[%c0_47, %c0_48] : memref<8x256xf32, #tpu.memory_space<vmem>>, vector<8x256xf32>
    tpu.vector_store %arg5[%c0_47, %c0_48], %97 {strides = array<i32>} : memref<8x256xf32, #tpu.memory_space<vmem>>, vector<8x256xf32>,
    return
  }
  func.func @transform_1(%arg0: i32) -> (i32, i32) {
    %c0_i32 = arith.constant 0 : i32
    %c0_i32_0 = arith.constant 0 : i32
    %c0_i32_1 = arith.constant 0 : i32
    return %c0_i32, %c0_i32_0 : i32, i32
  }
  func.func @transform_2(%arg0: i32) -> (i32, i32, i32, i32) {
    %c0_i32 = arith.constant 0 : i32
    %c0_i32_0 = arith.constant 0 : i32
    %c0_i32_1 = arith.constant 0 : i32
    %c0_i32_2 = arith.constant 0 : i32
    return %arg0, %c0_i32, %c0_i32_0, %c0_i32_1 : i32, i32, i32, i32
  }
  func.func @transform_3(%arg0: i32) -> (i32, i32, i32) {
    %c0_i32 = arith.constant 0 : i32
    %c0_i32_0 = arith.constant 0 : i32
    %c0_i32_1 = arith.constant 0 : i32
    return %arg0, %c0_i32, %c0_i32_0 : i32, i32, i32
  }
  func.func @transform_4(%arg0: i32) -> (i32, i32) {
    %c0_i32 = arith.constant 0 : i32
    %c0_i32_0 = arith.constant 0 : i32
    %c0_i32_1 = arith.constant 0 : i32
    return %c0_i32, %c0_i32_0 : i32, i32
  }
}

module attributes {stable_mosaic.version = 11 : i64} {
  func.func @_pool_kernel(%arg0: i32, %arg1: memref<32x256xf32, #tpu.memory_space<vmem>>, %arg2: memref<8x256xf32, #tpu.memory_space<vmem>>) attributes {dimension_semantics = [#tpu.dimension_semantics<parallel>], iteration_bounds = array<i64: 1>, scalar_prefetch = 0 : i64, scratch_operands = 0 : i64, tpu.core_type = #tpu.core_type<tc>, window_params = [{transform_indices = @transform_0, window_bounds = array<i64: 32, 256>}, {transform_indices = @transform_1, window_bounds = array<i64: 8, 256>}]} {
    %c0 = arith.constant 0 : index
    %c0_0 = arith.constant 0 : index
    %0 = vector.load %arg1[%c0, %c0_0] : memref<32x256xf32, #tpu.memory_space<vmem>>, vector<32x256xf32>
    %cst = arith.constant 0.000000e+00 : f32
    %1 = vector.broadcast %cst : f32 to vector<8x256xf32>
    %2 = vector.extract_strided_slice %0 {offsets = [0, 0], sizes = [8, 256], strides = [1, 1]} : vector<32x256xf32> to vector<8x256xf32>
    %3 = arith.addf %1, %2 : vector<8x256xf32>
    %4 = vector.extract_strided_slice %0 {offsets = [8, 0], sizes = [8, 256], strides = [1, 1]} : vector<32x256xf32> to vector<8x256xf32>
    %5 = arith.addf %3, %4 : vector<8x256xf32>
    %6 = vector.extract_strided_slice %0 {offsets = [0, 0], sizes = [8, 256], strides = [1, 1]} : vector<32x256xf32> to vector<8x256xf32>
    %c255_i32 = arith.constant 255 : i32
    %7 = tpu.dynamic_rotate %6 by %c255_i32 dim 1 : vector<8x256xf32>, i32 -> vector<8x256xf32>
    %8 = arith.addf %5, %7 : vector<8x256xf32>
    %9 = vector.extract_strided_slice %0 {offsets = [16, 0], sizes = [8, 256], strides = [1, 1]} : vector<32x256xf32> to vector<8x256xf32>
    %10 = arith.addf %8, %9 : vector<8x256xf32>
    %11 = vector.extract_strided_slice %0 {offsets = [24, 0], sizes = [8, 256], strides = [1, 1]} : vector<32x256xf32> to vector<8x256xf32>
    %12 = arith.addf %10, %11 : vector<8x256xf32>
    %13 = vector.extract_strided_slice %0 {offsets = [16, 0], sizes = [8, 256], strides = [1, 1]} : vector<32x256xf32> to vector<8x256xf32>
    %c255_i32_1 = arith.constant 255 : i32
    %14 = tpu.dynamic_rotate %13 by %c255_i32_1 dim 1 : vector<8x256xf32>, i32 -> vector<8x256xf32>
    %15 = arith.addf %12, %14 : vector<8x256xf32>
    %16 = vector.extract_strided_slice %0 {offsets = [0, 0], sizes = [8, 256], strides = [1, 1]} : vector<32x256xf32> to vector<8x256xf32>
    %c253_i32 = arith.constant 253 : i32
    %17 = tpu.dynamic_rotate %16 by %c253_i32 dim 1 : vector<8x256xf32>, i32 -> vector<8x256xf32>
    %18 = arith.addf %15, %17 : vector<8x256xf32>
    %19 = vector.extract_strided_slice %0 {offsets = [8, 0], sizes = [8, 256], strides = [1, 1]} : vector<32x256xf32> to vector<8x256xf32>
    %c253_i32_2 = arith.constant 253 : i32
    %20 = tpu.dynamic_rotate %19 by %c253_i32_2 dim 1 : vector<8x256xf32>, i32 -> vector<8x256xf32>
    %21 = arith.addf %18, %20 : vector<8x256xf32>
    %22 = vector.extract_strided_slice %0 {offsets = [0, 0], sizes = [8, 256], strides = [1, 1]} : vector<32x256xf32> to vector<8x256xf32>
    %c252_i32 = arith.constant 252 : i32
    %23 = tpu.dynamic_rotate %22 by %c252_i32 dim 1 : vector<8x256xf32>, i32 -> vector<8x256xf32>
    %24 = arith.addf %21, %23 : vector<8x256xf32>
    %cst_3 = arith.constant 0.111111112 : f32
    %25 = vector.broadcast %cst_3 : f32 to vector<8x256xf32>
    %26 = arith.mulf %24, %25 : vector<8x256xf32>
    %c0_4 = arith.constant 0 : index
    %c0_5 = arith.constant 0 : index
    %27 = vector.load %arg2[%c0_4, %c0_5] : memref<8x256xf32, #tpu.memory_space<vmem>>, vector<8x256xf32>
    tpu.vector_store %arg2[%c0_4, %c0_5], %26 {strides = array<i32>} : memref<8x256xf32, #tpu.memory_space<vmem>>, vector<8x256xf32>,
    return
  }
  func.func @transform_0(%arg0: i32) -> (i32, i32) {
    %c0_i32 = arith.constant 0 : i32
    %c0_i32_0 = arith.constant 0 : i32
    return %c0_i32, %arg0 : i32, i32
  }
  func.func @transform_1(%arg0: i32) -> (i32, i32) {
    %c0_i32 = arith.constant 0 : i32
    %c0_i32_0 = arith.constant 0 : i32
    return %c0_i32, %arg0 : i32, i32
  }
}

module attributes {stable_mosaic.version = 11 : i64} {
  func.func @_res_stage_kernel(%arg0: i32, %arg1: memref<8x256xf32, #tpu.memory_space<any>>, %arg2: memref<1x256xf32, #tpu.memory_space<vmem>>, %arg3: memref<1x6x8x8xf32, #tpu.memory_space<vmem>>, %arg4: memref<1x8x4xf32, #tpu.memory_space<vmem>>, %arg5: memref<8x256xf32, #tpu.memory_space<vmem>>) attributes {dimension_semantics = [#tpu.dimension_semantics<arbitrary>], iteration_bounds = array<i64: 3>, scalar_prefetch = 0 : i64, scratch_operands = 0 : i64, tpu.core_type = #tpu.core_type<tc>, window_params = [{}, {pipeline_mode = #tpu.pipeline_mode<synchronous>, transform_indices = @transform_1, window_bounds = array<i64: 1, 256>}, {transform_indices = @transform_2, window_bounds = array<i64: 1, 6, 8, 8>}, {transform_indices = @transform_3, window_bounds = array<i64: 1, 8, 4>}, {pipeline_mode = #tpu.pipeline_mode<synchronous>, transform_indices = @transform_4, window_bounds = array<i64: 8, 256>}]} {
    %c0_i32 = arith.constant 0 : i32
    %0 = arith.cmpi eq, %arg0, %c0_i32 : i32
    %1 = arith.extui %0 : i1 to i32
    %c0_i32_0 = arith.constant 0 : i32
    %2 = arith.cmpi ne, %1, %c0_i32_0 : i32
    scf.if %2 {
      "tpu.region"() ({
        %99 = tpu.sem_alloc : memref<!tpu.dma_semaphore, #tpu.memory_space<semaphore_mem>>
        tpu.enqueue_dma source(%arg1 : memref<8x256xf32, #tpu.memory_space<any>>) target(%arg5 : memref<8x256xf32, #tpu.memory_space<vmem>>) target_semaphore(%99 : memref<!tpu.dma_semaphore, #tpu.memory_space<semaphore_mem>>)
        tpu.wait_dma2 semaphore(%99 : memref<!tpu.dma_semaphore, #tpu.memory_space<semaphore_mem>>) src(%arg1 : memref<8x256xf32, #tpu.memory_space<any>>) dst(%arg5 : memref<8x256xf32, #tpu.memory_space<vmem>>)
        tpu.yield
      }) : () -> ()
    } else {
    }
    %c0 = arith.constant 0 : index
    %c0_1 = arith.constant 0 : index
    %3 = vector.load %arg5[%c0, %c0_1] : memref<8x256xf32, #tpu.memory_space<vmem>>, vector<8x256xf32>
    %c0_2 = arith.constant 0 : index
    %c0_3 = arith.constant 0 : index
    %4 = vector.load %arg2[%c0_2, %c0_3] : memref<1x256xf32, #tpu.memory_space<vmem>>, vector<1x256xf32>
    %c0_4 = arith.constant 0 : index
    %c0_5 = arith.constant 0 : index
    %c0_6 = arith.constant 0 : index
    %5 = vector.load %arg4[%c0_4, %c0_5, %c0_6] : memref<1x8x4xf32, #tpu.memory_space<vmem>>, vector<1x8x4xf32>
    %6 = vector.shape_cast %5 : vector<1x8x4xf32> to vector<8x4xf32>
    %c1_i32 = arith.constant 1 : i32
    %7 = tpu.dynamic_rotate %3 by %c1_i32 dim 1 : vector<8x256xf32>, i32 -> vector<8x256xf32>
    %c255_i32 = arith.constant 255 : i32
    %8 = tpu.dynamic_rotate %3 by %c255_i32 dim 1 : vector<8x256xf32>, i32 -> vector<8x256xf32>
    %c0_7 = arith.constant 0 : index
    %c0_8 = arith.constant 0 : index
    %c0_9 = arith.constant 0 : index
    %c0_10 = arith.constant 0 : index
    %9 = vector.load %arg3[%c0_7, %c0_8, %c0_9, %c0_10] : memref<1x6x8x8xf32, #tpu.memory_space<vmem>>, vector<1x1x8x8xf32>
    %10 = vector.shape_cast %9 : vector<1x1x8x8xf32> to vector<8x8xf32>
    %cst = arith.constant dense<0.000000e+00> : vector<8x256xf32>
    %11 = tpu.matmul %10, %7, %cst {dimension_numbers = #tpu.dot_dimension_numbers<[1], [0], [0], [1], [0, 0, 1, 1], [], []>} : vector<8x8xf32>, vector<8x256xf32>, vector<8x256xf32> -> vector<8x256xf32>
    %c0_11 = arith.constant 0 : index
    %c1 = arith.constant 1 : index
    %c0_12 = arith.constant 0 : index
    %c0_13 = arith.constant 0 : index
    %12 = vector.load %arg3[%c0_11, %c1, %c0_12, %c0_13] : memref<1x6x8x8xf32, #tpu.memory_space<vmem>>, vector<1x1x8x8xf32>
    %13 = vector.shape_cast %12 : vector<1x1x8x8xf32> to vector<8x8xf32>
    %cst_14 = arith.constant dense<0.000000e+00> : vector<8x256xf32>
    %14 = tpu.matmul %13, %3, %cst_14 {dimension_numbers = #tpu.dot_dimension_numbers<[1], [0], [0], [1], [0, 0, 1, 1], [], []>} : vector<8x8xf32>, vector<8x256xf32>, vector<8x256xf32> -> vector<8x256xf32>
    %15 = arith.addf %11, %14 : vector<8x256xf32>
    %c0_15 = arith.constant 0 : index
    %c2 = arith.constant 2 : index
    %c0_16 = arith.constant 0 : index
    %c0_17 = arith.constant 0 : index
    %16 = vector.load %arg3[%c0_15, %c2, %c0_16, %c0_17] : memref<1x6x8x8xf32, #tpu.memory_space<vmem>>, vector<1x1x8x8xf32>
    %17 = vector.shape_cast %16 : vector<1x1x8x8xf32> to vector<8x8xf32>
    %cst_18 = arith.constant dense<0.000000e+00> : vector<8x256xf32>
    %18 = tpu.matmul %17, %8, %cst_18 {dimension_numbers = #tpu.dot_dimension_numbers<[1], [0], [0], [1], [0, 0, 1, 1], [], []>} : vector<8x8xf32>, vector<8x256xf32>, vector<8x256xf32> -> vector<8x256xf32>
    %19 = arith.addf %15, %18 : vector<8x256xf32>
    %20 = vector.extract_strided_slice %6 {offsets = [0, 0], sizes = [8, 1], strides = [1, 1]} : vector<8x4xf32> to vector<8x1xf32>
    %21 = vector.extract_strided_slice %6 {offsets = [0, 1], sizes = [8, 1], strides = [1, 1]} : vector<8x4xf32> to vector<8x1xf32>
    %22 = vector.broadcast %4 : vector<1x256xf32> to vector<8x256xf32>
    %23 = arith.mulf %19, %22 : vector<8x256xf32>
    %cst_19 = arith.constant dense<0.000000e+00> : vector<8xf32>
    %24 = vector.multi_reduction <add>, %23, %cst_19 [1] : vector<8x256xf32> to vector<8xf32>
    %25 = vector.shape_cast %24 : vector<8xf32> to vector<8x1xf32>
    %26 = arith.mulf %23, %23 : vector<8x256xf32>
    %cst_20 = arith.constant dense<0.000000e+00> : vector<8xf32>
    %27 = vector.multi_reduction <add>, %26, %cst_20 [1] : vector<8x256xf32> to vector<8xf32>
    %28 = vector.shape_cast %27 : vector<8xf32> to vector<8x1xf32>
    %cst_21 = arith.constant 1.250000e-01 : f32
    %29 = vector.broadcast %cst_21 : f32 to vector<8x1xf32>
    %30 = arith.mulf %25, %29 : vector<8x1xf32>
    %cst_22 = arith.constant 1.250000e-01 : f32
    %31 = vector.broadcast %cst_22 : f32 to vector<8x1xf32>
    %32 = arith.mulf %28, %31 : vector<8x1xf32>
    %33 = arith.mulf %30, %30 : vector<8x1xf32>
    %34 = arith.subf %32, %33 : vector<8x1xf32>
    %cst_23 = arith.constant 0.000000e+00 : f32
    %35 = vector.broadcast %cst_23 : f32 to vector<8x1xf32>
    %36 = arith.maximumf %34, %35 : vector<8x1xf32>
    %37 = vector.broadcast %30 : vector<8x1xf32> to vector<8x256xf32>
    %38 = arith.subf %19, %37 : vector<8x256xf32>
    %cst_24 = arith.constant 9.99999974E-6 : f32
    %39 = vector.broadcast %cst_24 : f32 to vector<8x1xf32>
    %40 = arith.addf %36, %39 : vector<8x1xf32>
    %41 = math.rsqrt %40 : vector<8x1xf32>
    %42 = vector.broadcast %41 : vector<8x1xf32> to vector<8x256xf32>
    %43 = arith.mulf %38, %42 : vector<8x256xf32>
    %44 = vector.broadcast %20 : vector<8x1xf32> to vector<8x256xf32>
    %45 = arith.mulf %43, %44 : vector<8x256xf32>
    %46 = vector.broadcast %21 : vector<8x1xf32> to vector<8x256xf32>
    %47 = arith.addf %45, %46 : vector<8x256xf32>
    %cst_25 = arith.constant 0.000000e+00 : f32
    %48 = vector.broadcast %cst_25 : f32 to vector<8x256xf32>
    %49 = arith.maximumf %47, %48 : vector<8x256xf32>
    %50 = vector.broadcast %4 : vector<1x256xf32> to vector<8x256xf32>
    %51 = arith.mulf %49, %50 : vector<8x256xf32>
    %c1_i32_26 = arith.constant 1 : i32
    %52 = tpu.dynamic_rotate %51 by %c1_i32_26 dim 1 : vector<8x256xf32>, i32 -> vector<8x256xf32>
    %c255_i32_27 = arith.constant 255 : i32
    %53 = tpu.dynamic_rotate %51 by %c255_i32_27 dim 1 : vector<8x256xf32>, i32 -> vector<8x256xf32>
    %c0_28 = arith.constant 0 : index
    %c3 = arith.constant 3 : index
    %c0_29 = arith.constant 0 : index
    %c0_30 = arith.constant 0 : index
    %54 = vector.load %arg3[%c0_28, %c3, %c0_29, %c0_30] : memref<1x6x8x8xf32, #tpu.memory_space<vmem>>, vector<1x1x8x8xf32>
    %55 = vector.shape_cast %54 : vector<1x1x8x8xf32> to vector<8x8xf32>
    %cst_31 = arith.constant dense<0.000000e+00> : vector<8x256xf32>
    %56 = tpu.matmul %55, %52, %cst_31 {dimension_numbers = #tpu.dot_dimension_numbers<[1], [0], [0], [1], [0, 0, 1, 1], [], []>} : vector<8x8xf32>, vector<8x256xf32>, vector<8x256xf32> -> vector<8x256xf32>
    %c0_32 = arith.constant 0 : index
    %c4 = arith.constant 4 : index
    %c0_33 = arith.constant 0 : index
    %c0_34 = arith.constant 0 : index
    %57 = vector.load %arg3[%c0_32, %c4, %c0_33, %c0_34] : memref<1x6x8x8xf32, #tpu.memory_space<vmem>>, vector<1x1x8x8xf32>
    %58 = vector.shape_cast %57 : vector<1x1x8x8xf32> to vector<8x8xf32>
    %cst_35 = arith.constant dense<0.000000e+00> : vector<8x256xf32>
    %59 = tpu.matmul %58, %51, %cst_35 {dimension_numbers = #tpu.dot_dimension_numbers<[1], [0], [0], [1], [0, 0, 1, 1], [], []>} : vector<8x8xf32>, vector<8x256xf32>, vector<8x256xf32> -> vector<8x256xf32>
    %60 = arith.addf %56, %59 : vector<8x256xf32>
    %c0_36 = arith.constant 0 : index
    %c5 = arith.constant 5 : index
    %c0_37 = arith.constant 0 : index
    %c0_38 = arith.constant 0 : index
    %61 = vector.load %arg3[%c0_36, %c5, %c0_37, %c0_38] : memref<1x6x8x8xf32, #tpu.memory_space<vmem>>, vector<1x1x8x8xf32>
    %62 = vector.shape_cast %61 : vector<1x1x8x8xf32> to vector<8x8xf32>
    %cst_39 = arith.constant dense<0.000000e+00> : vector<8x256xf32>
    %63 = tpu.matmul %62, %53, %cst_39 {dimension_numbers = #tpu.dot_dimension_numbers<[1], [0], [0], [1], [0, 0, 1, 1], [], []>} : vector<8x8xf32>, vector<8x256xf32>, vector<8x256xf32> -> vector<8x256xf32>
    %64 = arith.addf %60, %63 : vector<8x256xf32>
    %65 = vector.extract_strided_slice %6 {offsets = [0, 2], sizes = [8, 1], strides = [1, 1]} : vector<8x4xf32> to vector<8x1xf32>
    %66 = vector.extract_strided_slice %6 {offsets = [0, 3], sizes = [8, 1], strides = [1, 1]} : vector<8x4xf32> to vector<8x1xf32>
    %67 = vector.broadcast %4 : vector<1x256xf32> to vector<8x256xf32>
    %68 = arith.mulf %64, %67 : vector<8x256xf32>
    %cst_40 = arith.constant dense<0.000000e+00> : vector<8xf32>
    %69 = vector.multi_reduction <add>, %68, %cst_40 [1] : vector<8x256xf32> to vector<8xf32>
    %70 = vector.shape_cast %69 : vector<8xf32> to vector<8x1xf32>
    %71 = arith.mulf %68, %68 : vector<8x256xf32>
    %cst_41 = arith.constant dense<0.000000e+00> : vector<8xf32>
    %72 = vector.multi_reduction <add>, %71, %cst_41 [1] : vector<8x256xf32> to vector<8xf32>
    %73 = vector.shape_cast %72 : vector<8xf32> to vector<8x1xf32>
    %cst_42 = arith.constant 1.250000e-01 : f32
    %74 = vector.broadcast %cst_42 : f32 to vector<8x1xf32>
    %75 = arith.mulf %70, %74 : vector<8x1xf32>
    %cst_43 = arith.constant 1.250000e-01 : f32
    %76 = vector.broadcast %cst_43 : f32 to vector<8x1xf32>
    %77 = arith.mulf %73, %76 : vector<8x1xf32>
    %78 = arith.mulf %75, %75 : vector<8x1xf32>
    %79 = arith.subf %77, %78 : vector<8x1xf32>
    %cst_44 = arith.constant 0.000000e+00 : f32
    %80 = vector.broadcast %cst_44 : f32 to vector<8x1xf32>
    %81 = arith.maximumf %79, %80 : vector<8x1xf32>
    %82 = vector.broadcast %75 : vector<8x1xf32> to vector<8x256xf32>
    %83 = arith.subf %64, %82 : vector<8x256xf32>
    %cst_45 = arith.constant 9.99999974E-6 : f32
    %84 = vector.broadcast %cst_45 : f32 to vector<8x1xf32>
    %85 = arith.addf %81, %84 : vector<8x1xf32>
    %86 = math.rsqrt %85 : vector<8x1xf32>
    %87 = vector.broadcast %86 : vector<8x1xf32> to vector<8x256xf32>
    %88 = arith.mulf %83, %87 : vector<8x256xf32>
    %89 = vector.broadcast %65 : vector<8x1xf32> to vector<8x256xf32>
    %90 = arith.mulf %88, %89 : vector<8x256xf32>
    %91 = vector.broadcast %66 : vector<8x1xf32> to vector<8x256xf32>
    %92 = arith.addf %90, %91 : vector<8x256xf32>
    %93 = arith.addf %92, %3 : vector<8x256xf32>
    %cst_46 = arith.constant 0.000000e+00 : f32
    %94 = vector.broadcast %cst_46 : f32 to vector<8x256xf32>
    %95 = arith.maximumf %93, %94 : vector<8x256xf32>
    %96 = vector.broadcast %4 : vector<1x256xf32> to vector<8x256xf32>
    %97 = arith.mulf %95, %96 : vector<8x256xf32>
    %c0_47 = arith.constant 0 : index
    %c0_48 = arith.constant 0 : index
    %98 = vector.load %arg5[%c0_47, %c0_48] : memref<8x256xf32, #tpu.memory_space<vmem>>, vector<8x256xf32>
    tpu.vector_store %arg5[%c0_47, %c0_48], %97 {strides = array<i32>} : memref<8x256xf32, #tpu.memory_space<vmem>>, vector<8x256xf32>,
    return
  }
  func.func @transform_1(%arg0: i32) -> (i32, i32) {
    %c0_i32 = arith.constant 0 : i32
    %c0_i32_0 = arith.constant 0 : i32
    %c0_i32_1 = arith.constant 0 : i32
    return %c0_i32, %c0_i32_0 : i32, i32
  }
  func.func @transform_2(%arg0: i32) -> (i32, i32, i32, i32) {
    %c0_i32 = arith.constant 0 : i32
    %c0_i32_0 = arith.constant 0 : i32
    %c0_i32_1 = arith.constant 0 : i32
    %c0_i32_2 = arith.constant 0 : i32
    return %arg0, %c0_i32, %c0_i32_0, %c0_i32_1 : i32, i32, i32, i32
  }
  func.func @transform_3(%arg0: i32) -> (i32, i32, i32) {
    %c0_i32 = arith.constant 0 : i32
    %c0_i32_0 = arith.constant 0 : i32
    %c0_i32_1 = arith.constant 0 : i32
    return %arg0, %c0_i32, %c0_i32_0 : i32, i32, i32
  }
  func.func @transform_4(%arg0: i32) -> (i32, i32) {
    %c0_i32 = arith.constant 0 : i32
    %c0_i32_0 = arith.constant 0 : i32
    %c0_i32_1 = arith.constant 0 : i32
    return %c0_i32, %c0_i32_0 : i32, i32
  }
}

module attributes {stable_mosaic.version = 11 : i64} {
  func.func @_pool_kernel(%arg0: i32, %arg1: memref<32x256xf32, #tpu.memory_space<vmem>>, %arg2: memref<8x256xf32, #tpu.memory_space<vmem>>) attributes {dimension_semantics = [#tpu.dimension_semantics<parallel>], iteration_bounds = array<i64: 1>, scalar_prefetch = 0 : i64, scratch_operands = 0 : i64, tpu.core_type = #tpu.core_type<tc>, window_params = [{transform_indices = @transform_0, window_bounds = array<i64: 32, 256>}, {transform_indices = @transform_1, window_bounds = array<i64: 8, 256>}]} {
    %c0 = arith.constant 0 : index
    %c0_0 = arith.constant 0 : index
    %0 = vector.load %arg1[%c0, %c0_0] : memref<32x256xf32, #tpu.memory_space<vmem>>, vector<32x256xf32>
    %cst = arith.constant 0.000000e+00 : f32
    %1 = vector.broadcast %cst : f32 to vector<8x256xf32>
    %2 = vector.extract_strided_slice %0 {offsets = [0, 0], sizes = [8, 256], strides = [1, 1]} : vector<32x256xf32> to vector<8x256xf32>
    %3 = arith.addf %1, %2 : vector<8x256xf32>
    %4 = vector.extract_strided_slice %0 {offsets = [8, 0], sizes = [8, 256], strides = [1, 1]} : vector<32x256xf32> to vector<8x256xf32>
    %5 = arith.addf %3, %4 : vector<8x256xf32>
    %6 = vector.extract_strided_slice %0 {offsets = [0, 0], sizes = [8, 256], strides = [1, 1]} : vector<32x256xf32> to vector<8x256xf32>
    %c255_i32 = arith.constant 255 : i32
    %7 = tpu.dynamic_rotate %6 by %c255_i32 dim 1 : vector<8x256xf32>, i32 -> vector<8x256xf32>
    %8 = arith.addf %5, %7 : vector<8x256xf32>
    %9 = vector.extract_strided_slice %0 {offsets = [16, 0], sizes = [8, 256], strides = [1, 1]} : vector<32x256xf32> to vector<8x256xf32>
    %10 = arith.addf %8, %9 : vector<8x256xf32>
    %11 = vector.extract_strided_slice %0 {offsets = [24, 0], sizes = [8, 256], strides = [1, 1]} : vector<32x256xf32> to vector<8x256xf32>
    %12 = arith.addf %10, %11 : vector<8x256xf32>
    %13 = vector.extract_strided_slice %0 {offsets = [16, 0], sizes = [8, 256], strides = [1, 1]} : vector<32x256xf32> to vector<8x256xf32>
    %c255_i32_1 = arith.constant 255 : i32
    %14 = tpu.dynamic_rotate %13 by %c255_i32_1 dim 1 : vector<8x256xf32>, i32 -> vector<8x256xf32>
    %15 = arith.addf %12, %14 : vector<8x256xf32>
    %16 = vector.extract_strided_slice %0 {offsets = [0, 0], sizes = [8, 256], strides = [1, 1]} : vector<32x256xf32> to vector<8x256xf32>
    %c254_i32 = arith.constant 254 : i32
    %17 = tpu.dynamic_rotate %16 by %c254_i32 dim 1 : vector<8x256xf32>, i32 -> vector<8x256xf32>
    %18 = arith.addf %15, %17 : vector<8x256xf32>
    %19 = vector.extract_strided_slice %0 {offsets = [8, 0], sizes = [8, 256], strides = [1, 1]} : vector<32x256xf32> to vector<8x256xf32>
    %c254_i32_2 = arith.constant 254 : i32
    %20 = tpu.dynamic_rotate %19 by %c254_i32_2 dim 1 : vector<8x256xf32>, i32 -> vector<8x256xf32>
    %21 = arith.addf %18, %20 : vector<8x256xf32>
    %22 = vector.extract_strided_slice %0 {offsets = [0, 0], sizes = [8, 256], strides = [1, 1]} : vector<32x256xf32> to vector<8x256xf32>
    %c253_i32 = arith.constant 253 : i32
    %23 = tpu.dynamic_rotate %22 by %c253_i32 dim 1 : vector<8x256xf32>, i32 -> vector<8x256xf32>
    %24 = arith.addf %21, %23 : vector<8x256xf32>
    %cst_3 = arith.constant 0.111111112 : f32
    %25 = vector.broadcast %cst_3 : f32 to vector<8x256xf32>
    %26 = arith.mulf %24, %25 : vector<8x256xf32>
    %c0_4 = arith.constant 0 : index
    %c0_5 = arith.constant 0 : index
    %27 = vector.load %arg2[%c0_4, %c0_5] : memref<8x256xf32, #tpu.memory_space<vmem>>, vector<8x256xf32>
    tpu.vector_store %arg2[%c0_4, %c0_5], %26 {strides = array<i32>} : memref<8x256xf32, #tpu.memory_space<vmem>>, vector<8x256xf32>,
    return
  }
  func.func @transform_0(%arg0: i32) -> (i32, i32) {
    %c0_i32 = arith.constant 0 : i32
    %c0_i32_0 = arith.constant 0 : i32
    return %c0_i32, %arg0 : i32, i32
  }
  func.func @transform_1(%arg0: i32) -> (i32, i32) {
    %c0_i32 = arith.constant 0 : i32
    %c0_i32_0 = arith.constant 0 : i32
    return %c0_i32, %arg0 : i32, i32
  }
}

</mosaic_0001>

<llo_original>
// kernel: downsample_forward.7
$region0: #{downsample_forward.7}
  #allocation0 [shape = 'u32[]', space=smem, size = 0x4, offset = 0x4, fixed_abs, tag = 'smem constant byte address 0x4 - core index']
  #allocation1 [shape = 'u32[144,128]{1,0:T(1,128)}', space=vmem, size = 0x12000, scoped, tag = 'internal scratch']
  %s0 = inlined_call_operand.vmem [shape: f32[32,256], index: 0, kind: input, shape index: {}]
  %s1 = inlined_call_operand.vmem [shape: f32[8,72], index: 1, kind: input, shape index: {}]
  %s2 = inlined_call_operand.vmem [shape: f32[8,256], index: 2, kind: output, shape index: {}]
  %s3 = sld [smem:[#allocation0]]
  $region18: #{downsample_forward.7} parent=0
    _
  %s5 = ssub.s32 1, %s3
  %s6 = scalar_select 0, %s5, %s3
  // Predicated region
  $region2: #{downsample_forward.7} parent=0 // pred_check
    _
  $region3: #{downsample_forward.7} parent=0 // pred_check_branch
    %8 = sbr.rel (0) target = $region5
  $region4: #{downsample_forward.7} parent=0 // pred_region
    _
  $region5: #{downsample_forward.7} parent=0 // pred_fallthru
    _
  // Predicated region
  $region6: #{downsample_forward.7} parent=0 // pred_check
    _
  $region7: #{downsample_forward.7} parent=0 // pred_check_branch
    %10 = sbr.rel (0) target = $region9
  $region8: #{downsample_forward.7} parent=0 // pred_region
    _
  $region9: #{downsample_forward.7} parent=0 // pred_fallthru
    _
  %v11 = vld [vmem:[%s0] sm:$0xff]
  %v12 = vld [vmem:[%s0 + $0x8] sm:$0xff]
  %v13 = vld [vmem:[%s0 + $0x10] sm:$0xff]
  %v14 = vld [vmem:[%s0 + $0x18] sm:$0xff]
  %v15 = vld [vmem:[%s0 + $0x20] sm:$0xff]
  %v16 = vld [vmem:[%s0 + $0x28] sm:$0xff]
  %v17 = vld [vmem:[%s0 + $0x30] sm:$0xff]
  %v18 = vld [vmem:[%s0 + $0x38] sm:$0xff]
  %19 = vrot.lane.b32.xlu0 %v11, 127
  %v20 = vpop.permute.xlu0 %19
  %21 = vrot.lane.b32.xlu0 %v12, 127
  %v22 = vpop.permute.xlu0 %21
  %v23 = vlaneseq
  %v24 = vand.u32 %v23, 127
  %vm25 = vcmp.lt.s32.totalorder %v24, 127
  %v26 = vsel %vm25, %v20, %v22
  %v27 = vsel %vm25, %v22, %v20
  %28 = vrot.lane.b32.xlu0 %v15, 127
  %v29 = vpop.permute.xlu0 %28
  %30 = vrot.lane.b32.xlu0 %v16, 127
  %v31 = vpop.permute.xlu0 %30
  %v32 = vsel %vm25, %v29, %v31
  %v33 = vsel %vm25, %v31, %v29
  %34 = vrot.lane.b32.xlu0 %v11, 119
  %v35 = vpop.permute.xlu0 %34
  %36 = vrot.lane.b32.xlu0 %v12, 119
  %v37 = vpop.permute.xlu0 %36
  %vm38 = vcmp.lt.s32.totalorder %v24, 119
  %v39 = vsel %vm38, %v35, %v37
  %v40 = vsel %vm38, %v37, %v35
  %41 = vrot.lane.b32.xlu0 %v13, 119
  %v42 = vpop.permute.xlu0 %41
  %43 = vrot.lane.b32.xlu0 %v14, 119
  %v44 = vpop.permute.xlu0 %43
  %v45 = vsel %vm38, %v42, %v44
  %v46 = vsel %vm38, %v44, %v42
  %47 = vrot.lane.b32.xlu0 %v11, 118
  %v48 = vpop.permute.xlu0 %47
  %49 = vrot.lane.b32.xlu0 %v12, 118
  %v50 = vpop.permute.xlu0 %49
  %vm51 = vcmp.lt.s32.totalorder %v24, 118
  %v52 = vsel %vm51, %v48, %v50
  %v53 = vsel %vm51, %v50, %v48
  %v54 = vld [vmem:[%s1] sm:$0xff]
  %vm55 = vcmask 588800
  %v57 = vsel %vm55, %v54, 0
  %59 = vmatprep.subr.mxu0 %v12
  %60 = vmatpush1.msra.mxu0 %v11
  %61 = vmatprep.subr.mxu0 %v14
  %62 = vmatpush1.msra.mxu0 %v13
  %63 = vmatprep.subr.mxu0 %v27
  %64 = vmatpush1.msra.mxu0 %v26
  %65 = vmatprep.subr.mxu0 %v16
  %66 = vmatpush1.msra.mxu0 %v15
  %67 = vmatprep.subr.mxu0 %v18
  %68 = vmatpush1.msra.mxu0 %v17
  %69 = vmatprep.subr.mxu0 %v33
  %70 = vmatpush1.msra.mxu0 %v32
  %71 = vmatprep.subr.mxu0 %v40
  %72 = vmatpush1.msra.mxu0 %v39
  %73 = vmatprep.subr.mxu0 %v46
  %74 = vmatpush1.msra.mxu0 %v45
  %75 = vmatprep.subr.mxu0 %v53
  %76 = vmatpush1.msra.mxu0 %v52
  %77 = vmatprep.subr.mxu0 0.0
  %78 = vmatpush1.msra.mxu0 0.0
  %79 = vmatprep.subr.mxu0 0.0
  %80 = vmatpush1.msra.mxu0 0.0
  %81 = vmatprep.subr.mxu0 0.0
  %82 = vmatpush1.msra.mxu0 0.0
  %83 = vmatprep.subr.mxu0 0.0
  %84 = vmatpush1.msra.mxu0 0.0
  %85 = vmatprep.subr.mxu0 0.0
  %86 = vmatpush1.msra.mxu0 0.0
  %87 = vmatprep.subr.mxu0 0.0
  %88 = vmatpush1.msra.mxu0 0.0
  %89 = vmatprep.subr.mxu0 0.0
  %90 = vmatpush1.msra.mxu0 0.0
  %91 = vmatprep.subr.mxu0 0.0
  %92 = vmatpush1.msra.mxu0 0.0
  %93 = vmatprep.subr.mxu0 0.0
  %94 = vmatpush1.msra.mxu0 0.0
  %95 = vmatprep.subr.mxu0 0.0
  %96 = vmatpush1.msra.mxu0 0.0
  %97 = vmatprep.subr.mxu0 0.0
  %98 = vmatpush1.msra.mxu0 0.0
  %99 = vmatprep.subr.mxu0 0.0
  %100 = vmatpush1.msra.mxu0 0.0
  %101 = vmatprep.subr.mxu0 0.0
  %102 = vmatpush1.msra.mxu0 0.0
  %103 = vmatprep.subr.mxu0 0.0
  %104 = vmatpush1.msra.mxu0 0.0
  %105 = vmatprep.subr.mxu0 0.0
  %106 = vmatpush1.msra.mxu0 0.0
  %107 = vmatprep.subr.mxu0 0.0
  %108 = vmatpush1.msra.mxu0 0.0
  %109 = vmatprep.subr.mxu0 0.0
  %110 = vmatpush1.msra.mxu0 0.0
  %111 = vmatprep.subr.mxu0 0.0
  %112 = vmatpush1.msra.mxu0 0.0
  %113 = vmatprep.subr.mxu0 0.0
  %114 = vmatpush1.msra.mxu0 0.0
  %115 = vmatprep.subr.mxu0 0.0
  %116 = vmatpush1.msra.mxu0 0.0
  %117 = vmatprep.subr.mxu0 0.0
  %118 = vmatpush1.msra.mxu0 0.0
  %119 = vmatprep.subr.mxu0 0.0
  %120 = vmatpush1.msra.mxu0 0.0
  %121 = vmatprep.subr.mxu0 0.0
  %122 = vmatpush1.msra.mxu0 0.0
  %123 = vmatprep.mubr.f32.mxu0 0.0
  %124 = vmatmul.mubr.f32.gmra.mrb[0].mxu0 %v57
  %v125 = vpop.f32.mrb[0].mxu0
  %v126 = vadd.f32 0.0, %v125
  %v127 = vpop.f32.mrb[0].mxu0
  %v128 = vadd.f32 0.0, %v127
  %129 = vdwg.mxu0
  %130 = vst [vmem:[%s2] sm:$0xff] %v126
  %131 = vst [vmem:[%s2 + $0x8] sm:$0xff] %v128
  // Predicated region
  $region10: #{downsample_forward.7} parent=0 // pred_check
    _
  $region11: #{downsample_forward.7} parent=0 // pred_check_branch
    %133 = sbr.rel (0) target = $region13
  $region12: #{downsample_forward.7} parent=0 // pred_region
    _
  $region13: #{downsample_forward.7} parent=0 // pred_fallthru
    _
  // Predicated region
  $region14: #{downsample_forward.7} parent=0 // pred_check
    _
  $region15: #{downsample_forward.7} parent=0 // pred_check_branch
    %135 = sbr.rel (0) target = $region17
  $region16: #{downsample_forward.7} parent=0 // pred_region
    _
  $region17: #{downsample_forward.7} parent=0 // pred_fallthru
    _

// kernel: downsample_forward.8
$region0: #{downsample_forward.8}
  #allocation0 [shape = 'u32[]', space=smem, size = 0x4, offset = 0x4, fixed_abs, tag = 'smem constant byte address 0x4 - core index']
  #allocation1 [shape = 'u32[144,128]{1,0:T(1,128)}', space=vmem, size = 0x12000, scoped, tag = 'internal scratch']
  #allocation3 [shape = 's32[]', space=sflag, size = 0x4, offset = 0, fixed_abs, tag = 'sflag constant byte address 0x0 - dummy sync flag']
  %s0 = inlined_call_operand.vmem [shape: f32[8,256], index: 0, kind: input, shape index: {}]
  %s1 = inlined_call_operand.vmem [shape: f32[1,256], index: 1, kind: input, shape index: {}]
  %s2 = inlined_call_operand.vmem [shape: f32[2,6,8,8], index: 2, kind: input, shape index: {}]
  %s3 = inlined_call_operand.vmem [shape: f32[2,8,4], index: 3, kind: input, shape index: {}]
  %s4 = inlined_call_operand.vmem [shape: f32[8,256], index: 4, kind: output, shape index: {}]
  %s5 = sld [smem:[#allocation0]]
  $region84: #{downsample_forward.8} parent=0
    _
  %s7 = ssub.s32 1, %s5
  %s8 = scalar_select 0, %s7, %s5
  loop: start=0, step=1, limit=4
  $region2: #{downsample_forward.8} parent=0 // loop_pre_header
    _
  $region3: #{downsample_forward.8} parent=0 // loop_header
    %s10 = sphi 0, %s14
    %p11 = scmp.ge.s32.totalorder %s10, 4
    %s18 = sphi 0, %s18
    %s20 = sphi 0, %s18
    %s21 = sphi 0, %s20
    %s35 = sphi 0, %s21
    %s41 = sphi 0, %s43
    %s44 = sphi 0, %s41
    %s45 = sphi 0, %s44
    %s61 = sphi 0, %s45
    %s67 = sphi 0, %s69
    %s70 = sphi 0, %s67
    %s71 = sphi 0, %s70
    %s87 = sphi 0, %s71
    %s91 = sphi 0, %s91
    %s93 = sphi 0, %s91
    %s94 = sphi 0, %s93
    %s108 = sphi 0, %s94
  $region4: #{downsample_forward.8} parent=0 // loop_header_branch
    %13 = sbr.rel (%p11) target = $region8
  $region5: #{downsample_forward.8} parent=0 // loop_body
    %s15 = ssub.s32 %s10, 1
    %s16 = ssub.s32 %s10, 2
    %s17 = sadd.s32 %s10, 1
    %s19 = sadd.s32 %s18, 1
    %p22 = scmp.eq.s32.totalorder %s10, 1
    %p23 = scmp.ne.s32.totalorder %s18, %s20
    %p24 = scmp.eq.s32.totalorder %s10, 0
    %p25 = por %p23, %p24
    %p26 = scmp.ne.s32.totalorder %s18, %s20
    %p27 = scmp.eq.s32.totalorder %s15, 1
    %p28 = por %p26, %p27
    %p29 = scmp.ne.s32.totalorder %s20, %s21
    %p30 = scmp.eq.s32.totalorder %s15, 0
    %p31 = por %p29, %p30
    %p32 = scmp.ne.s32.totalorder %s20, %s21
    %p33 = scmp.eq.s32.totalorder %s16, 1
    %p34 = por %p32, %p33
    %p36 = scmp.ne.s32.totalorder %s21, %s35
    %p37 = scmp.eq.s32.totalorder %s16, 0
    %p38 = por %p36, %p37
    %s39 = ssub.s32 %s10, %s17
    %p40 = scmp.eq.s32.totalorder %s39, 0
    %s42 = sadd.s32 %s41, 1
    %s43 = scalar_select %p40, %s41, %s42
    %p46 = pneg %p40
    %p47 = scmp.eq.s32.totalorder %s10, 1
    %p48 = por %p46, %p47
    %p49 = scmp.ne.s32.totalorder %s41, %s44
    %p50 = scmp.eq.s32.totalorder %s10, 0
    %p51 = por %p49, %p50
    %p52 = scmp.ne.s32.totalorder %s41, %s44
    %p53 = scmp.eq.s32.totalorder %s15, 1
    %p54 = por %p52, %p53
    %p55 = scmp.ne.s32.totalorder %s44, %s45
    %p56 = scmp.eq.s32.totalorder %s15, 0
    %p57 = por %p55, %p56
    %p58 = scmp.ne.s32.totalorder %s44, %s45
    %p59 = scmp.eq.s32.totalorder %s16, 1
    %p60 = por %p58, %p59
    %p62 = scmp.ne.s32.totalorder %s45, %s61
    %p63 = scmp.eq.s32.totalorder %s16, 0
    %p64 = por %p62, %p63
    %s65 = ssub.s32 %s10, %s17
    %p66 = scmp.eq.s32.totalorder %s65, 0
    %s68 = sadd.s32 %s67, 1
    %s69 = scalar_select %p66, %s67, %s68
    %p72 = pneg %p66
    %p73 = scmp.eq.s32.totalorder %s10, 1
    %p74 = por %p72, %p73
    %p75 = scmp.ne.s32.totalorder %s67, %s70
    %p76 = scmp.eq.s32.totalorder %s10, 0
    %p77 = por %p75, %p76
    %p78 = scmp.ne.s32.totalorder %s67, %s70
    %p79 = scmp.eq.s32.totalorder %s15, 1
    %p80 = por %p78, %p79
    %p81 = scmp.ne.s32.totalorder %s70, %s71
    %p82 = scmp.eq.s32.totalorder %s15, 0
    %p83 = por %p81, %p82
    %p84 = scmp.ne.s32.totalorder %s70, %s71
    %p85 = scmp.eq.s32.totalorder %s16, 1
    %p86 = por %p84, %p85
    %p88 = scmp.ne.s32.totalorder %s71, %s87
    %p89 = scmp.eq.s32.totalorder %s16, 0
    %p90 = por %p88, %p89
    %s92 = sadd.s32 %s91, 1
    %p95 = scmp.eq.s32.totalorder %s10, 1
    %p96 = scmp.ne.s32.totalorder %s91, %s93
    %p97 = scmp.eq.s32.totalorder %s10, 0
    %p98 = por %p96, %p97
    %p99 = scmp.ne.s32.totalorder %s91, %s93
    %p100 = scmp.eq.s32.totalorder %s15, 1
    %p101 = por %p99, %p100
    %p102 = scmp.ne.s32.totalorder %s93, %s94
    %p103 = scmp.eq.s32.totalorder %s15, 0
    %p104 = por %p102, %p103
    %p105 = scmp.ne.s32.totalorder %s93, %s94
    %p106 = scmp.eq.s32.totalorder %s16, 1
    %p107 = por %p105, %p106
    %p109 = scmp.ne.s32.totalorder %s94, %s108
    %p110 = scmp.eq.s32.totalorder %s16, 0
    %p111 = por %p109, %p110
    %p112 = scmp.le.s32.totalorder 1, %s10
    %p113 = scmp.lt.s32.totalorder %s10, 3
    %p114 = pnand %p112, %p113
    %p115 = pneg %p114
    // Predicated region
    $region9: #{downsample_forward.8} parent=5 // pred_check
      _
    $region10: #{downsample_forward.8} parent=5 // pred_check_branch
      %117 = sbr.rel (%p114) target = $region12
    $region11: #{downsample_forward.8} parent=5 // pred_region
      %s118 = ssub.s32 %s10, 1
      // Predicated region
      $region13: #{downsample_forward.8} parent=11 // pred_check
        %p119 = pneg %p31
      $region14: #{downsample_forward.8} parent=11 // pred_check_branch
        %121 = sbr.rel (%p119) target = $region16
      $region15: #{downsample_forward.8} parent=11 // pred_region
        _
      $region16: #{downsample_forward.8} parent=11 // pred_fallthru
        _
    $region12: #{downsample_forward.8} parent=5 // pred_fallthru
      _
    %p122 = scmp.lt.s32.totalorder %s10, 2
    // Predicated region
    $region17: #{downsample_forward.8} parent=5 // pred_check
      %p123 = pneg %p122
    $region18: #{downsample_forward.8} parent=5 // pred_check_branch
      %125 = sbr.rel (%p123) target = $region20
    $region19: #{downsample_forward.8} parent=5 // pred_region
      // Predicated region
      $region21: #{downsample_forward.8} parent=19 // pred_check
        %p126 = pneg %p51
      $region22: #{downsample_forward.8} parent=19 // pred_check_branch
        %128 = sbr.rel (%p126) target = $region24
      $region23: #{downsample_forward.8} parent=19 // pred_region
        %p129 = scmp.lt.s32.totalorder %s10, 1
        %s130 = scalar_select %p129, %s10, 1
        %s131 = smul.addr %s130, 6
        %s132 = smul.addr %s131, 8
        %s133 = scalar_lea.vmem %s2, %s132
      $region24: #{downsample_forward.8} parent=19 // pred_fallthru
        _
      // Predicated region
      $region25: #{downsample_forward.8} parent=19 // pred_check
        %p134 = pneg %p77
      $region26: #{downsample_forward.8} parent=19 // pred_check_branch
        %136 = sbr.rel (%p134) target = $region28
      $region27: #{downsample_forward.8} parent=19 // pred_region
        %p137 = scmp.lt.s32.totalorder %s10, 1
        %s138 = scalar_select %p137, %s10, 1
        %s139 = smul.addr %s138, 8
        %s140 = scalar_lea.vmem %s3, %s139
      $region28: #{downsample_forward.8} parent=19 // pred_fallthru
        _
    $region20: #{downsample_forward.8} parent=5 // pred_fallthru
      _
    %p141 = scmp.le.s32.totalorder 1, %s10
    %p142 = scmp.lt.s32.totalorder %s10, 3
    %p143 = pnand %p141, %p142
    %p144 = pneg %p143
    // Predicated region
    $region29: #{downsample_forward.8} parent=5 // pred_check
      _
    $region30: #{downsample_forward.8} parent=5 // pred_check_branch
      %146 = sbr.rel (%p143) target = $region32
    $region31: #{downsample_forward.8} parent=5 // pred_region
      %s147 = ssub.s32 %s10, 1
      %p148 = pneg %p31
      %p149 = pneg %p28
      %p150 = scmp.lt.s32.totalorder %s15, 1
      %s151 = scalar_select %p150, %s15, 1
      %s152 = smul.addr %s151, 6
      %s153 = smul.addr %s152, 8
      %s154 = scalar_lea.vmem %s2, %s153
      %p155 = pneg %p57
      %p156 = pneg %p54
      %p157 = scmp.lt.s32.totalorder %s15, 1
      %s158 = scalar_select %p157, %s15, 1
      %s159 = smul.addr %s158, 8
      %s160 = scalar_lea.vmem %s3, %s159
      %p161 = pneg %p83
      %p162 = pneg %p80
      %p163 = pneg %p104
      %p164 = pneg %p101
      %p165 = scmp.lt.s32.totalorder %s15, 1
      %s166 = scalar_select %p165, %s15, 1
      %s167 = smul.addr %s166, 6
      %s168 = smul.addr %s167, 8
      %s169 = scalar_lea.vmem %s2, %s168
      %p170 = scmp.lt.s32.totalorder %s15, 1
      %s171 = scalar_select %p170, %s15, 1
      %s172 = smul.addr %s171, 8
      %s173 = scalar_lea.vmem %s3, %s172
      %p174 = scmp.eq.s32.totalorder %s15, 0
      // Predicated region
      $region33: #{downsample_forward.8} parent=31 // pred_check
        %p175 = pneg %p174
      $region34: #{downsample_forward.8} parent=31 // pred_check_branch
        %177 = sbr.rel (%p175) target = $region36
      $region35: #{downsample_forward.8} parent=31 // pred_region
        $region37: #{downsample_forward.8} parent=35
          #allocation2 [shape = 's32[1]{0}', space=sflag, size = 0x4, scoped, tag = 'scoped memory for downsample_forward.8']
          %p179 = scmp.lt.u32.totalorder 16, 8
          %p180 = pneg %p179
          // Predicated region
          $region38: #{downsample_forward.8} parent=37 // pred_check
            _
          $region39: #{downsample_forward.8} parent=37 // pred_check_branch
            %182 = sbr.rel (%p179) target = $region41
          $region40: #{downsample_forward.8} parent=37 // pred_region
            %s197 = sand.u32 16, 7
            %p198 = scmp.eq.s32.totalorder %s197, 0
            // Predicated region
            $region53: #{downsample_forward.8} parent=40 // pred_check
              %p199 = pneg %p198
            $region54: #{downsample_forward.8} parent=40 // pred_check_branch
              %201 = sbr.rel (%p199) target = $region56
            $region55: #{downsample_forward.8} parent=40 // pred_region
              loop: start=0, step=1, limit=1
              $region57: #{downsample_forward.8} parent=55 // loop_pre_header
                _
              $region58: #{downsample_forward.8} parent=55 // loop_header
                %s203 = sphi 0, %s207
                %p204 = scmp.ge.s32.totalorder %s203, 1
                %s208 = sphi %s0, %s0
                %s209 = sphi %s4, %s4
              $region59: #{downsample_forward.8} parent=55 // loop_header_branch
                %206 = sbr.rel (%p204) target = $region63
              $region60: #{downsample_forward.8} parent=55 // loop_body
                %v210 = vld [vmem:[%s208] sm:$0xff]
                %211 = vst [vmem:[%s209] sm:$0xff] %v210
                %v212 = vld [vmem:[%s208 + $0x8] sm:$0xff]
                %213 = vst [vmem:[%s209 + $0x8] sm:$0xff] %v212
              $region61: #{downsample_forward.8} parent=55 // loop_footer
                %s207 = sadd.s32 1, %s203
              $region62: #{downsample_forward.8} parent=55 // loop_footer_branch
                %202 = sbr.rel target = $region58
              $region63: #{downsample_forward.8} parent=55 // loop_exit
                _
            $region56: #{downsample_forward.8} parent=40 // pred_fallthru
              _
            %p214 = pneg %p198
            // Predicated region
            $region64: #{downsample_forward.8} parent=40 // pred_check
              _
            $region65: #{downsample_forward.8} parent=40 // pred_check_branch
              %216 = sbr.rel (%p198) target = $region67
            $region66: #{downsample_forward.8} parent=40 // pred_region
              %s217 = sand.u32 16, 7
            $region67: #{downsample_forward.8} parent=40 // pred_fallthru
              _
          $region41: #{downsample_forward.8} parent=37 // pred_fallthru
            _
          // Predicated region
          $region42: #{downsample_forward.8} parent=37 // pred_check
            %p183 = pneg %p179
          $region43: #{downsample_forward.8} parent=37 // pred_check_branch
            %185 = sbr.rel (%p183) target = $region45
          $region44: #{downsample_forward.8} parent=37 // pred_region
            %s186 = sshllo.u32 0, 16
            loop: start=0, step=1, limit=1
            $region46: #{downsample_forward.8} parent=44 // loop_pre_header
              _
            $region47: #{downsample_forward.8} parent=44 // loop_header
              %s188 = sphi 0, %s192
              %p189 = scmp.ge.s32.totalorder %s188, 1
              %s193 = sphi %s0, %s0
              %s194 = sphi %s4, %s4
            $region48: #{downsample_forward.8} parent=44 // loop_header_branch
              %191 = sbr.rel (%p189) target = $region52
            $region49: #{downsample_forward.8} parent=44 // loop_body
              %v195 = vld [vmem:[%s193] sm:%s186]
              %196 = vst [vmem:[%s194] sm:%s186] %v195
            $region50: #{downsample_forward.8} parent=44 // loop_footer
              %s192 = sadd.s32 1, %s188
            $region51: #{downsample_forward.8} parent=44 // loop_footer_branch
              %187 = sbr.rel target = $region47
            $region52: #{downsample_forward.8} parent=44 // loop_exit
              _
          $region45: #{downsample_forward.8} parent=37 // pred_fallthru
            _
          // Predicated region
          $region68: #{downsample_forward.8} parent=37 // pred_check
            _
          $region69: #{downsample_forward.8} parent=37 // pred_check_branch
            %220 = sbr.rel (0) target = $region71
          $region70: #{downsample_forward.8} parent=37 // pred_region
            %221 = vsyncadd [#allocation2], 256
          $region71: #{downsample_forward.8} parent=37 // pred_fallthru
            _
          %s222 = smul.u32 8, 1
          %s223 = smul.u32 %s222, 2
          %s224 = sshll.u32 %s223, 4
          %225 = dma.done [#allocation2], %s224
      $region36: #{downsample_forward.8} parent=31 // pred_fallthru
        _
      %v226 = vld [vmem:[%s4] sm:$0xff]
      %v227 = vld [vmem:[%s4 + $0x8] sm:$0xff]
      %v228 = vld [vmem:[%s1] sm:$0x3]
      %v229 = vld [vmem:[%s173] sm:$0xff]
      %230 = vrot.lane.b32.xlu0 %v226, 1
      %v231 = vpop.permute.xlu0 %230
      %232 = vrot.lane.b32.xlu0 %v227, 1
      %v233 = vpop.permute.xlu0 %232
      %v234 = vlaneseq
      %v235 = vand.u32 %v234, 127
      %vm236 = vcmp.lt.s32.totalorder %v235, 1
      %v237 = vsel %vm236, %v231, %v233
      %v238 = vsel %vm236, %v233, %v231
      %239 = vrot.lane.b32.xlu0 %v226, 127
      %v240 = vpop.permute.xlu0 %239
      %241 = vrot.lane.b32.xlu0 %v227, 127
      %v242 = vpop.permute.xlu0 %241
      %vm243 = vcmp.lt.s32.totalorder %v235, 127
      %v244 = vsel %vm243, %v240, %v242
      %v245 = vsel %vm243, %v242, %v240
      %v246 = vld [vmem:[%s169] sm:$0xff]
      %s247 = scalar_lea.vmem %s169, 8
      %v248 = vld [vmem:[%s247] sm:$0xff]
      %vm249 = vcmask 64512
      %v251 = vsel %vm249, %v248, 0
      %253 = vmatprep.subr.mxu0 %v227
      %254 = vmatpush1.msra.mxu0 %v226
      %255 = vmatprep.subr.mxu0 0.0
      %256 = vmatpush1.msra.mxu0 0.0
      %257 = vmatprep.subr.mxu0 0.0
      %258 = vmatpush1.msra.mxu0 0.0
      %259 = vmatprep.subr.mxu0 0.0
      %260 = vmatpush1.msra.mxu0 0.0
      %261 = vmatprep.subr.mxu0 0.0
      %262 = vmatpush1.msra.mxu0 0.0
      %263 = vmatprep.subr.mxu0 0.0
      %264 = vmatpush1.msra.mxu0 0.0
      %265 = vmatprep.subr.mxu0 0.0
      %266 = vmatpush1.msra.mxu0 0.0
      %267 = vmatprep.subr.mxu0 0.0
      %268 = vmatpush1.msra.mxu0 0.0
      %269 = vmatprep.subr.mxu0 0.0
      %270 = vmatpush1.msra.mxu0 0.0
      %271 = vmatprep.subr.mxu0 0.0
      %272 = vmatpush1.msra.mxu0 0.0
      %273 = vmatprep.subr.mxu0 0.0
      %274 = vmatpush1.msra.mxu0 0.0
      %275 = vmatprep.subr.mxu0 0.0
      %276 = vmatpush1.msra.mxu0 0.0
      %277 = vmatprep.subr.mxu0 0.0
      %278 = vmatpush1.msra.mxu0 0.0
      %279 = vmatprep.subr.mxu0 0.0
      %280 = vmatpush1.msra.mxu0 0.0
      %281 = vmatprep.subr.mxu0 0.0
      %282 = vmatpush1.msra.mxu0 0.0
      %283 = vmatprep.subr.mxu0 0.0
      %284 = vmatpush1.msra.mxu0 0.0
      %285 = vmatprep.subr.mxu0 0.0
      %286 = vmatpush1.msra.mxu0 0.0
      %287 = vmatprep.subr.mxu0 0.0
      %288 = vmatpush1.msra.mxu0 0.0
      %289 = vmatprep.subr.mxu0 0.0
      %290 = vmatpush1.msra.mxu0 0.0
      %291 = vmatprep.subr.mxu0 0.0
      %292 = vmatpush1.msra.mxu0 0.0
      %293 = vmatprep.subr.mxu0 0.0
      %294 = vmatpush1.msra.mxu0 0.0
      %295 = vmatprep.subr.mxu0 0.0
      %296 = vmatpush1.msra.mxu0 0.0
      %297 = vmatprep.subr.mxu0 0.0
      %298 = vmatpush1.msra.mxu0 0.0
      %299 = vmatprep.subr.mxu0 0.0
      %300 = vmatpush1.msra.mxu0 0.0
      %301 = vmatprep.subr.mxu0 0.0
      %302 = vmatpush1.msra.mxu0 0.0
      %303 = vmatprep.subr.mxu0 0.0
      %304 = vmatpush1.msra.mxu0 0.0
      %305 = vmatprep.subr.mxu0 0.0
      %306 = vmatpush1.msra.mxu0 0.0
      %307 = vmatprep.subr.mxu0 0.0
      %308 = vmatpush1.msra.mxu0 0.0
      %309 = vmatprep.subr.mxu0 0.0
      %310 = vmatpush1.msra.mxu0 0.0
      %311 = vmatprep.subr.mxu0 0.0
      %312 = vmatpush1.msra.mxu0 0.0
      %313 = vmatprep.subr.mxu0 0.0
      %314 = vmatpush1.msra.mxu0 0.0
      %315 = vmatprep.subr.mxu0 0.0
      %316 = vmatpush1.msra.mxu0 0.0
      %317 = vmatprep.mubr.f32.mxu0 0.0
      %318 = vmatmul.mubr.f32.gmra.mrb[0].mxu0 %v251
      %v319 = vpop.f32.mrb[0].mxu0
      %v320 = vadd.f32 0.0, %v319
      %v321 = vpop.f32.mrb[0].mxu0
      %v322 = vadd.f32 0.0, %v321
      %323 = vdwg.mxu0
      %v325 = vsel %vm249, %v246, 0
      %327 = vmatprep.subr.mxu0 %v237
      %328 = vmatpush1.msra.mxu0 %v238
      %329 = vmatprep.subr.mxu0 0.0
      %330 = vmatpush1.msra.mxu0 0.0
      %331 = vmatprep.subr.mxu0 0.0
      %332 = vmatpush1.msra.mxu0 0.0
      %333 = vmatprep.subr.mxu0 0.0
      %334 = vmatpush1.msra.mxu0 0.0
      %335 = vmatprep.subr.mxu0 0.0
      %336 = vmatpush1.msra.mxu0 0.0
      %337 = vmatprep.subr.mxu0 0.0
      %338 = vmatpush1.msra.mxu0 0.0
      %339 = vmatprep.subr.mxu0 0.0
      %340 = vmatpush1.msra.mxu0 0.0
      %341 = vmatprep.subr.mxu0 0.0
      %342 = vmatpush1.msra.mxu0 0.0
      %343 = vmatprep.subr.mxu0 0.0
      %344 = vmatpush1.msra.mxu0 0.0
      %345 = vmatprep.subr.mxu0 0.0
      %346 = vmatpush1.msra.mxu0 0.0
      %347 = vmatprep.subr.mxu0 0.0
      %348 = vmatpush1.msra.mxu0 0.0
      %349 = vmatprep.subr.mxu0 0.0
      %350 = vmatpush1.msra.mxu0 0.0
      %351 = vmatprep.subr.mxu0 0.0
      %352 = vmatpush1.msra.mxu0 0.0
      %353 = vmatprep.subr.mxu0 0.0
      %354 = vmatpush1.msra.mxu0 0.0
      %355 = vmatprep.subr.mxu0 0.0
      %356 = vmatpush1.msra.mxu0 0.0
      %357 = vmatprep.subr.mxu0 0.0
      %358 = vmatpush1.msra.mxu0 0.0
      %359 = vmatprep.subr.mxu0 0.0
      %360 = vmatpush1.msra.mxu0 0.0
      %361 = vmatprep.subr.mxu0 0.0
      %362 = vmatpush1.msra.mxu0 0.0
      %363 = vmatprep.subr.mxu0 0.0
      %364 = vmatpush1.msra.mxu0 0.0
      %365 = vmatprep.subr.mxu0 0.0
      %366 = vmatpush1.msra.mxu0 0.0
      %367 = vmatprep.subr.mxu0 0.0
      %368 = vmatpush1.msra.mxu0 0.0
      %369 = vmatprep.subr.mxu0 0.0
      %370 = vmatpush1.msra.mxu0 0.0
      %371 = vmatprep.subr.mxu0 0.0
      %372 = vmatpush1.msra.mxu0 0.0
      %373 = vmatprep.subr.mxu0 0.0
      %374 = vmatpush1.msra.mxu0 0.0
      %375 = vmatprep.subr.mxu0 0.0
      %376 = vmatpush1.msra.mxu0 0.0
      %377 = vmatprep.subr.mxu0 0.0
      %378 = vmatpush1.msra.mxu0 0.0
      %379 = vmatprep.subr.mxu0 0.0
      %380 = vmatpush1.msra.mxu0 0.0
      %381 = vmatprep.subr.mxu0 0.0
      %382 = vmatpush1.msra.mxu0 0.0
      %383 = vmatprep.subr.mxu0 0.0
      %384 = vmatpush1.msra.mxu0 0.0
      %385 = vmatprep.subr.mxu0 0.0
      %386 = vmatpush1.msra.mxu0 0.0
      %387 = vmatprep.subr.mxu0 0.0
      %388 = vmatpush1.msra.mxu0 0.0
      %389 = vmatprep.subr.mxu0 0.0
      %390 = vmatpush1.msra.mxu0 0.0
      %391 = vmatprep.mubr.f32.mxu0 0.0
      %392 = vmatmul.mubr.f32.gmra.mrb[0].mxu0 %v325
      %v393 = vpop.f32.mrb[0].mxu0
      %v394 = vadd.f32 %v320, %v393
      %v395 = vpop.f32.mrb[0].mxu0
      %v396 = vadd.f32 %v322, %v395
      %397 = vdwg.mxu0
      %s398 = scalar_lea.vmem %s169, 16
      %v399 = vld [vmem:[%s398] sm:$0xff]
      %v401 = vsel %vm249, %v399, 0
      %403 = vmatprep.subr.mxu0 %v245
      %404 = vmatpush1.msra.mxu0 %v244
      %405 = vmatprep.subr.mxu0 0.0
      %406 = vmatpush1.msra.mxu0 0.0
      %407 = vmatprep.subr.mxu0 0.0
      %408 = vmatpush1.msra.mxu0 0.0
      %409 = vmatprep.subr.mxu0 0.0
      %410 = vmatpush1.msra.mxu0 0.0
      %411 = vmatprep.subr.mxu0 0.0
      %412 = vmatpush1.msra.mxu0 0.0
      %413 = vmatprep.subr.mxu0 0.0
      %414 = vmatpush1.msra.mxu0 0.0
      %415 = vmatprep.subr.mxu0 0.0
      %416 = vmatpush1.msra.mxu0 0.0
      %417 = vmatprep.subr.mxu0 0.0
      %418 = vmatpush1.msra.mxu0 0.0
      %419 = vmatprep.subr.mxu0 0.0
      %420 = vmatpush1.msra.mxu0 0.0
      %421 = vmatprep.subr.mxu0 0.0
      %422 = vmatpush1.msra.mxu0 0.0
      %423 = vmatprep.subr.mxu0 0.0
      %424 = vmatpush1.msra.mxu0 0.0
      %425 = vmatprep.subr.mxu0 0.0
      %426 = vmatpush1.msra.mxu0 0.0
      %427 = vmatprep.subr.mxu0 0.0
      %428 = vmatpush1.msra.mxu0 0.0
      %429 = vmatprep.subr.mxu0 0.0
      %430 = vmatpush1.msra.mxu0 0.0
      %431 = vmatprep.subr.mxu0 0.0
      %432 = vmatpush1.msra.mxu0 0.0
      %433 = vmatprep.subr.mxu0 0.0
      %434 = vmatpush1.msra.mxu0 0.0
      %435 = vmatprep.subr.mxu0 0.0
      %436 = vmatpush1.msra.mxu0 0.0
      %437 = vmatprep.subr.mxu0 0.0
      %438 = vmatpush1.msra.mxu0 0.0
      %439 = vmatprep.subr.mxu0 0.0
      %440 = vmatpush1.msra.mxu0 0.0
      %441 = vmatprep.subr.mxu0 0.0
      %442 = vmatpush1.msra.mxu0 0.0
      %443 = vmatprep.subr.mxu0 0.0
      %444 = vmatpush1.msra.mxu0 0.0
      %445 = vmatprep.subr.mxu0 0.0
      %446 = vmatpush1.msra.mxu0 0.0
      %447 = vmatprep.subr.mxu0 0.0
      %448 = vmatpush1.msra.mxu0 0.0
      %449 = vmatprep.subr.mxu0 0.0
      %450 = vmatpush1.msra.mxu0 0.0
      %451 = vmatprep.subr.mxu0 0.0
      %452 = vmatpush1.msra.mxu0 0.0
      %453 = vmatprep.subr.mxu0 0.0
      %454 = vmatpush1.msra.mxu0 0.0
      %455 = vmatprep.subr.mxu0 0.0
      %456 = vmatpush1.msra.mxu0 0.0
      %457 = vmatprep.subr.mxu0 0.0
      %458 = vmatpush1.msra.mxu0 0.0
      %459 = vmatprep.subr.mxu0 0.0
      %460 = vmatpush1.msra.mxu0 0.0
      %461 = vmatprep.subr.mxu0 0.0
      %462 = vmatpush1.msra.mxu0 0.0
      %463 = vmatprep.subr.mxu0 0.0
      %464 = vmatpush1.msra.mxu0 0.0
      %465 = vmatprep.subr.mxu0 0.0
      %466 = vmatpush1.msra.mxu0 0.0
      %467 = vmatprep.mubr.f32.mxu0 0.0
      %468 = vmatmul.mubr.f32.gmra.mrb[0].mxu0 %v401
      %v469 = vpop.f32.mrb[0].mxu0
      %v470 = vadd.f32 0.0, %v469
      %v471 = vpop.f32.mrb[0].mxu0
      %v472 = vadd.f32 0.0, %v471
      %473 = vdwg.mxu0
      %v474 = vadd.f32 %v394, %v470
      %v475 = vadd.f32 %v396, %v472
      %v477 = vlaneseq
      %v478 = vshrl.u32 %v477, 7
      %v479 = vsub.s32 0, %v478
      %v480 = vrot.slane %v228, %v479
      %v481 = vlaneseq
      %v482 = vshrl.u32 %v481, 7
      %v483 = vsub.s32 1, %v482
      %v484 = vrot.slane %v228, %v483
      %v487 = vmul.f32 %v474, %v480
      %v488 = vmul.f32 %v475, %v484
      %v489 = vadd.f32 %v487, %v488
      %490 = vadd.xlane.f32.xlu0 %v489
      %v491 = vpop.xlane.xlu0 %490
      %v492 = vmul.f32 %v487, %v487
      %v493 = vmul.f32 %v488, %v488
      %v494 = vadd.f32 %v492, %v493
      %495 = vadd.xlane.f32.xlu0 %v494
      %v496 = vpop.xlane.xlu0 %495
      %v497 = vmul.f32 %v491, 0.0078125
      %v498 = vmul.f32 %v496, 0.0078125
      %v499 = vmul.f32 %v497, %v497
      %v500 = vsub.f32 %v498, %v499
      %v501 = vmax.f32 %v500, 0.0
      %v502 = vsub.f32 %v474, %v497
      %v503 = vsub.f32 %v475, %v497
      %v504 = vadd.f32 %v501, 1e-05
      %v505 = vrsqrt.pop %v504
      %v506 = vmul.f32 %v502, %v505
      %v507 = vmul.f32 %v503, %v505
      %509 = vset.pattern.permute.xlu0 0
      %510 = vperm.xlu0 %509, %v229
      %v511 = vpop.permute.xlu0 %510
      %v513 = vmul.f32 %v506, %v511
      %v514 = vmul.f32 %v507, %v511
      %515 = vset.pattern.permute.xlu0 1
      %516 = vperm.xlu0 %515, %v229
      %v517 = vpop.permute.xlu0 %516
      %v519 = vadd.f32 %v513, %v517
      %v520 = vadd.f32 %v514, %v517
      %v521 = vmax.f32 %v519, 0.0
      %v522 = vmax.f32 %v520, 0.0
      %v523 = vmul.f32 %v521, %v480
      %v524 = vmul.f32 %v522, %v484
      %525 = vrot.lane.b32.xlu0 %v523, 1
      %v526 = vpop.permute.xlu0 %525
      %527 = vrot.lane.b32.xlu0 %v524, 1
      %v528 = vpop.permute.xlu0 %527
      %v529 = vsel %vm236, %v526, %v528
      %v530 = vsel %vm236, %v528, %v526
      %531 = vrot.lane.b32.xlu0 %v523, 127
      %v532 = vpop.permute.xlu0 %531
      %533 = vrot.lane.b32.xlu0 %v524, 127
      %v534 = vpop.permute.xlu0 %533
      %v535 = vsel %vm243, %v532, %v534
      %v536 = vsel %vm243, %v534, %v532
      %s537 = scalar_lea.vmem %s169, 24
      %v538 = vld [vmem:[%s537] sm:$0xff]
      %s539 = scalar_lea.vmem %s169, 32
      %v540 = vld [vmem:[%s539] sm:$0xff]
      %v542 = vsel %vm249, %v540, 0
      %544 = vmatprep.subr.mxu0 %v524
      %545 = vmatpush1.msra.mxu0 %v523
      %546 = vmatprep.subr.mxu0 0.0
      %547 = vmatpush1.msra.mxu0 0.0
      %548 = vmatprep.subr.mxu0 0.0
      %549 = vmatpush1.msra.mxu0 0.0
      %550 = vmatprep.subr.mxu0 0.0
      %551 = vmatpush1.msra.mxu0 0.0
      %552 = vmatprep.subr.mxu0 0.0
      %553 = vmatpush1.msra.mxu0 0.0
      %554 = vmatprep.subr.mxu0 0.0
      %555 = vmatpush1.msra.mxu0 0.0
      %556 = vmatprep.subr.mxu0 0.0
      %557 = vmatpush1.msra.mxu0 0.0
      %558 = vmatprep.subr.mxu0 0.0
      %559 = vmatpush1.msra.mxu0 0.0
      %560 = vmatprep.subr.mxu0 0.0
      %561 = vmatpush1.msra.mxu0 0.0
      %562 = vmatprep.subr.mxu0 0.0
      %563 = vmatpush1.msra.mxu0 0.0
      %564 = vmatprep.subr.mxu0 0.0
      %565 = vmatpush1.msra.mxu0 0.0
      %566 = vmatprep.subr.mxu0 0.0
      %567 = vmatpush1.msra.mxu0 0.0
      %568 = vmatprep.subr.mxu0 0.0
      %569 = vmatpush1.msra.mxu0 0.0
      %570 = vmatprep.subr.mxu0 0.0
      %571 = vmatpush1.msra.mxu0 0.0
      %572 = vmatprep.subr.mxu0 0.0
      %573 = vmatpush1.msra.mxu0 0.0
      %574 = vmatprep.subr.mxu0 0.0
      %575 = vmatpush1.msra.mxu0 0.0
      %576 = vmatprep.subr.mxu0 0.0
      %577 = vmatpush1.msra.mxu0 0.0
      %578 = vmatprep.subr.mxu0 0.0
      %579 = vmatpush1.msra.mxu0 0.0
      %580 = vmatprep.subr.mxu0 0.0
      %581 = vmatpush1.msra.mxu0 0.0
      %582 = vmatprep.subr.mxu0 0.0
      %583 = vmatpush1.msra.mxu0 0.0
      %584 = vmatprep.subr.mxu0 0.0
      %585 = vmatpush1.msra.mxu0 0.0
      %586 = vmatprep.subr.mxu0 0.0
      %587 = vmatpush1.msra.mxu0 0.0
      %588 = vmatprep.subr.mxu0 0.0
      %589 = vmatpush1.msra.mxu0 0.0
      %590 = vmatprep.subr.mxu0 0.0
      %591 = vmatpush1.msra.mxu0 0.0
      %592 = vmatprep.subr.mxu0 0.0
      %593 = vmatpush1.msra.mxu0 0.0
      %594 = vmatprep.subr.mxu0 0.0
      %595 = vmatpush1.msra.mxu0 0.0
      %596 = vmatprep.subr.mxu0 0.0
      %597 = vmatpush1.msra.mxu0 0.0
      %598 = vmatprep.subr.mxu0 0.0
      %599 = vmatpush1.msra.mxu0 0.0
      %600 = vmatprep.subr.mxu0 0.0
      %601 = vmatpush1.msra.mxu0 0.0
      %602 = vmatprep.subr.mxu0 0.0
      %603 = vmatpush1.msra.mxu0 0.0
      %604 = vmatprep.subr.mxu0 0.0
      %605 = vmatpush1.msra.mxu0 0.0
      %606 = vmatprep.subr.mxu0 0.0
      %607 = vmatpush1.msra.mxu0 0.0
      %608 = vmatprep.mubr.f32.mxu0 0.0
      %609 = vmatmul.mubr.f32.gmra.mrb[0].mxu0 %v542
      %v610 = vpop.f32.mrb[0].mxu0
      %v611 = vadd.f32 0.0, %v610
      %v612 = vpop.f32.mrb[0].mxu0
      %v613 = vadd.f32 0.0, %v612
      %614 = vdwg.mxu0
      %v616 = vsel %vm249, %v538, 0
      %618 = vmatprep.subr.mxu0 %v529
      %619 = vmatpush1.msra.mxu0 %v530
      %620 = vmatprep.subr.mxu0 0.0
      %621 = vmatpush1.msra.mxu0 0.0
      %622 = vmatprep.subr.mxu0 0.0
      %623 = vmatpush1.msra.mxu0 0.0
      %624 = vmatprep.subr.mxu0 0.0
      %625 = vmatpush1.msra.mxu0 0.0
      %626 = vmatprep.subr.mxu0 0.0
      %627 = vmatpush1.msra.mxu0 0.0
      %628 = vmatprep.subr.mxu0 0.0
      %629 = vmatpush1.msra.mxu0 0.0
      %630 = vmatprep.subr.mxu0 0.0
      %631 = vmatpush1.msra.mxu0 0.0
      %632 = vmatprep.subr.mxu0 0.0
      %633 = vmatpush1.msra.mxu0 0.0
      %634 = vmatprep.subr.mxu0 0.0
      %635 = vmatpush1.msra.mxu0 0.0
      %636 = vmatprep.subr.mxu0 0.0
      %637 = vmatpush1.msra.mxu0 0.0
      %638 = vmatprep.subr.mxu0 0.0
      %639 = vmatpush1.msra.mxu0 0.0
      %640 = vmatprep.subr.mxu0 0.0
      %641 = vmatpush1.msra.mxu0 0.0
      %642 = vmatprep.subr.mxu0 0.0
      %643 = vmatpush1.msra.mxu0 0.0
      %644 = vmatprep.subr.mxu0 0.0
      %645 = vmatpush1.msra.mxu0 0.0
      %646 = vmatprep.subr.mxu0 0.0
      %647 = vmatpush1.msra.mxu0 0.0
      %648 = vmatprep.subr.mxu0 0.0
      %649 = vmatpush1.msra.mxu0 0.0
      %650 = vmatprep.subr.mxu0 0.0
      %651 = vmatpush1.msra.mxu0 0.0
      %652 = vmatprep.subr.mxu0 0.0
      %653 = vmatpush1.msra.mxu0 0.0
      %654 = vmatprep.subr.mxu0 0.0
      %655 = vmatpush1.msra.mxu0 0.0
      %656 = vmatprep.subr.mxu0 0.0
      %657 = vmatpush1.msra.mxu0 0.0
      %658 = vmatprep.subr.mxu0 0.0
      %659 = vmatpush1.msra.mxu0 0.0
      %660 = vmatprep.subr.mxu0 0.0
      %661 = vmatpush1.msra.mxu0 0.0
      %662 = vmatprep.subr.mxu0 0.0
      %663 = vmatpush1.msra.mxu0 0.0
      %664 = vmatprep.subr.mxu0 0.0
      %665 = vmatpush1.msra.mxu0 0.0
      %666 = vmatprep.subr.mxu0 0.0
      %667 = vmatpush1.msra.mxu0 0.0
      %668 = vmatprep.subr.mxu0 0.0
      %669 = vmatpush1.msra.mxu0 0.0
      %670 = vmatprep.subr.mxu0 0.0
      %671 = vmatpush1.msra.mxu0 0.0
      %672 = vmatprep.subr.mxu0 0.0
      %673 = vmatpush1.msra.mxu0 0.0
      %674 = vmatprep.subr.mxu0 0.0
      %675 = vmatpush1.msra.mxu0 0.0
      %676 = vmatprep.subr.mxu0 0.0
      %677 = vmatpush1.msra.mxu0 0.0
      %678 = vmatprep.subr.mxu0 0.0
      %679 = vmatpush1.msra.mxu0 0.0
      %680 = vmatprep.subr.mxu0 0.0
      %681 = vmatpush1.msra.mxu0 0.0
      %682 = vmatprep.mubr.f32.mxu0 0.0
      %683 = vmatmul.mubr.f32.gmra.mrb[0].mxu0 %v616
      %v684 = vpop.f32.mrb[0].mxu0
      %v685 = vadd.f32 %v611, %v684
      %v686 = vpop.f32.mrb[0].mxu0
      %v687 = vadd.f32 %v613, %v686
      %688 = vdwg.mxu0
      %s689 = scalar_lea.vmem %s169, 40
      %v690 = vld [vmem:[%s689] sm:$0xff]
      %v692 = vsel %vm249, %v690, 0
      %694 = vmatprep.subr.mxu0 %v536
      %695 = vmatpush1.msra.mxu0 %v535
      %696 = vmatprep.subr.mxu0 0.0
      %697 = vmatpush1.msra.mxu0 0.0
      %698 = vmatprep.subr.mxu0 0.0
      %699 = vmatpush1.msra.mxu0 0.0
      %700 = vmatprep.subr.mxu0 0.0
      %701 = vmatpush1.msra.mxu0 0.0
      %702 = vmatprep.subr.mxu0 0.0
      %703 = vmatpush1.msra.mxu0 0.0
      %704 = vmatprep.subr.mxu0 0.0
      %705 = vmatpush1.msra.mxu0 0.0
      %706 = vmatprep.subr.mxu0 0.0
      %707 = vmatpush1.msra.mxu0 0.0
      %708 = vmatprep.subr.mxu0 0.0
      %709 = vmatpush1.msra.mxu0 0.0
      %710 = vmatprep.subr.mxu0 0.0
      %711 = vmatpush1.msra.mxu0 0.0
      %712 = vmatprep.subr.mxu0 0.0
      %713 = vmatpush1.msra.mxu0 0.0
      %714 = vmatprep.subr.mxu0 0.0
      %715 = vmatpush1.msra.mxu0 0.0
      %716 = vmatprep.subr.mxu0 0.0
      %717 = vmatpush1.msra.mxu0 0.0
      %718 = vmatprep.subr.mxu0 0.0
      %719 = vmatpush1.msra.mxu0 0.0
      %720 = vmatprep.subr.mxu0 0.0
      %721 = vmatpush1.msra.mxu0 0.0
      %722 = vmatprep.subr.mxu0 0.0
      %723 = vmatpush1.msra.mxu0 0.0
      %724 = vmatprep.subr.mxu0 0.0
      %725 = vmatpush1.msra.mxu0 0.0
      %726 = vmatprep.subr.mxu0 0.0
      %727 = vmatpush1.msra.mxu0 0.0
      %728 = vmatprep.subr.mxu0 0.0
      %729 = vmatpush1.msra.mxu0 0.0
      %730 = vmatprep.subr.mxu0 0.0
      %731 = vmatpush1.msra.mxu0 0.0
      %732 = vmatprep.subr.mxu0 0.0
      %733 = vmatpush1.msra.mxu0 0.0
      %734 = vmatprep.subr.mxu0 0.0
      %735 = vmatpush1.msra.mxu0 0.0
      %736 = vmatprep.subr.mxu0 0.0
      %737 = vmatpush1.msra.mxu0 0.0
      %738 = vmatprep.subr.mxu0 0.0
      %739 = vmatpush1.msra.mxu0 0.0
      %740 = vmatprep.subr.mxu0 0.0
      %741 = vmatpush1.msra.mxu0 0.0
      %742 = vmatprep.subr.mxu0 0.0
      %743 = vmatpush1.msra.mxu0 0.0
      %744 = vmatprep.subr.mxu0 0.0
      %745 = vmatpush1.msra.mxu0 0.0
      %746 = vmatprep.subr.mxu0 0.0
      %747 = vmatpush1.msra.mxu0 0.0
      %748 = vmatprep.subr.mxu0 0.0
      %749 = vmatpush1.msra.mxu0 0.0
      %750 = vmatprep.subr.mxu0 0.0
      %751 = vmatpush1.msra.mxu0 0.0
      %752 = vmatprep.subr.mxu0 0.0
      %753 = vmatpush1.msra.mxu0 0.0
      %754 = vmatprep.subr.mxu0 0.0
      %755 = vmatpush1.msra.mxu0 0.0
      %756 = vmatprep.subr.mxu0 0.0
      %757 = vmatpush1.msra.mxu0 0.0
      %758 = vmatprep.mubr.f32.mxu0 0.0
      %759 = vmatmul.mubr.f32.gmra.mrb[0].mxu0 %v692
      %v760 = vpop.f32.mrb[0].mxu0
      %v761 = vadd.f32 0.0, %v760
      %v762 = vpop.f32.mrb[0].mxu0
      %v763 = vadd.f32 0.0, %v762
      %764 = vdwg.mxu0
      %v765 = vadd.f32 %v685, %v761
      %v766 = vadd.f32 %v687, %v763
      %v767 = vmul.f32 %v765, %v480
      %v768 = vmul.f32 %v766, %v484
      %v769 = vadd.f32 %v767, %v768
      %770 = vadd.xlane.f32.xlu0 %v769
      %v771 = vpop.xlane.xlu0 %770
      %v772 = vmul.f32 %v767, %v767
      %v773 = vmul.f32 %v768, %v768
      %v774 = vadd.f32 %v772, %v773
      %775 = vadd.xlane.f32.xlu0 %v774
      %v776 = vpop.xlane.xlu0 %775
      %v777 = vmul.f32 %v771, 0.0078125
      %v778 = vmul.f32 %v776, 0.0078125
      %v779 = vmul.f32 %v777, %v777
      %v780 = vsub.f32 %v778, %v779
      %v781 = vmax.f32 %v780, 0.0
      %v782 = vsub.f32 %v765, %v777
      %v783 = vsub.f32 %v766, %v777
      %v784 = vadd.f32 %v781, 1e-05
      %v785 = vrsqrt.pop %v784
      %v786 = vmul.f32 %v782, %v785
      %v787 = vmul.f32 %v783, %v785
      %788 = vset.pattern.permute.xlu0 2
      %789 = vperm.xlu0 %788, %v229
      %v790 = vpop.permute.xlu0 %789
      %v792 = vmul.f32 %v786, %v790
      %v793 = vmul.f32 %v787, %v790
      %794 = vset.pattern.permute.xlu0 3
      %795 = vperm.xlu0 %794, %v229
      %v796 = vpop.permute.xlu0 %795
      %v798 = vadd.f32 %v792, %v796
      %v799 = vadd.f32 %v793, %v796
      %v800 = vadd.f32 %v798, %v226
      %v801 = vadd.f32 %v799, %v227
      %v802 = vmax.f32 %v800, 0.0
      %v803 = vmax.f32 %v801, 0.0
      %v804 = vmul.f32 %v802, %v480
      %v805 = vmul.f32 %v803, %v484
      %806 = vst [vmem:[%s4] sm:$0xff] %v804
      %807 = vst [vmem:[%s4 + $0x8] sm:$0xff] %v805
      // Predicated region
      $region72: #{downsample_forward.8} parent=31 // pred_check
        %p808 = pneg %p101
      $region73: #{downsample_forward.8} parent=31 // pred_check_branch
        %810 = sbr.rel (%p808) target = $region75
      $region74: #{downsample_forward.8} parent=31 // pred_region
        _
      $region75: #{downsample_forward.8} parent=31 // pred_fallthru
        _
      // Predicated region
      $region76: #{downsample_forward.8} parent=31 // pred_check
        %p811 = pneg %p101
      $region77: #{downsample_forward.8} parent=31 // pred_check_branch
        %813 = sbr.rel (%p811) target = $region79
      $region78: #{downsample_forward.8} parent=31 // pred_region
        _
      $region79: #{downsample_forward.8} parent=31 // pred_fallthru
        _
    $region32: #{downsample_forward.8} parent=5 // pred_fallthru
      _
    %p814 = scmp.le.s32.totalorder 2, %s10
    // Predicated region
    $region80: #{downsample_forward.8} parent=5 // pred_check
      %p815 = pneg %p814
    $region81: #{downsample_forward.8} parent=5 // pred_check_branch
      %817 = sbr.rel (%p815) target = $region83
    $region82: #{downsample_forward.8} parent=5 // pred_region
      %s818 = ssub.s32 %s10, 2
    $region83: #{downsample_forward.8} parent=5 // pred_fallthru
      _
  $region6: #{downsample_forward.8} parent=0 // loop_footer
    %s14 = sadd.s32 1, %s10
  $region7: #{downsample_forward.8} parent=0 // loop_footer_branch
    %9 = sbr.rel target = $region3
  $region8: #{downsample_forward.8} parent=0 // loop_exit
    _

// kernel: downsample_forward.9
$region0: #{downsample_forward.9}
  #allocation0 [shape = 'u32[]', space=smem, size = 0x4, offset = 0x4, fixed_abs, tag = 'smem constant byte address 0x4 - core index']
  #allocation1 [shape = 'u32[144,128]{1,0:T(1,128)}', space=vmem, size = 0x12000, scoped, tag = 'internal scratch']
  %s0 = inlined_call_operand.vmem [shape: f32[32,256], index: 0, kind: input, shape index: {}]
  %s1 = inlined_call_operand.vmem [shape: f32[8,72], index: 1, kind: input, shape index: {}]
  %s2 = inlined_call_operand.vmem [shape: f32[8,256], index: 2, kind: output, shape index: {}]
  %s3 = sld [smem:[#allocation0]]
  $region18: #{downsample_forward.9} parent=0
    _
  %s5 = ssub.s32 1, %s3
  %s6 = scalar_select 0, %s5, %s3
  // Predicated region
  $region2: #{downsample_forward.9} parent=0 // pred_check
    _
  $region3: #{downsample_forward.9} parent=0 // pred_check_branch
    %8 = sbr.rel (0) target = $region5
  $region4: #{downsample_forward.9} parent=0 // pred_region
    _
  $region5: #{downsample_forward.9} parent=0 // pred_fallthru
    _
  // Predicated region
  $region6: #{downsample_forward.9} parent=0 // pred_check
    _
  $region7: #{downsample_forward.9} parent=0 // pred_check_branch
    %10 = sbr.rel (0) target = $region9
  $region8: #{downsample_forward.9} parent=0 // pred_region
    _
  $region9: #{downsample_forward.9} parent=0 // pred_fallthru
    _
  %v11 = vld [vmem:[%s0] sm:$0xff]
  %v12 = vld [vmem:[%s0 + $0x8] sm:$0xff]
  %v13 = vld [vmem:[%s0 + $0x10] sm:$0xff]
  %v14 = vld [vmem:[%s0 + $0x18] sm:$0xff]
  %v15 = vld [vmem:[%s0 + $0x20] sm:$0xff]
  %v16 = vld [vmem:[%s0 + $0x28] sm:$0xff]
  %v17 = vld [vmem:[%s0 + $0x30] sm:$0xff]
  %v18 = vld [vmem:[%s0 + $0x38] sm:$0xff]
  %19 = vrot.lane.b32.xlu0 %v11, 127
  %v20 = vpop.permute.xlu0 %19
  %21 = vrot.lane.b32.xlu0 %v12, 127
  %v22 = vpop.permute.xlu0 %21
  %v23 = vlaneseq
  %v24 = vand.u32 %v23, 127
  %vm25 = vcmp.lt.s32.totalorder %v24, 127
  %v26 = vsel %vm25, %v20, %v22
  %v27 = vsel %vm25, %v22, %v20
  %28 = vrot.lane.b32.xlu0 %v15, 127
  %v29 = vpop.permute.xlu0 %28
  %30 = vrot.lane.b32.xlu0 %v16, 127
  %v31 = vpop.permute.xlu0 %30
  %v32 = vsel %vm25, %v29, %v31
  %v33 = vsel %vm25, %v31, %v29
  %34 = vrot.lane.b32.xlu0 %v11, 123
  %v35 = vpop.permute.xlu0 %34
  %36 = vrot.lane.b32.xlu0 %v12, 123
  %v37 = vpop.permute.xlu0 %36
  %vm38 = vcmp.lt.s32.totalorder %v24, 123
  %v39 = vsel %vm38, %v35, %v37
  %v40 = vsel %vm38, %v37, %v35
  %41 = vrot.lane.b32.xlu0 %v13, 123
  %v42 = vpop.permute.xlu0 %41
  %43 = vrot.lane.b32.xlu0 %v14, 123
  %v44 = vpop.permute.xlu0 %43
  %v45 = vsel %vm38, %v42, %v44
  %v46 = vsel %vm38, %v44, %v42
  %47 = vrot.lane.b32.xlu0 %v11, 122
  %v48 = vpop.permute.xlu0 %47
  %49 = vrot.lane.b32.xlu0 %v12, 122
  %v50 = vpop.permute.xlu0 %49
  %vm51 = vcmp.lt.s32.totalorder %v24, 122
  %v52 = vsel %vm51, %v48, %v50
  %v53 = vsel %vm51, %v50, %v48
  %v54 = vld [vmem:[%s1] sm:$0xff]
  %vm55 = vcmask 588800
  %v57 = vsel %vm55, %v54, 0
  %59 = vmatprep.subr.mxu0 %v12
  %60 = vmatpush1.msra.mxu0 %v11
  %61 = vmatprep.subr.mxu0 %v14
  %62 = vmatpush1.msra.mxu0 %v13
  %63 = vmatprep.subr.mxu0 %v27
  %64 = vmatpush1.msra.mxu0 %v26
  %65 = vmatprep.subr.mxu0 %v16
  %66 = vmatpush1.msra.mxu0 %v15
  %67 = vmatprep.subr.mxu0 %v18
  %68 = vmatpush1.msra.mxu0 %v17
  %69 = vmatprep.subr.mxu0 %v33
  %70 = vmatpush1.msra.mxu0 %v32
  %71 = vmatprep.subr.mxu0 %v40
  %72 = vmatpush1.msra.mxu0 %v39
  %73 = vmatprep.subr.mxu0 %v46
  %74 = vmatpush1.msra.mxu0 %v45
  %75 = vmatprep.subr.mxu0 %v53
  %76 = vmatpush1.msra.mxu0 %v52
  %77 = vmatprep.subr.mxu0 0.0
  %78 = vmatpush1.msra.mxu0 0.0
  %79 = vmatprep.subr.mxu0 0.0
  %80 = vmatpush1.msra.mxu0 0.0
  %81 = vmatprep.subr.mxu0 0.0
  %82 = vmatpush1.msra.mxu0 0.0
  %83 = vmatprep.subr.mxu0 0.0
  %84 = vmatpush1.msra.mxu0 0.0
  %85 = vmatprep.subr.mxu0 0.0
  %86 = vmatpush1.msra.mxu0 0.0
  %87 = vmatprep.subr.mxu0 0.0
  %88 = vmatpush1.msra.mxu0 0.0
  %89 = vmatprep.subr.mxu0 0.0
  %90 = vmatpush1.msra.mxu0 0.0
  %91 = vmatprep.subr.mxu0 0.0
  %92 = vmatpush1.msra.mxu0 0.0
  %93 = vmatprep.subr.mxu0 0.0
  %94 = vmatpush1.msra.mxu0 0.0
  %95 = vmatprep.subr.mxu0 0.0
  %96 = vmatpush1.msra.mxu0 0.0
  %97 = vmatprep.subr.mxu0 0.0
  %98 = vmatpush1.msra.mxu0 0.0
  %99 = vmatprep.subr.mxu0 0.0
  %100 = vmatpush1.msra.mxu0 0.0
  %101 = vmatprep.subr.mxu0 0.0
  %102 = vmatpush1.msra.mxu0 0.0
  %103 = vmatprep.subr.mxu0 0.0
  %104 = vmatpush1.msra.mxu0 0.0
  %105 = vmatprep.subr.mxu0 0.0
  %106 = vmatpush1.msra.mxu0 0.0
  %107 = vmatprep.subr.mxu0 0.0
  %108 = vmatpush1.msra.mxu0 0.0
  %109 = vmatprep.subr.mxu0 0.0
  %110 = vmatpush1.msra.mxu0 0.0
  %111 = vmatprep.subr.mxu0 0.0
  %112 = vmatpush1.msra.mxu0 0.0
  %113 = vmatprep.subr.mxu0 0.0
  %114 = vmatpush1.msra.mxu0 0.0
  %115 = vmatprep.subr.mxu0 0.0
  %116 = vmatpush1.msra.mxu0 0.0
  %117 = vmatprep.subr.mxu0 0.0
  %118 = vmatpush1.msra.mxu0 0.0
  %119 = vmatprep.subr.mxu0 0.0
  %120 = vmatpush1.msra.mxu0 0.0
  %121 = vmatprep.subr.mxu0 0.0
  %122 = vmatpush1.msra.mxu0 0.0
  %123 = vmatprep.mubr.f32.mxu0 0.0
  %124 = vmatmul.mubr.f32.gmra.mrb[0].mxu0 %v57
  %v125 = vpop.f32.mrb[0].mxu0
  %v126 = vadd.f32 0.0, %v125
  %v127 = vpop.f32.mrb[0].mxu0
  %v128 = vadd.f32 0.0, %v127
  %129 = vdwg.mxu0
  %130 = vst [vmem:[%s2] sm:$0xff] %v126
  %131 = vst [vmem:[%s2 + $0x8] sm:$0xff] %v128
  // Predicated region
  $region10: #{downsample_forward.9} parent=0 // pred_check
    _
  $region11: #{downsample_forward.9} parent=0 // pred_check_branch
    %133 = sbr.rel (0) target = $region13
  $region12: #{downsample_forward.9} parent=0 // pred_region
    _
  $region13: #{downsample_forward.9} parent=0 // pred_fallthru
    _
  // Predicated region
  $region14: #{downsample_forward.9} parent=0 // pred_check
    _
  $region15: #{downsample_forward.9} parent=0 // pred_check_branch
    %135 = sbr.rel (0) target = $region17
  $region16: #{downsample_forward.9} parent=0 // pred_region
    _
  $region17: #{downsample_forward.9} parent=0 // pred_fallthru
    _

// kernel: downsample_forward.10
$region0: #{downsample_forward.10}
  #allocation0 [shape = 'u32[]', space=smem, size = 0x4, offset = 0x4, fixed_abs, tag = 'smem constant byte address 0x4 - core index']
  #allocation1 [shape = 'u32[144,128]{1,0:T(1,128)}', space=vmem, size = 0x12000, scoped, tag = 'internal scratch']
  #allocation3 [shape = 's32[]', space=sflag, size = 0x4, offset = 0, fixed_abs, tag = 'sflag constant byte address 0x0 - dummy sync flag']
  %s0 = inlined_call_operand.vmem [shape: f32[8,256], index: 0, kind: input, shape index: {}]
  %s1 = inlined_call_operand.vmem [shape: f32[1,256], index: 1, kind: input, shape index: {}]
  %s2 = inlined_call_operand.vmem [shape: f32[3,6,8,8], index: 2, kind: input, shape index: {}]
  %s3 = inlined_call_operand.vmem [shape: f32[3,8,4], index: 3, kind: input, shape index: {}]
  %s4 = inlined_call_operand.vmem [shape: f32[8,256], index: 4, kind: output, shape index: {}]
  %s5 = sld [smem:[#allocation0]]
  $region84: #{downsample_forward.10} parent=0
    _
  %s7 = ssub.s32 1, %s5
  %s8 = scalar_select 0, %s7, %s5
  loop: start=0, step=1, limit=5
  $region2: #{downsample_forward.10} parent=0 // loop_pre_header
    _
  $region3: #{downsample_forward.10} parent=0 // loop_header
    %s10 = sphi 0, %s14
    %p11 = scmp.ge.s32.totalorder %s10, 5
    %s18 = sphi 0, %s18
    %s20 = sphi 0, %s18
    %s21 = sphi 0, %s20
    %s35 = sphi 0, %s21
    %s41 = sphi 0, %s43
    %s44 = sphi 0, %s41
    %s45 = sphi 0, %s44
    %s61 = sphi 0, %s45
    %s67 = sphi 0, %s69
    %s70 = sphi 0, %s67
    %s71 = sphi 0, %s70
    %s87 = sphi 0, %s71
    %s91 = sphi 0, %s91
    %s93 = sphi 0, %s91
    %s94 = sphi 0, %s93
    %s108 = sphi 0, %s94
  $region4: #{downsample_forward.10} parent=0 // loop_header_branch
    %13 = sbr.rel (%p11) target = $region8
  $region5: #{downsample_forward.10} parent=0 // loop_body
    %s15 = ssub.s32 %s10, 1
    %s16 = ssub.s32 %s10, 2
    %s17 = sadd.s32 %s10, 1
    %s19 = sadd.s32 %s18, 1
    %p22 = scmp.eq.s32.totalorder %s10, 2
    %p23 = scmp.ne.s32.totalorder %s18, %s20
    %p24 = scmp.eq.s32.totalorder %s10, 0
    %p25 = por %p23, %p24
    %p26 = scmp.ne.s32.totalorder %s18, %s20
    %p27 = scmp.eq.s32.totalorder %s15, 2
    %p28 = por %p26, %p27
    %p29 = scmp.ne.s32.totalorder %s20, %s21
    %p30 = scmp.eq.s32.totalorder %s15, 0
    %p31 = por %p29, %p30
    %p32 = scmp.ne.s32.totalorder %s20, %s21
    %p33 = scmp.eq.s32.totalorder %s16, 2
    %p34 = por %p32, %p33
    %p36 = scmp.ne.s32.totalorder %s21, %s35
    %p37 = scmp.eq.s32.totalorder %s16, 0
    %p38 = por %p36, %p37
    %s39 = ssub.s32 %s10, %s17
    %p40 = scmp.eq.s32.totalorder %s39, 0
    %s42 = sadd.s32 %s41, 1
    %s43 = scalar_select %p40, %s41, %s42
    %p46 = pneg %p40
    %p47 = scmp.eq.s32.totalorder %s10, 2
    %p48 = por %p46, %p47
    %p49 = scmp.ne.s32.totalorder %s41, %s44
    %p50 = scmp.eq.s32.totalorder %s10, 0
    %p51 = por %p49, %p50
    %p52 = scmp.ne.s32.totalorder %s41, %s44
    %p53 = scmp.eq.s32.totalorder %s15, 2
    %p54 = por %p52, %p53
    %p55 = scmp.ne.s32.totalorder %s44, %s45
    %p56 = scmp.eq.s32.totalorder %s15, 0
    %p57 = por %p55, %p56
    %p58 = scmp.ne.s32.totalorder %s44, %s45
    %p59 = scmp.eq.s32.totalorder %s16, 2
    %p60 = por %p58, %p59
    %p62 = scmp.ne.s32.totalorder %s45, %s61
    %p63 = scmp.eq.s32.totalorder %s16, 0
    %p64 = por %p62, %p63
    %s65 = ssub.s32 %s10, %s17
    %p66 = scmp.eq.s32.totalorder %s65, 0
    %s68 = sadd.s32 %s67, 1
    %s69 = scalar_select %p66, %s67, %s68
    %p72 = pneg %p66
    %p73 = scmp.eq.s32.totalorder %s10, 2
    %p74 = por %p72, %p73
    %p75 = scmp.ne.s32.totalorder %s67, %s70
    %p76 = scmp.eq.s32.totalorder %s10, 0
    %p77 = por %p75, %p76
    %p78 = scmp.ne.s32.totalorder %s67, %s70
    %p79 = scmp.eq.s32.totalorder %s15, 2
    %p80 = por %p78, %p79
    %p81 = scmp.ne.s32.totalorder %s70, %s71
    %p82 = scmp.eq.s32.totalorder %s15, 0
    %p83 = por %p81, %p82
    %p84 = scmp.ne.s32.totalorder %s70, %s71
    %p85 = scmp.eq.s32.totalorder %s16, 2
    %p86 = por %p84, %p85
    %p88 = scmp.ne.s32.totalorder %s71, %s87
    %p89 = scmp.eq.s32.totalorder %s16, 0
    %p90 = por %p88, %p89
    %s92 = sadd.s32 %s91, 1
    %p95 = scmp.eq.s32.totalorder %s10, 2
    %p96 = scmp.ne.s32.totalorder %s91, %s93
    %p97 = scmp.eq.s32.totalorder %s10, 0
    %p98 = por %p96, %p97
    %p99 = scmp.ne.s32.totalorder %s91, %s93
    %p100 = scmp.eq.s32.totalorder %s15, 2
    %p101 = por %p99, %p100
    %p102 = scmp.ne.s32.totalorder %s93, %s94
    %p103 = scmp.eq.s32.totalorder %s15, 0
    %p104 = por %p102, %p103
    %p105 = scmp.ne.s32.totalorder %s93, %s94
    %p106 = scmp.eq.s32.totalorder %s16, 2
    %p107 = por %p105, %p106
    %p109 = scmp.ne.s32.totalorder %s94, %s108
    %p110 = scmp.eq.s32.totalorder %s16, 0
    %p111 = por %p109, %p110
    %p112 = scmp.le.s32.totalorder 1, %s10
    %p113 = scmp.lt.s32.totalorder %s10, 4
    %p114 = pnand %p112, %p113
    %p115 = pneg %p114
    // Predicated region
    $region9: #{downsample_forward.10} parent=5 // pred_check
      _
    $region10: #{downsample_forward.10} parent=5 // pred_check_branch
      %117 = sbr.rel (%p114) target = $region12
    $region11: #{downsample_forward.10} parent=5 // pred_region
      %s118 = ssub.s32 %s10, 1
      // Predicated region
      $region13: #{downsample_forward.10} parent=11 // pred_check
        %p119 = pneg %p31
      $region14: #{downsample_forward.10} parent=11 // pred_check_branch
        %121 = sbr.rel (%p119) target = $region16
      $region15: #{downsample_forward.10} parent=11 // pred_region
        _
      $region16: #{downsample_forward.10} parent=11 // pred_fallthru
        _
    $region12: #{downsample_forward.10} parent=5 // pred_fallthru
      _
    %p122 = scmp.lt.s32.totalorder %s10, 3
    // Predicated region
    $region17: #{downsample_forward.10} parent=5 // pred_check
      %p123 = pneg %p122
    $region18: #{downsample_forward.10} parent=5 // pred_check_branch
      %125 = sbr.rel (%p123) target = $region20
    $region19: #{downsample_forward.10} parent=5 // pred_region
      // Predicated region
      $region21: #{downsample_forward.10} parent=19 // pred_check
        %p126 = pneg %p51
      $region22: #{downsample_forward.10} parent=19 // pred_check_branch
        %128 = sbr.rel (%p126) target = $region24
      $region23: #{downsample_forward.10} parent=19 // pred_region
        %p129 = scmp.lt.s32.totalorder %s10, 2
        %s130 = scalar_select %p129, %s10, 2
        %s131 = smul.addr %s130, 6
        %s132 = smul.addr %s131, 8
        %s133 = scalar_lea.vmem %s2, %s132
      $region24: #{downsample_forward.10} parent=19 // pred_fallthru
        _
      // Predicated region
      $region25: #{downsample_forward.10} parent=19 // pred_check
        %p134 = pneg %p77
      $region26: #{downsample_forward.10} parent=19 // pred_check_branch
        %136 = sbr.rel (%p134) target = $region28
      $region27: #{downsample_forward.10} parent=19 // pred_region
        %p137 = scmp.lt.s32.totalorder %s10, 2
        %s138 = scalar_select %p137, %s10, 2
        %s139 = smul.addr %s138, 8
        %s140 = scalar_lea.vmem %s3, %s139
      $region28: #{downsample_forward.10} parent=19 // pred_fallthru
        _
    $region20: #{downsample_forward.10} parent=5 // pred_fallthru
      _
    %p141 = scmp.le.s32.totalorder 1, %s10
    %p142 = scmp.lt.s32.totalorder %s10, 4
    %p143 = pnand %p141, %p142
    %p144 = pneg %p143
    // Predicated region
    $region29: #{downsample_forward.10} parent=5 // pred_check
      _
    $region30: #{downsample_forward.10} parent=5 // pred_check_branch
      %146 = sbr.rel (%p143) target = $region32
    $region31: #{downsample_forward.10} parent=5 // pred_region
      %s147 = ssub.s32 %s10, 1
      %p148 = pneg %p31
      %p149 = pneg %p28
      %p150 = scmp.lt.s32.totalorder %s15, 2
      %s151 = scalar_select %p150, %s15, 2
      %s152 = smul.addr %s151, 6
      %s153 = smul.addr %s152, 8
      %s154 = scalar_lea.vmem %s2, %s153
      %p155 = pneg %p57
      %p156 = pneg %p54
      %p157 = scmp.lt.s32.totalorder %s15, 2
      %s158 = scalar_select %p157, %s15, 2
      %s159 = smul.addr %s158, 8
      %s160 = scalar_lea.vmem %s3, %s159
      %p161 = pneg %p83
      %p162 = pneg %p80
      %p163 = pneg %p104
      %p164 = pneg %p101
      %p165 = scmp.lt.s32.totalorder %s15, 2
      %s166 = scalar_select %p165, %s15, 2
      %s167 = smul.addr %s166, 6
      %s168 = smul.addr %s167, 8
      %s169 = scalar_lea.vmem %s2, %s168
      %p170 = scmp.lt.s32.totalorder %s15, 2
      %s171 = scalar_select %p170, %s15, 2
      %s172 = smul.addr %s171, 8
      %s173 = scalar_lea.vmem %s3, %s172
      %p174 = scmp.eq.s32.totalorder %s15, 0
      // Predicated region
      $region33: #{downsample_forward.10} parent=31 // pred_check
        %p175 = pneg %p174
      $region34: #{downsample_forward.10} parent=31 // pred_check_branch
        %177 = sbr.rel (%p175) target = $region36
      $region35: #{downsample_forward.10} parent=31 // pred_region
        $region37: #{downsample_forward.10} parent=35
          #allocation2 [shape = 's32[1]{0}', space=sflag, size = 0x4, scoped, tag = 'scoped memory for downsample_forward.10']
          %p179 = scmp.lt.u32.totalorder 16, 8
          %p180 = pneg %p179
          // Predicated region
          $region38: #{downsample_forward.10} parent=37 // pred_check
            _
          $region39: #{downsample_forward.10} parent=37 // pred_check_branch
            %182 = sbr.rel (%p179) target = $region41
          $region40: #{downsample_forward.10} parent=37 // pred_region
            %s197 = sand.u32 16, 7
            %p198 = scmp.eq.s32.totalorder %s197, 0
            // Predicated region
            $region53: #{downsample_forward.10} parent=40 // pred_check
              %p199 = pneg %p198
            $region54: #{downsample_forward.10} parent=40 // pred_check_branch
              %201 = sbr.rel (%p199) target = $region56
            $region55: #{downsample_forward.10} parent=40 // pred_region
              loop: start=0, step=1, limit=1
              $region57: #{downsample_forward.10} parent=55 // loop_pre_header
                _
              $region58: #{downsample_forward.10} parent=55 // loop_header
                %s203 = sphi 0, %s207
                %p204 = scmp.ge.s32.totalorder %s203, 1
                %s208 = sphi %s0, %s0
                %s209 = sphi %s4, %s4
              $region59: #{downsample_forward.10} parent=55 // loop_header_branch
                %206 = sbr.rel (%p204) target = $region63
              $region60: #{downsample_forward.10} parent=55 // loop_body
                %v210 = vld [vmem:[%s208] sm:$0xff]
                %211 = vst [vmem:[%s209] sm:$0xff] %v210
                %v212 = vld [vmem:[%s208 + $0x8] sm:$0xff]
                %213 = vst [vmem:[%s209 + $0x8] sm:$0xff] %v212
              $region61: #{downsample_forward.10} parent=55 // loop_footer
                %s207 = sadd.s32 1, %s203
              $region62: #{downsample_forward.10} parent=55 // loop_footer_branch
                %202 = sbr.rel target = $region58
              $region63: #{downsample_forward.10} parent=55 // loop_exit
                _
            $region56: #{downsample_forward.10} parent=40 // pred_fallthru
              _
            %p214 = pneg %p198
            // Predicated region
            $region64: #{downsample_forward.10} parent=40 // pred_check
              _
            $region65: #{downsample_forward.10} parent=40 // pred_check_branch
              %216 = sbr.rel (%p198) target = $region67
            $region66: #{downsample_forward.10} parent=40 // pred_region
              %s217 = sand.u32 16, 7
            $region67: #{downsample_forward.10} parent=40 // pred_fallthru
              _
          $region41: #{downsample_forward.10} parent=37 // pred_fallthru
            _
          // Predicated region
          $region42: #{downsample_forward.10} parent=37 // pred_check
            %p183 = pneg %p179
          $region43: #{downsample_forward.10} parent=37 // pred_check_branch
            %185 = sbr.rel (%p183) target = $region45
          $region44: #{downsample_forward.10} parent=37 // pred_region
            %s186 = sshllo.u32 0, 16
            loop: start=0, step=1, limit=1
            $region46: #{downsample_forward.10} parent=44 // loop_pre_header
              _
            $region47: #{downsample_forward.10} parent=44 // loop_header
              %s188 = sphi 0, %s192
              %p189 = scmp.ge.s32.totalorder %s188, 1
              %s193 = sphi %s0, %s0
              %s194 = sphi %s4, %s4
            $region48: #{downsample_forward.10} parent=44 // loop_header_branch
              %191 = sbr.rel (%p189) target = $region52
            $region49: #{downsample_forward.10} parent=44 // loop_body
              %v195 = vld [vmem:[%s193] sm:%s186]
              %196 = vst [vmem:[%s194] sm:%s186] %v195
            $region50: #{downsample_forward.10} parent=44 // loop_footer
              %s192 = sadd.s32 1, %s188
            $region51: #{downsample_forward.10} parent=44 // loop_footer_branch
              %187 = sbr.rel target = $region47
            $region52: #{downsample_forward.10} parent=44 // loop_exit
              _
          $region45: #{downsample_forward.10} parent=37 // pred_fallthru
            _
          // Predicated region
          $region68: #{downsample_forward.10} parent=37 // pred_check
            _
          $region69: #{downsample_forward.10} parent=37 // pred_check_branch
            %220 = sbr.rel (0) target = $region71
          $region70: #{downsample_forward.10} parent=37 // pred_region
            %221 = vsyncadd [#allocation2], 256
          $region71: #{downsample_forward.10} parent=37 // pred_fallthru
            _
          %s222 = smul.u32 8, 1
          %s223 = smul.u32 %s222, 2
          %s224 = sshll.u32 %s223, 4
          %225 = dma.done [#allocation2], %s224
      $region36: #{downsample_forward.10} parent=31 // pred_fallthru
        _
      %v226 = vld [vmem:[%s4] sm:$0xff]
      %v227 = vld [vmem:[%s4 + $0x8] sm:$0xff]
      %v228 = vld [vmem:[%s1] sm:$0x3]
      %v229 = vld [vmem:[%s173] sm:$0xff]
      %230 = vrot.lane.b32.xlu0 %v226, 1
      %v231 = vpop.permute.xlu0 %230
      %232 = vrot.lane.b32.xlu0 %v227, 1
      %v233 = vpop.permute.xlu0 %232
      %v234 = vlaneseq
      %v235 = vand.u32 %v234, 127
      %vm236 = vcmp.lt.s32.totalorder %v235, 1
      %v237 = vsel %vm236, %v231, %v233
      %v238 = vsel %vm236, %v233, %v231
      %239 = vrot.lane.b32.xlu0 %v226, 127
      %v240 = vpop.permute.xlu0 %239
      %241 = vrot.lane.b32.xlu0 %v227, 127
      %v242 = vpop.permute.xlu0 %241
      %vm243 = vcmp.lt.s32.totalorder %v235, 127
      %v244 = vsel %vm243, %v240, %v242
      %v245 = vsel %vm243, %v242, %v240
      %v246 = vld [vmem:[%s169] sm:$0xff]
      %s247 = scalar_lea.vmem %s169, 8
      %v248 = vld [vmem:[%s247] sm:$0xff]
      %vm249 = vcmask 64512
      %v251 = vsel %vm249, %v248, 0
      %253 = vmatprep.subr.mxu0 %v227
      %254 = vmatpush1.msra.mxu0 %v226
      %255 = vmatprep.subr.mxu0 0.0
      %256 = vmatpush1.msra.mxu0 0.0
      %257 = vmatprep.subr.mxu0 0.0
      %258 = vmatpush1.msra.mxu0 0.0
      %259 = vmatprep.subr.mxu0 0.0
      %260 = vmatpush1.msra.mxu0 0.0
      %261 = vmatprep.subr.mxu0 0.0
      %262 = vmatpush1.msra.mxu0 0.0
      %263 = vmatprep.subr.mxu0 0.0
      %264 = vmatpush1.msra.mxu0 0.0
      %265 = vmatprep.subr.mxu0 0.0
      %266 = vmatpush1.msra.mxu0 0.0
      %267 = vmatprep.subr.mxu0 0.0
      %268 = vmatpush1.msra.mxu0 0.0
      %269 = vmatprep.subr.mxu0 0.0
      %270 = vmatpush1.msra.mxu0 0.0
      %271 = vmatprep.subr.mxu0 0.0
      %272 = vmatpush1.msra.mxu0 0.0
      %273 = vmatprep.subr.mxu0 0.0
      %274 = vmatpush1.msra.mxu0 0.0
      %275 = vmatprep.subr.mxu0 0.0
      %276 = vmatpush1.msra.mxu0 0.0
      %277 = vmatprep.subr.mxu0 0.0
      %278 = vmatpush1.msra.mxu0 0.0
      %279 = vmatprep.subr.mxu0 0.0
      %280 = vmatpush1.msra.mxu0 0.0
      %281 = vmatprep.subr.mxu0 0.0
      %282 = vmatpush1.msra.mxu0 0.0
      %283 = vmatprep.subr.mxu0 0.0
      %284 = vmatpush1.msra.mxu0 0.0
      %285 = vmatprep.subr.mxu0 0.0
      %286 = vmatpush1.msra.mxu0 0.0
      %287 = vmatprep.subr.mxu0 0.0
      %288 = vmatpush1.msra.mxu0 0.0
      %289 = vmatprep.subr.mxu0 0.0
      %290 = vmatpush1.msra.mxu0 0.0
      %291 = vmatprep.subr.mxu0 0.0
      %292 = vmatpush1.msra.mxu0 0.0
      %293 = vmatprep.subr.mxu0 0.0
      %294 = vmatpush1.msra.mxu0 0.0
      %295 = vmatprep.subr.mxu0 0.0
      %296 = vmatpush1.msra.mxu0 0.0
      %297 = vmatprep.subr.mxu0 0.0
      %298 = vmatpush1.msra.mxu0 0.0
      %299 = vmatprep.subr.mxu0 0.0
      %300 = vmatpush1.msra.mxu0 0.0
      %301 = vmatprep.subr.mxu0 0.0
      %302 = vmatpush1.msra.mxu0 0.0
      %303 = vmatprep.subr.mxu0 0.0
      %304 = vmatpush1.msra.mxu0 0.0
      %305 = vmatprep.subr.mxu0 0.0
      %306 = vmatpush1.msra.mxu0 0.0
      %307 = vmatprep.subr.mxu0 0.0
      %308 = vmatpush1.msra.mxu0 0.0
      %309 = vmatprep.subr.mxu0 0.0
      %310 = vmatpush1.msra.mxu0 0.0
      %311 = vmatprep.subr.mxu0 0.0
      %312 = vmatpush1.msra.mxu0 0.0
      %313 = vmatprep.subr.mxu0 0.0
      %314 = vmatpush1.msra.mxu0 0.0
      %315 = vmatprep.subr.mxu0 0.0
      %316 = vmatpush1.msra.mxu0 0.0
      %317 = vmatprep.mubr.f32.mxu0 0.0
      %318 = vmatmul.mubr.f32.gmra.mrb[0].mxu0 %v251
      %v319 = vpop.f32.mrb[0].mxu0
      %v320 = vadd.f32 0.0, %v319
      %v321 = vpop.f32.mrb[0].mxu0
      %v322 = vadd.f32 0.0, %v321
      %323 = vdwg.mxu0
      %v325 = vsel %vm249, %v246, 0
      %327 = vmatprep.subr.mxu0 %v237
      %328 = vmatpush1.msra.mxu0 %v238
      %329 = vmatprep.subr.mxu0 0.0
      %330 = vmatpush1.msra.mxu0 0.0
      %331 = vmatprep.subr.mxu0 0.0
      %332 = vmatpush1.msra.mxu0 0.0
      %333 = vmatprep.subr.mxu0 0.0
      %334 = vmatpush1.msra.mxu0 0.0
      %335 = vmatprep.subr.mxu0 0.0
      %336 = vmatpush1.msra.mxu0 0.0
      %337 = vmatprep.subr.mxu0 0.0
      %338 = vmatpush1.msra.mxu0 0.0
      %339 = vmatprep.subr.mxu0 0.0
      %340 = vmatpush1.msra.mxu0 0.0
      %341 = vmatprep.subr.mxu0 0.0
      %342 = vmatpush1.msra.mxu0 0.0
      %343 = vmatprep.subr.mxu0 0.0
      %344 = vmatpush1.msra.mxu0 0.0
      %345 = vmatprep.subr.mxu0 0.0
      %346 = vmatpush1.msra.mxu0 0.0
      %347 = vmatprep.subr.mxu0 0.0
      %348 = vmatpush1.msra.mxu0 0.0
      %349 = vmatprep.subr.mxu0 0.0
      %350 = vmatpush1.msra.mxu0 0.0
      %351 = vmatprep.subr.mxu0 0.0
      %352 = vmatpush1.msra.mxu0 0.0
      %353 = vmatprep.subr.mxu0 0.0
      %354 = vmatpush1.msra.mxu0 0.0
      %355 = vmatprep.subr.mxu0 0.0
      %356 = vmatpush1.msra.mxu0 0.0
      %357 = vmatprep.subr.mxu0 0.0
      %358 = vmatpush1.msra.mxu0 0.0
      %359 = vmatprep.subr.mxu0 0.0
      %360 = vmatpush1.msra.mxu0 0.0
      %361 = vmatprep.subr.mxu0 0.0
      %362 = vmatpush1.msra.mxu0 0.0
      %363 = vmatprep.subr.mxu0 0.0
      %364 = vmatpush1.msra.mxu0 0.0
      %365 = vmatprep.subr.mxu0 0.0
      %366 = vmatpush1.msra.mxu0 0.0
      %367 = vmatprep.subr.mxu0 0.0
      %368 = vmatpush1.msra.mxu0 0.0
      %369 = vmatprep.subr.mxu0 0.0
      %370 = vmatpush1.msra.mxu0 0.0
      %371 = vmatprep.subr.mxu0 0.0
      %372 = vmatpush1.msra.mxu0 0.0
      %373 = vmatprep.subr.mxu0 0.0
      %374 = vmatpush1.msra.mxu0 0.0
      %375 = vmatprep.subr.mxu0 0.0
      %376 = vmatpush1.msra.mxu0 0.0
      %377 = vmatprep.subr.mxu0 0.0
      %378 = vmatpush1.msra.mxu0 0.0
      %379 = vmatprep.subr.mxu0 0.0
      %380 = vmatpush1.msra.mxu0 0.0
      %381 = vmatprep.subr.mxu0 0.0
      %382 = vmatpush1.msra.mxu0 0.0
      %383 = vmatprep.subr.mxu0 0.0
      %384 = vmatpush1.msra.mxu0 0.0
      %385 = vmatprep.subr.mxu0 0.0
      %386 = vmatpush1.msra.mxu0 0.0
      %387 = vmatprep.subr.mxu0 0.0
      %388 = vmatpush1.msra.mxu0 0.0
      %389 = vmatprep.subr.mxu0 0.0
      %390 = vmatpush1.msra.mxu0 0.0
      %391 = vmatprep.mubr.f32.mxu0 0.0
      %392 = vmatmul.mubr.f32.gmra.mrb[0].mxu0 %v325
      %v393 = vpop.f32.mrb[0].mxu0
      %v394 = vadd.f32 %v320, %v393
      %v395 = vpop.f32.mrb[0].mxu0
      %v396 = vadd.f32 %v322, %v395
      %397 = vdwg.mxu0
      %s398 = scalar_lea.vmem %s169, 16
      %v399 = vld [vmem:[%s398] sm:$0xff]
      %v401 = vsel %vm249, %v399, 0
      %403 = vmatprep.subr.mxu0 %v245
      %404 = vmatpush1.msra.mxu0 %v244
      %405 = vmatprep.subr.mxu0 0.0
      %406 = vmatpush1.msra.mxu0 0.0
      %407 = vmatprep.subr.mxu0 0.0
      %408 = vmatpush1.msra.mxu0 0.0
      %409 = vmatprep.subr.mxu0 0.0
      %410 = vmatpush1.msra.mxu0 0.0
      %411 = vmatprep.subr.mxu0 0.0
      %412 = vmatpush1.msra.mxu0 0.0
      %413 = vmatprep.subr.mxu0 0.0
      %414 = vmatpush1.msra.mxu0 0.0
      %415 = vmatprep.subr.mxu0 0.0
      %416 = vmatpush1.msra.mxu0 0.0
      %417 = vmatprep.subr.mxu0 0.0
      %418 = vmatpush1.msra.mxu0 0.0
      %419 = vmatprep.subr.mxu0 0.0
      %420 = vmatpush1.msra.mxu0 0.0
      %421 = vmatprep.subr.mxu0 0.0
      %422 = vmatpush1.msra.mxu0 0.0
      %423 = vmatprep.subr.mxu0 0.0
      %424 = vmatpush1.msra.mxu0 0.0
      %425 = vmatprep.subr.mxu0 0.0
      %426 = vmatpush1.msra.mxu0 0.0
      %427 = vmatprep.subr.mxu0 0.0
      %428 = vmatpush1.msra.mxu0 0.0
      %429 = vmatprep.subr.mxu0 0.0
      %430 = vmatpush1.msra.mxu0 0.0
      %431 = vmatprep.subr.mxu0 0.0
      %432 = vmatpush1.msra.mxu0 0.0
      %433 = vmatprep.subr.mxu0 0.0
      %434 = vmatpush1.msra.mxu0 0.0
      %435 = vmatprep.subr.mxu0 0.0
      %436 = vmatpush1.msra.mxu0 0.0
      %437 = vmatprep.subr.mxu0 0.0
      %438 = vmatpush1.msra.mxu0 0.0
      %439 = vmatprep.subr.mxu0 0.0
      %440 = vmatpush1.msra.mxu0 0.0
      %441 = vmatprep.subr.mxu0 0.0
      %442 = vmatpush1.msra.mxu0 0.0
      %443 = vmatprep.subr.mxu0 0.0
      %444 = vmatpush1.msra.mxu0 0.0
      %445 = vmatprep.subr.mxu0 0.0
      %446 = vmatpush1.msra.mxu0 0.0
      %447 = vmatprep.subr.mxu0 0.0
      %448 = vmatpush1.msra.mxu0 0.0
      %449 = vmatprep.subr.mxu0 0.0
      %450 = vmatpush1.msra.mxu0 0.0
      %451 = vmatprep.subr.mxu0 0.0
      %452 = vmatpush1.msra.mxu0 0.0
      %453 = vmatprep.subr.mxu0 0.0
      %454 = vmatpush1.msra.mxu0 0.0
      %455 = vmatprep.subr.mxu0 0.0
      %456 = vmatpush1.msra.mxu0 0.0
      %457 = vmatprep.subr.mxu0 0.0
      %458 = vmatpush1.msra.mxu0 0.0
      %459 = vmatprep.subr.mxu0 0.0
      %460 = vmatpush1.msra.mxu0 0.0
      %461 = vmatprep.subr.mxu0 0.0
      %462 = vmatpush1.msra.mxu0 0.0
      %463 = vmatprep.subr.mxu0 0.0
      %464 = vmatpush1.msra.mxu0 0.0
      %465 = vmatprep.subr.mxu0 0.0
      %466 = vmatpush1.msra.mxu0 0.0
      %467 = vmatprep.mubr.f32.mxu0 0.0
      %468 = vmatmul.mubr.f32.gmra.mrb[0].mxu0 %v401
      %v469 = vpop.f32.mrb[0].mxu0
      %v470 = vadd.f32 0.0, %v469
      %v471 = vpop.f32.mrb[0].mxu0
      %v472 = vadd.f32 0.0, %v471
      %473 = vdwg.mxu0
      %v474 = vadd.f32 %v394, %v470
      %v475 = vadd.f32 %v396, %v472
      %v477 = vlaneseq
      %v478 = vshrl.u32 %v477, 7
      %v479 = vsub.s32 0, %v478
      %v480 = vrot.slane %v228, %v479
      %v481 = vlaneseq
      %v482 = vshrl.u32 %v481, 7
      %v483 = vsub.s32 1, %v482
      %v484 = vrot.slane %v228, %v483
      %v487 = vmul.f32 %v474, %v480
      %v488 = vmul.f32 %v475, %v484
      %v489 = vadd.f32 %v487, %v488
      %490 = vadd.xlane.f32.xlu0 %v489
      %v491 = vpop.xlane.xlu0 %490
      %v492 = vmul.f32 %v487, %v487
      %v493 = vmul.f32 %v488, %v488
      %v494 = vadd.f32 %v492, %v493
      %495 = vadd.xlane.f32.xlu0 %v494
      %v496 = vpop.xlane.xlu0 %495
      %v497 = vmul.f32 %v491, 0.03125
      %v498 = vmul.f32 %v496, 0.03125
      %v499 = vmul.f32 %v497, %v497
      %v500 = vsub.f32 %v498, %v499
      %v501 = vmax.f32 %v500, 0.0
      %v502 = vsub.f32 %v474, %v497
      %v503 = vsub.f32 %v475, %v497
      %v504 = vadd.f32 %v501, 1e-05
      %v505 = vrsqrt.pop %v504
      %v506 = vmul.f32 %v502, %v505
      %v507 = vmul.f32 %v503, %v505
      %509 = vset.pattern.permute.xlu0 0
      %510 = vperm.xlu0 %509, %v229
      %v511 = vpop.permute.xlu0 %510
      %v513 = vmul.f32 %v506, %v511
      %v514 = vmul.f32 %v507, %v511
      %515 = vset.pattern.permute.xlu0 1
      %516 = vperm.xlu0 %515, %v229
      %v517 = vpop.permute.xlu0 %516
      %v519 = vadd.f32 %v513, %v517
      %v520 = vadd.f32 %v514, %v517
      %v521 = vmax.f32 %v519, 0.0
      %v522 = vmax.f32 %v520, 0.0
      %v523 = vmul.f32 %v521, %v480
      %v524 = vmul.f32 %v522, %v484
      %525 = vrot.lane.b32.xlu0 %v523, 1
      %v526 = vpop.permute.xlu0 %525
      %527 = vrot.lane.b32.xlu0 %v524, 1
      %v528 = vpop.permute.xlu0 %527
      %v529 = vsel %vm236, %v526, %v528
      %v530 = vsel %vm236, %v528, %v526
      %531 = vrot.lane.b32.xlu0 %v523, 127
      %v532 = vpop.permute.xlu0 %531
      %533 = vrot.lane.b32.xlu0 %v524, 127
      %v534 = vpop.permute.xlu0 %533
      %v535 = vsel %vm243, %v532, %v534
      %v536 = vsel %vm243, %v534, %v532
      %s537 = scalar_lea.vmem %s169, 24
      %v538 = vld [vmem:[%s537] sm:$0xff]
      %s539 = scalar_lea.vmem %s169, 32
      %v540 = vld [vmem:[%s539] sm:$0xff]
      %v542 = vsel %vm249, %v540, 0
      %544 = vmatprep.subr.mxu0 %v524
      %545 = vmatpush1.msra.mxu0 %v523
      %546 = vmatprep.subr.mxu0 0.0
      %547 = vmatpush1.msra.mxu0 0.0
      %548 = vmatprep.subr.mxu0 0.0
      %549 = vmatpush1.msra.mxu0 0.0
      %550 = vmatprep.subr.mxu0 0.0
      %551 = vmatpush1.msra.mxu0 0.0
      %552 = vmatprep.subr.mxu0 0.0
      %553 = vmatpush1.msra.mxu0 0.0
      %554 = vmatprep.subr.mxu0 0.0
      %555 = vmatpush1.msra.mxu0 0.0
      %556 = vmatprep.subr.mxu0 0.0
      %557 = vmatpush1.msra.mxu0 0.0
      %558 = vmatprep.subr.mxu0 0.0
      %559 = vmatpush1.msra.mxu0 0.0
      %560 = vmatprep.subr.mxu0 0.0
      %561 = vmatpush1.msra.mxu0 0.0
      %562 = vmatprep.subr.mxu0 0.0
      %563 = vmatpush1.msra.mxu0 0.0
      %564 = vmatprep.subr.mxu0 0.0
      %565 = vmatpush1.msra.mxu0 0.0
      %566 = vmatprep.subr.mxu0 0.0
      %567 = vmatpush1.msra.mxu0 0.0
      %568 = vmatprep.subr.mxu0 0.0
      %569 = vmatpush1.msra.mxu0 0.0
      %570 = vmatprep.subr.mxu0 0.0
      %571 = vmatpush1.msra.mxu0 0.0
      %572 = vmatprep.subr.mxu0 0.0
      %573 = vmatpush1.msra.mxu0 0.0
      %574 = vmatprep.subr.mxu0 0.0
      %575 = vmatpush1.msra.mxu0 0.0
      %576 = vmatprep.subr.mxu0 0.0
      %577 = vmatpush1.msra.mxu0 0.0
      %578 = vmatprep.subr.mxu0 0.0
      %579 = vmatpush1.msra.mxu0 0.0
      %580 = vmatprep.subr.mxu0 0.0
      %581 = vmatpush1.msra.mxu0 0.0
      %582 = vmatprep.subr.mxu0 0.0
      %583 = vmatpush1.msra.mxu0 0.0
      %584 = vmatprep.subr.mxu0 0.0
      %585 = vmatpush1.msra.mxu0 0.0
      %586 = vmatprep.subr.mxu0 0.0
      %587 = vmatpush1.msra.mxu0 0.0
      %588 = vmatprep.subr.mxu0 0.0
      %589 = vmatpush1.msra.mxu0 0.0
      %590 = vmatprep.subr.mxu0 0.0
      %591 = vmatpush1.msra.mxu0 0.0
      %592 = vmatprep.subr.mxu0 0.0
      %593 = vmatpush1.msra.mxu0 0.0
      %594 = vmatprep.subr.mxu0 0.0
      %595 = vmatpush1.msra.mxu0 0.0
      %596 = vmatprep.subr.mxu0 0.0
      %597 = vmatpush1.msra.mxu0 0.0
      %598 = vmatprep.subr.mxu0 0.0
      %599 = vmatpush1.msra.mxu0 0.0
      %600 = vmatprep.subr.mxu0 0.0
      %601 = vmatpush1.msra.mxu0 0.0
      %602 = vmatprep.subr.mxu0 0.0
      %603 = vmatpush1.msra.mxu0 0.0
      %604 = vmatprep.subr.mxu0 0.0
      %605 = vmatpush1.msra.mxu0 0.0
      %606 = vmatprep.subr.mxu0 0.0
      %607 = vmatpush1.msra.mxu0 0.0
      %608 = vmatprep.mubr.f32.mxu0 0.0
      %609 = vmatmul.mubr.f32.gmra.mrb[0].mxu0 %v542
      %v610 = vpop.f32.mrb[0].mxu0
      %v611 = vadd.f32 0.0, %v610
      %v612 = vpop.f32.mrb[0].mxu0
      %v613 = vadd.f32 0.0, %v612
      %614 = vdwg.mxu0
      %v616 = vsel %vm249, %v538, 0
      %618 = vmatprep.subr.mxu0 %v529
      %619 = vmatpush1.msra.mxu0 %v530
      %620 = vmatprep.subr.mxu0 0.0
      %621 = vmatpush1.msra.mxu0 0.0
      %622 = vmatprep.subr.mxu0 0.0
      %623 = vmatpush1.msra.mxu0 0.0
      %624 = vmatprep.subr.mxu0 0.0
      %625 = vmatpush1.msra.mxu0 0.0
      %626 = vmatprep.subr.mxu0 0.0
      %627 = vmatpush1.msra.mxu0 0.0
      %628 = vmatprep.subr.mxu0 0.0
      %629 = vmatpush1.msra.mxu0 0.0
      %630 = vmatprep.subr.mxu0 0.0
      %631 = vmatpush1.msra.mxu0 0.0
      %632 = vmatprep.subr.mxu0 0.0
      %633 = vmatpush1.msra.mxu0 0.0
      %634 = vmatprep.subr.mxu0 0.0
      %635 = vmatpush1.msra.mxu0 0.0
      %636 = vmatprep.subr.mxu0 0.0
      %637 = vmatpush1.msra.mxu0 0.0
      %638 = vmatprep.subr.mxu0 0.0
      %639 = vmatpush1.msra.mxu0 0.0
      %640 = vmatprep.subr.mxu0 0.0
      %641 = vmatpush1.msra.mxu0 0.0
      %642 = vmatprep.subr.mxu0 0.0
      %643 = vmatpush1.msra.mxu0 0.0
      %644 = vmatprep.subr.mxu0 0.0
      %645 = vmatpush1.msra.mxu0 0.0
      %646 = vmatprep.subr.mxu0 0.0
      %647 = vmatpush1.msra.mxu0 0.0
      %648 = vmatprep.subr.mxu0 0.0
      %649 = vmatpush1.msra.mxu0 0.0
      %650 = vmatprep.subr.mxu0 0.0
      %651 = vmatpush1.msra.mxu0 0.0
      %652 = vmatprep.subr.mxu0 0.0
      %653 = vmatpush1.msra.mxu0 0.0
      %654 = vmatprep.subr.mxu0 0.0
      %655 = vmatpush1.msra.mxu0 0.0
      %656 = vmatprep.subr.mxu0 0.0
      %657 = vmatpush1.msra.mxu0 0.0
      %658 = vmatprep.subr.mxu0 0.0
      %659 = vmatpush1.msra.mxu0 0.0
      %660 = vmatprep.subr.mxu0 0.0
      %661 = vmatpush1.msra.mxu0 0.0
      %662 = vmatprep.subr.mxu0 0.0
      %663 = vmatpush1.msra.mxu0 0.0
      %664 = vmatprep.subr.mxu0 0.0
      %665 = vmatpush1.msra.mxu0 0.0
      %666 = vmatprep.subr.mxu0 0.0
      %667 = vmatpush1.msra.mxu0 0.0
      %668 = vmatprep.subr.mxu0 0.0
      %669 = vmatpush1.msra.mxu0 0.0
      %670 = vmatprep.subr.mxu0 0.0
      %671 = vmatpush1.msra.mxu0 0.0
      %672 = vmatprep.subr.mxu0 0.0
      %673 = vmatpush1.msra.mxu0 0.0
      %674 = vmatprep.subr.mxu0 0.0
      %675 = vmatpush1.msra.mxu0 0.0
      %676 = vmatprep.subr.mxu0 0.0
      %677 = vmatpush1.msra.mxu0 0.0
      %678 = vmatprep.subr.mxu0 0.0
      %679 = vmatpush1.msra.mxu0 0.0
      %680 = vmatprep.subr.mxu0 0.0
      %681 = vmatpush1.msra.mxu0 0.0
      %682 = vmatprep.mubr.f32.mxu0 0.0
      %683 = vmatmul.mubr.f32.gmra.mrb[0].mxu0 %v616
      %v684 = vpop.f32.mrb[0].mxu0
      %v685 = vadd.f32 %v611, %v684
      %v686 = vpop.f32.mrb[0].mxu0
      %v687 = vadd.f32 %v613, %v686
      %688 = vdwg.mxu0
      %s689 = scalar_lea.vmem %s169, 40
      %v690 = vld [vmem:[%s689] sm:$0xff]
      %v692 = vsel %vm249, %v690, 0
      %694 = vmatprep.subr.mxu0 %v536
      %695 = vmatpush1.msra.mxu0 %v535
      %696 = vmatprep.subr.mxu0 0.0
      %697 = vmatpush1.msra.mxu0 0.0
      %698 = vmatprep.subr.mxu0 0.0
      %699 = vmatpush1.msra.mxu0 0.0
      %700 = vmatprep.subr.mxu0 0.0
      %701 = vmatpush1.msra.mxu0 0.0
      %702 = vmatprep.subr.mxu0 0.0
      %703 = vmatpush1.msra.mxu0 0.0
      %704 = vmatprep.subr.mxu0 0.0
      %705 = vmatpush1.msra.mxu0 0.0
      %706 = vmatprep.subr.mxu0 0.0
      %707 = vmatpush1.msra.mxu0 0.0
      %708 = vmatprep.subr.mxu0 0.0
      %709 = vmatpush1.msra.mxu0 0.0
      %710 = vmatprep.subr.mxu0 0.0
      %711 = vmatpush1.msra.mxu0 0.0
      %712 = vmatprep.subr.mxu0 0.0
      %713 = vmatpush1.msra.mxu0 0.0
      %714 = vmatprep.subr.mxu0 0.0
      %715 = vmatpush1.msra.mxu0 0.0
      %716 = vmatprep.subr.mxu0 0.0
      %717 = vmatpush1.msra.mxu0 0.0
      %718 = vmatprep.subr.mxu0 0.0
      %719 = vmatpush1.msra.mxu0 0.0
      %720 = vmatprep.subr.mxu0 0.0
      %721 = vmatpush1.msra.mxu0 0.0
      %722 = vmatprep.subr.mxu0 0.0
      %723 = vmatpush1.msra.mxu0 0.0
      %724 = vmatprep.subr.mxu0 0.0
      %725 = vmatpush1.msra.mxu0 0.0
      %726 = vmatprep.subr.mxu0 0.0
      %727 = vmatpush1.msra.mxu0 0.0
      %728 = vmatprep.subr.mxu0 0.0
      %729 = vmatpush1.msra.mxu0 0.0
      %730 = vmatprep.subr.mxu0 0.0
      %731 = vmatpush1.msra.mxu0 0.0
      %732 = vmatprep.subr.mxu0 0.0
      %733 = vmatpush1.msra.mxu0 0.0
      %734 = vmatprep.subr.mxu0 0.0
      %735 = vmatpush1.msra.mxu0 0.0
      %736 = vmatprep.subr.mxu0 0.0
      %737 = vmatpush1.msra.mxu0 0.0
      %738 = vmatprep.subr.mxu0 0.0
      %739 = vmatpush1.msra.mxu0 0.0
      %740 = vmatprep.subr.mxu0 0.0
      %741 = vmatpush1.msra.mxu0 0.0
      %742 = vmatprep.subr.mxu0 0.0
      %743 = vmatpush1.msra.mxu0 0.0
      %744 = vmatprep.subr.mxu0 0.0
      %745 = vmatpush1.msra.mxu0 0.0
      %746 = vmatprep.subr.mxu0 0.0
      %747 = vmatpush1.msra.mxu0 0.0
      %748 = vmatprep.subr.mxu0 0.0
      %749 = vmatpush1.msra.mxu0 0.0
      %750 = vmatprep.subr.mxu0 0.0
      %751 = vmatpush1.msra.mxu0 0.0
      %752 = vmatprep.subr.mxu0 0.0
      %753 = vmatpush1.msra.mxu0 0.0
      %754 = vmatprep.subr.mxu0 0.0
      %755 = vmatpush1.msra.mxu0 0.0
      %756 = vmatprep.subr.mxu0 0.0
      %757 = vmatpush1.msra.mxu0 0.0
      %758 = vmatprep.mubr.f32.mxu0 0.0
      %759 = vmatmul.mubr.f32.gmra.mrb[0].mxu0 %v692
      %v760 = vpop.f32.mrb[0].mxu0
      %v761 = vadd.f32 0.0, %v760
      %v762 = vpop.f32.mrb[0].mxu0
      %v763 = vadd.f32 0.0, %v762
      %764 = vdwg.mxu0
      %v765 = vadd.f32 %v685, %v761
      %v766 = vadd.f32 %v687, %v763
      %v767 = vmul.f32 %v765, %v480
      %v768 = vmul.f32 %v766, %v484
      %v769 = vadd.f32 %v767, %v768
      %770 = vadd.xlane.f32.xlu0 %v769
      %v771 = vpop.xlane.xlu0 %770
      %v772 = vmul.f32 %v767, %v767
      %v773 = vmul.f32 %v768, %v768
      %v774 = vadd.f32 %v772, %v773
      %775 = vadd.xlane.f32.xlu0 %v774
      %v776 = vpop.xlane.xlu0 %775
      %v777 = vmul.f32 %v771, 0.03125
      %v778 = vmul.f32 %v776, 0.03125
      %v779 = vmul.f32 %v777, %v777
      %v780 = vsub.f32 %v778, %v779
      %v781 = vmax.f32 %v780, 0.0
      %v782 = vsub.f32 %v765, %v777
      %v783 = vsub.f32 %v766, %v777
      %v784 = vadd.f32 %v781, 1e-05
      %v785 = vrsqrt.pop %v784
      %v786 = vmul.f32 %v782, %v785
      %v787 = vmul.f32 %v783, %v785
      %788 = vset.pattern.permute.xlu0 2
      %789 = vperm.xlu0 %788, %v229
      %v790 = vpop.permute.xlu0 %789
      %v792 = vmul.f32 %v786, %v790
      %v793 = vmul.f32 %v787, %v790
      %794 = vset.pattern.permute.xlu0 3
      %795 = vperm.xlu0 %794, %v229
      %v796 = vpop.permute.xlu0 %795
      %v798 = vadd.f32 %v792, %v796
      %v799 = vadd.f32 %v793, %v796
      %v800 = vadd.f32 %v798, %v226
      %v801 = vadd.f32 %v799, %v227
      %v802 = vmax.f32 %v800, 0.0
      %v803 = vmax.f32 %v801, 0.0
      %v804 = vmul.f32 %v802, %v480
      %v805 = vmul.f32 %v803, %v484
      %806 = vst [vmem:[%s4] sm:$0xff] %v804
      %807 = vst [vmem:[%s4 + $0x8] sm:$0xff] %v805
      // Predicated region
      $region72: #{downsample_forward.10} parent=31 // pred_check
        %p808 = pneg %p101
      $region73: #{downsample_forward.10} parent=31 // pred_check_branch
        %810 = sbr.rel (%p808) target = $region75
      $region74: #{downsample_forward.10} parent=31 // pred_region
        _
      $region75: #{downsample_forward.10} parent=31 // pred_fallthru
        _
      // Predicated region
      $region76: #{downsample_forward.10} parent=31 // pred_check
        %p811 = pneg %p101
      $region77: #{downsample_forward.10} parent=31 // pred_check_branch
        %813 = sbr.rel (%p811) target = $region79
      $region78: #{downsample_forward.10} parent=31 // pred_region
        _
      $region79: #{downsample_forward.10} parent=31 // pred_fallthru
        _
    $region32: #{downsample_forward.10} parent=5 // pred_fallthru
      _
    %p814 = scmp.le.s32.totalorder 2, %s10
    // Predicated region
    $region80: #{downsample_forward.10} parent=5 // pred_check
      %p815 = pneg %p814
    $region81: #{downsample_forward.10} parent=5 // pred_check_branch
      %817 = sbr.rel (%p815) target = $region83
    $region82: #{downsample_forward.10} parent=5 // pred_region
      %s818 = ssub.s32 %s10, 2
    $region83: #{downsample_forward.10} parent=5 // pred_fallthru
      _
  $region6: #{downsample_forward.10} parent=0 // loop_footer
    %s14 = sadd.s32 1, %s10
  $region7: #{downsample_forward.10} parent=0 // loop_footer_branch
    %9 = sbr.rel target = $region3
  $region8: #{downsample_forward.10} parent=0 // loop_exit
    _

// kernel: downsample_forward.11
$region0: #{downsample_forward.11}
  #allocation0 [shape = 'u32[]', space=smem, size = 0x4, offset = 0x4, fixed_abs, tag = 'smem constant byte address 0x4 - core index']
  #allocation1 [shape = 'u32[144,128]{1,0:T(1,128)}', space=vmem, size = 0x12000, scoped, tag = 'internal scratch']
  %s0 = inlined_call_operand.vmem [shape: f32[32,256], index: 0, kind: input, shape index: {}]
  %s1 = inlined_call_operand.vmem [shape: f32[8,256], index: 1, kind: output, shape index: {}]
  %s2 = sld [smem:[#allocation0]]
  $region14: #{downsample_forward.11} parent=0
    _
  %s4 = ssub.s32 1, %s2
  %s5 = scalar_select 0, %s4, %s2
  // Predicated region
  $region2: #{downsample_forward.11} parent=0 // pred_check
    _
  $region3: #{downsample_forward.11} parent=0 // pred_check_branch
    %7 = sbr.rel (0) target = $region5
  $region4: #{downsample_forward.11} parent=0 // pred_region
    _
  $region5: #{downsample_forward.11} parent=0 // pred_fallthru
    _
  %v8 = vld [vmem:[%s0] sm:$0xff]
  %v9 = vld [vmem:[%s0 + $0x8] sm:$0xff]
  %v10 = vld [vmem:[%s0 + $0x10] sm:$0xff]
  %v11 = vld [vmem:[%s0 + $0x18] sm:$0xff]
  %v12 = vld [vmem:[%s0 + $0x20] sm:$0xff]
  %v13 = vld [vmem:[%s0 + $0x28] sm:$0xff]
  %v14 = vld [vmem:[%s0 + $0x30] sm:$0xff]
  %v15 = vld [vmem:[%s0 + $0x38] sm:$0xff]
  %v16 = vadd.f32 %v8, 0.0
  %v17 = vadd.f32 %v9, 0.0
  %v18 = vadd.f32 %v16, %v10
  %v19 = vadd.f32 %v17, %v11
  %20 = vrot.lane.b32.xlu0 %v8, 127
  %v21 = vpop.permute.xlu0 %20
  %22 = vrot.lane.b32.xlu0 %v9, 127
  %v23 = vpop.permute.xlu0 %22
  %v24 = vlaneseq
  %v25 = vand.u32 %v24, 127
  %vm26 = vcmp.lt.s32.totalorder %v25, 127
  %v27 = vsel %vm26, %v21, %v23
  %v28 = vsel %vm26, %v23, %v21
  %v29 = vadd.f32 %v18, %v27
  %v30 = vadd.f32 %v19, %v28
  %v31 = vadd.f32 %v29, %v12
  %v32 = vadd.f32 %v30, %v13
  %v33 = vadd.f32 %v31, %v14
  %v34 = vadd.f32 %v32, %v15
  %35 = vrot.lane.b32.xlu0 %v12, 127
  %v36 = vpop.permute.xlu0 %35
  %37 = vrot.lane.b32.xlu0 %v13, 127
  %v38 = vpop.permute.xlu0 %37
  %v39 = vsel %vm26, %v36, %v38
  %v40 = vsel %vm26, %v38, %v36
  %v41 = vadd.f32 %v33, %v39
  %v42 = vadd.f32 %v34, %v40
  %43 = vrot.lane.b32.xlu0 %v8, 125
  %v44 = vpop.permute.xlu0 %43
  %45 = vrot.lane.b32.xlu0 %v9, 125
  %v46 = vpop.permute.xlu0 %45
  %vm47 = vcmp.lt.s32.totalorder %v25, 125
  %v48 = vsel %vm47, %v44, %v46
  %v49 = vsel %vm47, %v46, %v44
  %v50 = vadd.f32 %v41, %v48
  %v51 = vadd.f32 %v42, %v49
  %52 = vrot.lane.b32.xlu0 %v10, 125
  %v53 = vpop.permute.xlu0 %52
  %54 = vrot.lane.b32.xlu0 %v11, 125
  %v55 = vpop.permute.xlu0 %54
  %v56 = vsel %vm47, %v53, %v55
  %v57 = vsel %vm47, %v55, %v53
  %v58 = vadd.f32 %v50, %v56
  %v59 = vadd.f32 %v51, %v57
  %60 = vrot.lane.b32.xlu0 %v8, 124
  %v61 = vpop.permute.xlu0 %60
  %62 = vrot.lane.b32.xlu0 %v9, 124
  %v63 = vpop.permute.xlu0 %62
  %vm64 = vcmp.lt.s32.totalorder %v25, 124
  %v65 = vsel %vm64, %v61, %v63
  %v66 = vsel %vm64, %v63, %v61
  %v67 = vadd.f32 %v58, %v65
  %v68 = vadd.f32 %v59, %v66
  %v69 = vmul.f32 %v67, 0.11111111
  %v70 = vmul.f32 %v68, 0.11111111
  %71 = vst [vmem:[%s1] sm:$0xff] %v69
  %72 = vst [vmem:[%s1 + $0x8] sm:$0xff] %v70
  // Predicated region
  $region6: #{downsample_forward.11} parent=0 // pred_check
    _
  $region7: #{downsample_forward.11} parent=0 // pred_check_branch
    %74 = sbr.rel (0) target = $region9
  $region8: #{downsample_forward.11} parent=0 // pred_region
    _
  $region9: #{downsample_forward.11} parent=0 // pred_fallthru
    _
  // Predicated region
  $region10: #{downsample_forward.11} parent=0 // pred_check
    _
  $region11: #{downsample_forward.11} parent=0 // pred_check_branch
    %76 = sbr.rel (0) target = $region13
  $region12: #{downsample_forward.11} parent=0 // pred_region
    _
  $region13: #{downsample_forward.11} parent=0 // pred_fallthru
    _

// kernel: downsample_forward.12
$region0: #{downsample_forward.12}
  #allocation0 [shape = 'u32[]', space=smem, size = 0x4, offset = 0x4, fixed_abs, tag = 'smem constant byte address 0x4 - core index']
  #allocation1 [shape = 'u32[144,128]{1,0:T(1,128)}', space=vmem, size = 0x12000, scoped, tag = 'internal scratch']
  #allocation3 [shape = 's32[]', space=sflag, size = 0x4, offset = 0, fixed_abs, tag = 'sflag constant byte address 0x0 - dummy sync flag']
  %s0 = inlined_call_operand.vmem [shape: f32[8,256], index: 0, kind: input, shape index: {}]
  %s1 = inlined_call_operand.vmem [shape: f32[1,256], index: 1, kind: input, shape index: {}]
  %s2 = inlined_call_operand.vmem [shape: f32[3,6,8,8], index: 2, kind: input, shape index: {}]
  %s3 = inlined_call_operand.vmem [shape: f32[3,8,4], index: 3, kind: input, shape index: {}]
  %s4 = inlined_call_operand.vmem [shape: f32[8,256], index: 4, kind: output, shape index: {}]
  %s5 = sld [smem:[#allocation0]]
  $region84: #{downsample_forward.12} parent=0
    _
  %s7 = ssub.s32 1, %s5
  %s8 = scalar_select 0, %s7, %s5
  loop: start=0, step=1, limit=5
  $region2: #{downsample_forward.12} parent=0 // loop_pre_header
    _
  $region3: #{downsample_forward.12} parent=0 // loop_header
    %s10 = sphi 0, %s14
    %p11 = scmp.ge.s32.totalorder %s10, 5
    %s18 = sphi 0, %s18
    %s20 = sphi 0, %s18
    %s21 = sphi 0, %s20
    %s35 = sphi 0, %s21
    %s41 = sphi 0, %s43
    %s44 = sphi 0, %s41
    %s45 = sphi 0, %s44
    %s61 = sphi 0, %s45
    %s67 = sphi 0, %s69
    %s70 = sphi 0, %s67
    %s71 = sphi 0, %s70
    %s87 = sphi 0, %s71
    %s91 = sphi 0, %s91
    %s93 = sphi 0, %s91
    %s94 = sphi 0, %s93
    %s108 = sphi 0, %s94
  $region4: #{downsample_forward.12} parent=0 // loop_header_branch
    %13 = sbr.rel (%p11) target = $region8
  $region5: #{downsample_forward.12} parent=0 // loop_body
    %s15 = ssub.s32 %s10, 1
    %s16 = ssub.s32 %s10, 2
    %s17 = sadd.s32 %s10, 1
    %s19 = sadd.s32 %s18, 1
    %p22 = scmp.eq.s32.totalorder %s10, 2
    %p23 = scmp.ne.s32.totalorder %s18, %s20
    %p24 = scmp.eq.s32.totalorder %s10, 0
    %p25 = por %p23, %p24
    %p26 = scmp.ne.s32.totalorder %s18, %s20
    %p27 = scmp.eq.s32.totalorder %s15, 2
    %p28 = por %p26, %p27
    %p29 = scmp.ne.s32.totalorder %s20, %s21
    %p30 = scmp.eq.s32.totalorder %s15, 0
    %p31 = por %p29, %p30
    %p32 = scmp.ne.s32.totalorder %s20, %s21
    %p33 = scmp.eq.s32.totalorder %s16, 2
    %p34 = por %p32, %p33
    %p36 = scmp.ne.s32.totalorder %s21, %s35
    %p37 = scmp.eq.s32.totalorder %s16, 0
    %p38 = por %p36, %p37
    %s39 = ssub.s32 %s10, %s17
    %p40 = scmp.eq.s32.totalorder %s39, 0
    %s42 = sadd.s32 %s41, 1
    %s43 = scalar_select %p40, %s41, %s42
    %p46 = pneg %p40
    %p47 = scmp.eq.s32.totalorder %s10, 2
    %p48 = por %p46, %p47
    %p49 = scmp.ne.s32.totalorder %s41, %s44
    %p50 = scmp.eq.s32.totalorder %s10, 0
    %p51 = por %p49, %p50
    %p52 = scmp.ne.s32.totalorder %s41, %s44
    %p53 = scmp.eq.s32.totalorder %s15, 2
    %p54 = por %p52, %p53
    %p55 = scmp.ne.s32.totalorder %s44, %s45
    %p56 = scmp.eq.s32.totalorder %s15, 0
    %p57 = por %p55, %p56
    %p58 = scmp.ne.s32.totalorder %s44, %s45
    %p59 = scmp.eq.s32.totalorder %s16, 2
    %p60 = por %p58, %p59
    %p62 = scmp.ne.s32.totalorder %s45, %s61
    %p63 = scmp.eq.s32.totalorder %s16, 0
    %p64 = por %p62, %p63
    %s65 = ssub.s32 %s10, %s17
    %p66 = scmp.eq.s32.totalorder %s65, 0
    %s68 = sadd.s32 %s67, 1
    %s69 = scalar_select %p66, %s67, %s68
    %p72 = pneg %p66
    %p73 = scmp.eq.s32.totalorder %s10, 2
    %p74 = por %p72, %p73
    %p75 = scmp.ne.s32.totalorder %s67, %s70
    %p76 = scmp.eq.s32.totalorder %s10, 0
    %p77 = por %p75, %p76
    %p78 = scmp.ne.s32.totalorder %s67, %s70
    %p79 = scmp.eq.s32.totalorder %s15, 2
    %p80 = por %p78, %p79
    %p81 = scmp.ne.s32.totalorder %s70, %s71
    %p82 = scmp.eq.s32.totalorder %s15, 0
    %p83 = por %p81, %p82
    %p84 = scmp.ne.s32.totalorder %s70, %s71
    %p85 = scmp.eq.s32.totalorder %s16, 2
    %p86 = por %p84, %p85
    %p88 = scmp.ne.s32.totalorder %s71, %s87
    %p89 = scmp.eq.s32.totalorder %s16, 0
    %p90 = por %p88, %p89
    %s92 = sadd.s32 %s91, 1
    %p95 = scmp.eq.s32.totalorder %s10, 2
    %p96 = scmp.ne.s32.totalorder %s91, %s93
    %p97 = scmp.eq.s32.totalorder %s10, 0
    %p98 = por %p96, %p97
    %p99 = scmp.ne.s32.totalorder %s91, %s93
    %p100 = scmp.eq.s32.totalorder %s15, 2
    %p101 = por %p99, %p100
    %p102 = scmp.ne.s32.totalorder %s93, %s94
    %p103 = scmp.eq.s32.totalorder %s15, 0
    %p104 = por %p102, %p103
    %p105 = scmp.ne.s32.totalorder %s93, %s94
    %p106 = scmp.eq.s32.totalorder %s16, 2
    %p107 = por %p105, %p106
    %p109 = scmp.ne.s32.totalorder %s94, %s108
    %p110 = scmp.eq.s32.totalorder %s16, 0
    %p111 = por %p109, %p110
    %p112 = scmp.le.s32.totalorder 1, %s10
    %p113 = scmp.lt.s32.totalorder %s10, 4
    %p114 = pnand %p112, %p113
    %p115 = pneg %p114
    // Predicated region
    $region9: #{downsample_forward.12} parent=5 // pred_check
      _
    $region10: #{downsample_forward.12} parent=5 // pred_check_branch
      %117 = sbr.rel (%p114) target = $region12
    $region11: #{downsample_forward.12} parent=5 // pred_region
      %s118 = ssub.s32 %s10, 1
      // Predicated region
      $region13: #{downsample_forward.12} parent=11 // pred_check
        %p119 = pneg %p31
      $region14: #{downsample_forward.12} parent=11 // pred_check_branch
        %121 = sbr.rel (%p119) target = $region16
      $region15: #{downsample_forward.12} parent=11 // pred_region
        _
      $region16: #{downsample_forward.12} parent=11 // pred_fallthru
        _
    $region12: #{downsample_forward.12} parent=5 // pred_fallthru
      _
    %p122 = scmp.lt.s32.totalorder %s10, 3
    // Predicated region
    $region17: #{downsample_forward.12} parent=5 // pred_check
      %p123 = pneg %p122
    $region18: #{downsample_forward.12} parent=5 // pred_check_branch
      %125 = sbr.rel (%p123) target = $region20
    $region19: #{downsample_forward.12} parent=5 // pred_region
      // Predicated region
      $region21: #{downsample_forward.12} parent=19 // pred_check
        %p126 = pneg %p51
      $region22: #{downsample_forward.12} parent=19 // pred_check_branch
        %128 = sbr.rel (%p126) target = $region24
      $region23: #{downsample_forward.12} parent=19 // pred_region
        %p129 = scmp.lt.s32.totalorder %s10, 2
        %s130 = scalar_select %p129, %s10, 2
        %s131 = smul.addr %s130, 6
        %s132 = smul.addr %s131, 8
        %s133 = scalar_lea.vmem %s2, %s132
      $region24: #{downsample_forward.12} parent=19 // pred_fallthru
        _
      // Predicated region
      $region25: #{downsample_forward.12} parent=19 // pred_check
        %p134 = pneg %p77
      $region26: #{downsample_forward.12} parent=19 // pred_check_branch
        %136 = sbr.rel (%p134) target = $region28
      $region27: #{downsample_forward.12} parent=19 // pred_region
        %p137 = scmp.lt.s32.totalorder %s10, 2
        %s138 = scalar_select %p137, %s10, 2
        %s139 = smul.addr %s138, 8
        %s140 = scalar_lea.vmem %s3, %s139
      $region28: #{downsample_forward.12} parent=19 // pred_fallthru
        _
    $region20: #{downsample_forward.12} parent=5 // pred_fallthru
      _
    %p141 = scmp.le.s32.totalorder 1, %s10
    %p142 = scmp.lt.s32.totalorder %s10, 4
    %p143 = pnand %p141, %p142
    %p144 = pneg %p143
    // Predicated region
    $region29: #{downsample_forward.12} parent=5 // pred_check
      _
    $region30: #{downsample_forward.12} parent=5 // pred_check_branch
      %146 = sbr.rel (%p143) target = $region32
    $region31: #{downsample_forward.12} parent=5 // pred_region
      %s147 = ssub.s32 %s10, 1
      %p148 = pneg %p31
      %p149 = pneg %p28
      %p150 = scmp.lt.s32.totalorder %s15, 2
      %s151 = scalar_select %p150, %s15, 2
      %s152 = smul.addr %s151, 6
      %s153 = smul.addr %s152, 8
      %s154 = scalar_lea.vmem %s2, %s153
      %p155 = pneg %p57
      %p156 = pneg %p54
      %p157 = scmp.lt.s32.totalorder %s15, 2
      %s158 = scalar_select %p157, %s15, 2
      %s159 = smul.addr %s158, 8
      %s160 = scalar_lea.vmem %s3, %s159
      %p161 = pneg %p83
      %p162 = pneg %p80
      %p163 = pneg %p104
      %p164 = pneg %p101
      %p165 = scmp.lt.s32.totalorder %s15, 2
      %s166 = scalar_select %p165, %s15, 2
      %s167 = smul.addr %s166, 6
      %s168 = smul.addr %s167, 8
      %s169 = scalar_lea.vmem %s2, %s168
      %p170 = scmp.lt.s32.totalorder %s15, 2
      %s171 = scalar_select %p170, %s15, 2
      %s172 = smul.addr %s171, 8
      %s173 = scalar_lea.vmem %s3, %s172
      %p174 = scmp.eq.s32.totalorder %s15, 0
      // Predicated region
      $region33: #{downsample_forward.12} parent=31 // pred_check
        %p175 = pneg %p174
      $region34: #{downsample_forward.12} parent=31 // pred_check_branch
        %177 = sbr.rel (%p175) target = $region36
      $region35: #{downsample_forward.12} parent=31 // pred_region
        $region37: #{downsample_forward.12} parent=35
          #allocation2 [shape = 's32[1]{0}', space=sflag, size = 0x4, scoped, tag = 'scoped memory for downsample_forward.12']
          %p179 = scmp.lt.u32.totalorder 16, 8
          %p180 = pneg %p179
          // Predicated region
          $region38: #{downsample_forward.12} parent=37 // pred_check
            _
          $region39: #{downsample_forward.12} parent=37 // pred_check_branch
            %182 = sbr.rel (%p179) target = $region41
          $region40: #{downsample_forward.12} parent=37 // pred_region
            %s197 = sand.u32 16, 7
            %p198 = scmp.eq.s32.totalorder %s197, 0
            // Predicated region
            $region53: #{downsample_forward.12} parent=40 // pred_check
              %p199 = pneg %p198
            $region54: #{downsample_forward.12} parent=40 // pred_check_branch
              %201 = sbr.rel (%p199) target = $region56
            $region55: #{downsample_forward.12} parent=40 // pred_region
              loop: start=0, step=1, limit=1
              $region57: #{downsample_forward.12} parent=55 // loop_pre_header
                _
              $region58: #{downsample_forward.12} parent=55 // loop_header
                %s203 = sphi 0, %s207
                %p204 = scmp.ge.s32.totalorder %s203, 1
                %s208 = sphi %s0, %s0
                %s209 = sphi %s4, %s4
              $region59: #{downsample_forward.12} parent=55 // loop_header_branch
                %206 = sbr.rel (%p204) target = $region63
              $region60: #{downsample_forward.12} parent=55 // loop_body
                %v210 = vld [vmem:[%s208] sm:$0xff]
                %211 = vst [vmem:[%s209] sm:$0xff] %v210
                %v212 = vld [vmem:[%s208 + $0x8] sm:$0xff]
                %213 = vst [vmem:[%s209 + $0x8] sm:$0xff] %v212
              $region61: #{downsample_forward.12} parent=55 // loop_footer
                %s207 = sadd.s32 1, %s203
              $region62: #{downsample_forward.12} parent=55 // loop_footer_branch
                %202 = sbr.rel target = $region58
              $region63: #{downsample_forward.12} parent=55 // loop_exit
                _
            $region56: #{downsample_forward.12} parent=40 // pred_fallthru
              _
            %p214 = pneg %p198
            // Predicated region
            $region64: #{downsample_forward.12} parent=40 // pred_check
              _
            $region65: #{downsample_forward.12} parent=40 // pred_check_branch
              %216 = sbr.rel (%p198) target = $region67
            $region66: #{downsample_forward.12} parent=40 // pred_region
              %s217 = sand.u32 16, 7
            $region67: #{downsample_forward.12} parent=40 // pred_fallthru
              _
          $region41: #{downsample_forward.12} parent=37 // pred_fallthru
            _
          // Predicated region
          $region42: #{downsample_forward.12} parent=37 // pred_check
            %p183 = pneg %p179
          $region43: #{downsample_forward.12} parent=37 // pred_check_branch
            %185 = sbr.rel (%p183) target = $region45
          $region44: #{downsample_forward.12} parent=37 // pred_region
            %s186 = sshllo.u32 0, 16
            loop: start=0, step=1, limit=1
            $region46: #{downsample_forward.12} parent=44 // loop_pre_header
              _
            $region47: #{downsample_forward.12} parent=44 // loop_header
              %s188 = sphi 0, %s192
              %p189 = scmp.ge.s32.totalorder %s188, 1
              %s193 = sphi %s0, %s0
              %s194 = sphi %s4, %s4
            $region48: #{downsample_forward.12} parent=44 // loop_header_branch
              %191 = sbr.rel (%p189) target = $region52
            $region49: #{downsample_forward.12} parent=44 // loop_body
              %v195 = vld [vmem:[%s193] sm:%s186]
              %196 = vst [vmem:[%s194] sm:%s186] %v195
            $region50: #{downsample_forward.12} parent=44 // loop_footer
              %s192 = sadd.s32 1, %s188
            $region51: #{downsample_forward.12} parent=44 // loop_footer_branch
              %187 = sbr.rel target = $region47
            $region52: #{downsample_forward.12} parent=44 // loop_exit
              _
          $region45: #{downsample_forward.12} parent=37 // pred_fallthru
            _
          // Predicated region
          $region68: #{downsample_forward.12} parent=37 // pred_check
            _
          $region69: #{downsample_forward.12} parent=37 // pred_check_branch
            %220 = sbr.rel (0) target = $region71
          $region70: #{downsample_forward.12} parent=37 // pred_region
            %221 = vsyncadd [#allocation2], 256
          $region71: #{downsample_forward.12} parent=37 // pred_fallthru
            _
          %s222 = smul.u32 8, 1
          %s223 = smul.u32 %s222, 2
          %s224 = sshll.u32 %s223, 4
          %225 = dma.done [#allocation2], %s224
      $region36: #{downsample_forward.12} parent=31 // pred_fallthru
        _
      %v226 = vld [vmem:[%s4] sm:$0xff]
      %v227 = vld [vmem:[%s4 + $0x8] sm:$0xff]
      %v228 = vld [vmem:[%s1] sm:$0x3]
      %v229 = vld [vmem:[%s173] sm:$0xff]
      %230 = vrot.lane.b32.xlu0 %v226, 1
      %v231 = vpop.permute.xlu0 %230
      %232 = vrot.lane.b32.xlu0 %v227, 1
      %v233 = vpop.permute.xlu0 %232
      %v234 = vlaneseq
      %v235 = vand.u32 %v234, 127
      %vm236 = vcmp.lt.s32.totalorder %v235, 1
      %v237 = vsel %vm236, %v231, %v233
      %v238 = vsel %vm236, %v233, %v231
      %239 = vrot.lane.b32.xlu0 %v226, 127
      %v240 = vpop.permute.xlu0 %239
      %241 = vrot.lane.b32.xlu0 %v227, 127
      %v242 = vpop.permute.xlu0 %241
      %vm243 = vcmp.lt.s32.totalorder %v235, 127
      %v244 = vsel %vm243, %v240, %v242
      %v245 = vsel %vm243, %v242, %v240
      %v246 = vld [vmem:[%s169] sm:$0xff]
      %s247 = scalar_lea.vmem %s169, 8
      %v248 = vld [vmem:[%s247] sm:$0xff]
      %vm249 = vcmask 64512
      %v251 = vsel %vm249, %v248, 0
      %253 = vmatprep.subr.mxu0 %v227
      %254 = vmatpush1.msra.mxu0 %v226
      %255 = vmatprep.subr.mxu0 0.0
      %256 = vmatpush1.msra.mxu0 0.0
      %257 = vmatprep.subr.mxu0 0.0
      %258 = vmatpush1.msra.mxu0 0.0
      %259 = vmatprep.subr.mxu0 0.0
      %260 = vmatpush1.msra.mxu0 0.0
      %261 = vmatprep.subr.mxu0 0.0
      %262 = vmatpush1.msra.mxu0 0.0
      %263 = vmatprep.subr.mxu0 0.0
      %264 = vmatpush1.msra.mxu0 0.0
      %265 = vmatprep.subr.mxu0 0.0
      %266 = vmatpush1.msra.mxu0 0.0
      %267 = vmatprep.subr.mxu0 0.0
      %268 = vmatpush1.msra.mxu0 0.0
      %269 = vmatprep.subr.mxu0 0.0
      %270 = vmatpush1.msra.mxu0 0.0
      %271 = vmatprep.subr.mxu0 0.0
      %272 = vmatpush1.msra.mxu0 0.0
      %273 = vmatprep.subr.mxu0 0.0
      %274 = vmatpush1.msra.mxu0 0.0
      %275 = vmatprep.subr.mxu0 0.0
      %276 = vmatpush1.msra.mxu0 0.0
      %277 = vmatprep.subr.mxu0 0.0
      %278 = vmatpush1.msra.mxu0 0.0
      %279 = vmatprep.subr.mxu0 0.0
      %280 = vmatpush1.msra.mxu0 0.0
      %281 = vmatprep.subr.mxu0 0.0
      %282 = vmatpush1.msra.mxu0 0.0
      %283 = vmatprep.subr.mxu0 0.0
      %284 = vmatpush1.msra.mxu0 0.0
      %285 = vmatprep.subr.mxu0 0.0
      %286 = vmatpush1.msra.mxu0 0.0
      %287 = vmatprep.subr.mxu0 0.0
      %288 = vmatpush1.msra.mxu0 0.0
      %289 = vmatprep.subr.mxu0 0.0
      %290 = vmatpush1.msra.mxu0 0.0
      %291 = vmatprep.subr.mxu0 0.0
      %292 = vmatpush1.msra.mxu0 0.0
      %293 = vmatprep.subr.mxu0 0.0
      %294 = vmatpush1.msra.mxu0 0.0
      %295 = vmatprep.subr.mxu0 0.0
      %296 = vmatpush1.msra.mxu0 0.0
      %297 = vmatprep.subr.mxu0 0.0
      %298 = vmatpush1.msra.mxu0 0.0
      %299 = vmatprep.subr.mxu0 0.0
      %300 = vmatpush1.msra.mxu0 0.0
      %301 = vmatprep.subr.mxu0 0.0
      %302 = vmatpush1.msra.mxu0 0.0
      %303 = vmatprep.subr.mxu0 0.0
      %304 = vmatpush1.msra.mxu0 0.0
      %305 = vmatprep.subr.mxu0 0.0
      %306 = vmatpush1.msra.mxu0 0.0
      %307 = vmatprep.subr.mxu0 0.0
      %308 = vmatpush1.msra.mxu0 0.0
      %309 = vmatprep.subr.mxu0 0.0
      %310 = vmatpush1.msra.mxu0 0.0
      %311 = vmatprep.subr.mxu0 0.0
      %312 = vmatpush1.msra.mxu0 0.0
      %313 = vmatprep.subr.mxu0 0.0
      %314 = vmatpush1.msra.mxu0 0.0
      %315 = vmatprep.subr.mxu0 0.0
      %316 = vmatpush1.msra.mxu0 0.0
      %317 = vmatprep.mubr.f32.mxu0 0.0
      %318 = vmatmul.mubr.f32.gmra.mrb[0].mxu0 %v251
      %v319 = vpop.f32.mrb[0].mxu0
      %v320 = vadd.f32 0.0, %v319
      %v321 = vpop.f32.mrb[0].mxu0
      %v322 = vadd.f32 0.0, %v321
      %323 = vdwg.mxu0
      %v325 = vsel %vm249, %v246, 0
      %327 = vmatprep.subr.mxu0 %v237
      %328 = vmatpush1.msra.mxu0 %v238
      %329 = vmatprep.subr.mxu0 0.0
      %330 = vmatpush1.msra.mxu0 0.0
      %331 = vmatprep.subr.mxu0 0.0
      %332 = vmatpush1.msra.mxu0 0.0
      %333 = vmatprep.subr.mxu0 0.0
      %334 = vmatpush1.msra.mxu0 0.0
      %335 = vmatprep.subr.mxu0 0.0
      %336 = vmatpush1.msra.mxu0 0.0
      %337 = vmatprep.subr.mxu0 0.0
      %338 = vmatpush1.msra.mxu0 0.0
      %339 = vmatprep.subr.mxu0 0.0
      %340 = vmatpush1.msra.mxu0 0.0
      %341 = vmatprep.subr.mxu0 0.0
      %342 = vmatpush1.msra.mxu0 0.0
      %343 = vmatprep.subr.mxu0 0.0
      %344 = vmatpush1.msra.mxu0 0.0
      %345 = vmatprep.subr.mxu0 0.0
      %346 = vmatpush1.msra.mxu0 0.0
      %347 = vmatprep.subr.mxu0 0.0
      %348 = vmatpush1.msra.mxu0 0.0
      %349 = vmatprep.subr.mxu0 0.0
      %350 = vmatpush1.msra.mxu0 0.0
      %351 = vmatprep.subr.mxu0 0.0
      %352 = vmatpush1.msra.mxu0 0.0
      %353 = vmatprep.subr.mxu0 0.0
      %354 = vmatpush1.msra.mxu0 0.0
      %355 = vmatprep.subr.mxu0 0.0
      %356 = vmatpush1.msra.mxu0 0.0
      %357 = vmatprep.subr.mxu0 0.0
      %358 = vmatpush1.msra.mxu0 0.0
      %359 = vmatprep.subr.mxu0 0.0
      %360 = vmatpush1.msra.mxu0 0.0
      %361 = vmatprep.subr.mxu0 0.0
      %362 = vmatpush1.msra.mxu0 0.0
      %363 = vmatprep.subr.mxu0 0.0
      %364 = vmatpush1.msra.mxu0 0.0
      %365 = vmatprep.subr.mxu0 0.0
      %366 = vmatpush1.msra.mxu0 0.0
      %367 = vmatprep.subr.mxu0 0.0
      %368 = vmatpush1.msra.mxu0 0.0
      %369 = vmatprep.subr.mxu0 0.0
      %370 = vmatpush1.msra.mxu0 0.0
      %371 = vmatprep.subr.mxu0 0.0
      %372 = vmatpush1.msra.mxu0 0.0
      %373 = vmatprep.subr.mxu0 0.0
      %374 = vmatpush1.msra.mxu0 0.0
      %375 = vmatprep.subr.mxu0 0.0
      %376 = vmatpush1.msra.mxu0 0.0
      %377 = vmatprep.subr.mxu0 0.0
      %378 = vmatpush1.msra.mxu0 0.0
      %379 = vmatprep.subr.mxu0 0.0
      %380 = vmatpush1.msra.mxu0 0.0
      %381 = vmatprep.subr.mxu0 0.0
      %382 = vmatpush1.msra.mxu0 0.0
      %383 = vmatprep.subr.mxu0 0.0
      %384 = vmatpush1.msra.mxu0 0.0
      %385 = vmatprep.subr.mxu0 0.0
      %386 = vmatpush1.msra.mxu0 0.0
      %387 = vmatprep.subr.mxu0 0.0
      %388 = vmatpush1.msra.mxu0 0.0
      %389 = vmatprep.subr.mxu0 0.0
      %390 = vmatpush1.msra.mxu0 0.0
      %391 = vmatprep.mubr.f32.mxu0 0.0
      %392 = vmatmul.mubr.f32.gmra.mrb[0].mxu0 %v325
      %v393 = vpop.f32.mrb[0].mxu0
      %v394 = vadd.f32 %v320, %v393
      %v395 = vpop.f32.mrb[0].mxu0
      %v396 = vadd.f32 %v322, %v395
      %397 = vdwg.mxu0
      %s398 = scalar_lea.vmem %s169, 16
      %v399 = vld [vmem:[%s398] sm:$0xff]
      %v401 = vsel %vm249, %v399, 0
      %403 = vmatprep.subr.mxu0 %v245
      %404 = vmatpush1.msra.mxu0 %v244
      %405 = vmatprep.subr.mxu0 0.0
      %406 = vmatpush1.msra.mxu0 0.0
      %407 = vmatprep.subr.mxu0 0.0
      %408 = vmatpush1.msra.mxu0 0.0
      %409 = vmatprep.subr.mxu0 0.0
      %410 = vmatpush1.msra.mxu0 0.0
      %411 = vmatprep.subr.mxu0 0.0
      %412 = vmatpush1.msra.mxu0 0.0
      %413 = vmatprep.subr.mxu0 0.0
      %414 = vmatpush1.msra.mxu0 0.0
      %415 = vmatprep.subr.mxu0 0.0
      %416 = vmatpush1.msra.mxu0 0.0
      %417 = vmatprep.subr.mxu0 0.0
      %418 = vmatpush1.msra.mxu0 0.0
      %419 = vmatprep.subr.mxu0 0.0
      %420 = vmatpush1.msra.mxu0 0.0
      %421 = vmatprep.subr.mxu0 0.0
      %422 = vmatpush1.msra.mxu0 0.0
      %423 = vmatprep.subr.mxu0 0.0
      %424 = vmatpush1.msra.mxu0 0.0
      %425 = vmatprep.subr.mxu0 0.0
      %426 = vmatpush1.msra.mxu0 0.0
      %427 = vmatprep.subr.mxu0 0.0
      %428 = vmatpush1.msra.mxu0 0.0
      %429 = vmatprep.subr.mxu0 0.0
      %430 = vmatpush1.msra.mxu0 0.0
      %431 = vmatprep.subr.mxu0 0.0
      %432 = vmatpush1.msra.mxu0 0.0
      %433 = vmatprep.subr.mxu0 0.0
      %434 = vmatpush1.msra.mxu0 0.0
      %435 = vmatprep.subr.mxu0 0.0
      %436 = vmatpush1.msra.mxu0 0.0
      %437 = vmatprep.subr.mxu0 0.0
      %438 = vmatpush1.msra.mxu0 0.0
      %439 = vmatprep.subr.mxu0 0.0
      %440 = vmatpush1.msra.mxu0 0.0
      %441 = vmatprep.subr.mxu0 0.0
      %442 = vmatpush1.msra.mxu0 0.0
      %443 = vmatprep.subr.mxu0 0.0
      %444 = vmatpush1.msra.mxu0 0.0
      %445 = vmatprep.subr.mxu0 0.0
      %446 = vmatpush1.msra.mxu0 0.0
      %447 = vmatprep.subr.mxu0 0.0
      %448 = vmatpush1.msra.mxu0 0.0
      %449 = vmatprep.subr.mxu0 0.0
      %450 = vmatpush1.msra.mxu0 0.0
      %451 = vmatprep.subr.mxu0 0.0
      %452 = vmatpush1.msra.mxu0 0.0
      %453 = vmatprep.subr.mxu0 0.0
      %454 = vmatpush1.msra.mxu0 0.0
      %455 = vmatprep.subr.mxu0 0.0
      %456 = vmatpush1.msra.mxu0 0.0
      %457 = vmatprep.subr.mxu0 0.0
      %458 = vmatpush1.msra.mxu0 0.0
      %459 = vmatprep.subr.mxu0 0.0
      %460 = vmatpush1.msra.mxu0 0.0
      %461 = vmatprep.subr.mxu0 0.0
      %462 = vmatpush1.msra.mxu0 0.0
      %463 = vmatprep.subr.mxu0 0.0
      %464 = vmatpush1.msra.mxu0 0.0
      %465 = vmatprep.subr.mxu0 0.0
      %466 = vmatpush1.msra.mxu0 0.0
      %467 = vmatprep.mubr.f32.mxu0 0.0
      %468 = vmatmul.mubr.f32.gmra.mrb[0].mxu0 %v401
      %v469 = vpop.f32.mrb[0].mxu0
      %v470 = vadd.f32 0.0, %v469
      %v471 = vpop.f32.mrb[0].mxu0
      %v472 = vadd.f32 0.0, %v471
      %473 = vdwg.mxu0
      %v474 = vadd.f32 %v394, %v470
      %v475 = vadd.f32 %v396, %v472
      %v477 = vlaneseq
      %v478 = vshrl.u32 %v477, 7
      %v479 = vsub.s32 0, %v478
      %v480 = vrot.slane %v228, %v479
      %v481 = vlaneseq
      %v482 = vshrl.u32 %v481, 7
      %v483 = vsub.s32 1, %v482
      %v484 = vrot.slane %v228, %v483
      %v487 = vmul.f32 %v474, %v480
      %v488 = vmul.f32 %v475, %v484
      %v489 = vadd.f32 %v487, %v488
      %490 = vadd.xlane.f32.xlu0 %v489
      %v491 = vpop.xlane.xlu0 %490
      %v492 = vmul.f32 %v487, %v487
      %v493 = vmul.f32 %v488, %v488
      %v494 = vadd.f32 %v492, %v493
      %495 = vadd.xlane.f32.xlu0 %v494
      %v496 = vpop.xlane.xlu0 %495
      %v497 = vmul.f32 %v491, 0.125
      %v498 = vmul.f32 %v496, 0.125
      %v499 = vmul.f32 %v497, %v497
      %v500 = vsub.f32 %v498, %v499
      %v501 = vmax.f32 %v500, 0.0
      %v502 = vsub.f32 %v474, %v497
      %v503 = vsub.f32 %v475, %v497
      %v504 = vadd.f32 %v501, 1e-05
      %v505 = vrsqrt.pop %v504
      %v506 = vmul.f32 %v502, %v505
      %v507 = vmul.f32 %v503, %v505
      %509 = vset.pattern.permute.xlu0 0
      %510 = vperm.xlu0 %509, %v229
      %v511 = vpop.permute.xlu0 %510
      %v513 = vmul.f32 %v506, %v511
      %v514 = vmul.f32 %v507, %v511
      %515 = vset.pattern.permute.xlu0 1
      %516 = vperm.xlu0 %515, %v229
      %v517 = vpop.permute.xlu0 %516
      %v519 = vadd.f32 %v513, %v517
      %v520 = vadd.f32 %v514, %v517
      %v521 = vmax.f32 %v519, 0.0
      %v522 = vmax.f32 %v520, 0.0
      %v523 = vmul.f32 %v521, %v480
      %v524 = vmul.f32 %v522, %v484
      %525 = vrot.lane.b32.xlu0 %v523, 1
      %v526 = vpop.permute.xlu0 %525
      %527 = vrot.lane.b32.xlu0 %v524, 1
      %v528 = vpop.permute.xlu0 %527
      %v529 = vsel %vm236, %v526, %v528
      %v530 = vsel %vm236, %v528, %v526
      %531 = vrot.lane.b32.xlu0 %v523, 127
      %v532 = vpop.permute.xlu0 %531
      %533 = vrot.lane.b32.xlu0 %v524, 127
      %v534 = vpop.permute.xlu0 %533
      %v535 = vsel %vm243, %v532, %v534
      %v536 = vsel %vm243, %v534, %v532
      %s537 = scalar_lea.vmem %s169, 24
      %v538 = vld [vmem:[%s537] sm:$0xff]
      %s539 = scalar_lea.vmem %s169, 32
      %v540 = vld [vmem:[%s539] sm:$0xff]
      %v542 = vsel %vm249, %v540, 0
      %544 = vmatprep.subr.mxu0 %v524
      %545 = vmatpush1.msra.mxu0 %v523
      %546 = vmatprep.subr.mxu0 0.0
      %547 = vmatpush1.msra.mxu0 0.0
      %548 = vmatprep.subr.mxu0 0.0
      %549 = vmatpush1.msra.mxu0 0.0
      %550 = vmatprep.subr.mxu0 0.0
      %551 = vmatpush1.msra.mxu0 0.0
      %552 = vmatprep.subr.mxu0 0.0
      %553 = vmatpush1.msra.mxu0 0.0
      %554 = vmatprep.subr.mxu0 0.0
      %555 = vmatpush1.msra.mxu0 0.0
      %556 = vmatprep.subr.mxu0 0.0
      %557 = vmatpush1.msra.mxu0 0.0
      %558 = vmatprep.subr.mxu0 0.0
      %559 = vmatpush1.msra.mxu0 0.0
      %560 = vmatprep.subr.mxu0 0.0
      %561 = vmatpush1.msra.mxu0 0.0
      %562 = vmatprep.subr.mxu0 0.0
      %563 = vmatpush1.msra.mxu0 0.0
      %564 = vmatprep.subr.mxu0 0.0
      %565 = vmatpush1.msra.mxu0 0.0
      %566 = vmatprep.subr.mxu0 0.0
      %567 = vmatpush1.msra.mxu0 0.0
      %568 = vmatprep.subr.mxu0 0.0
      %569 = vmatpush1.msra.mxu0 0.0
      %570 = vmatprep.subr.mxu0 0.0
      %571 = vmatpush1.msra.mxu0 0.0
      %572 = vmatprep.subr.mxu0 0.0
      %573 = vmatpush1.msra.mxu0 0.0
      %574 = vmatprep.subr.mxu0 0.0
      %575 = vmatpush1.msra.mxu0 0.0
      %576 = vmatprep.subr.mxu0 0.0
      %577 = vmatpush1.msra.mxu0 0.0
      %578 = vmatprep.subr.mxu0 0.0
      %579 = vmatpush1.msra.mxu0 0.0
      %580 = vmatprep.subr.mxu0 0.0
      %581 = vmatpush1.msra.mxu0 0.0
      %582 = vmatprep.subr.mxu0 0.0
      %583 = vmatpush1.msra.mxu0 0.0
      %584 = vmatprep.subr.mxu0 0.0
      %585 = vmatpush1.msra.mxu0 0.0
      %586 = vmatprep.subr.mxu0 0.0
      %587 = vmatpush1.msra.mxu0 0.0
      %588 = vmatprep.subr.mxu0 0.0
      %589 = vmatpush1.msra.mxu0 0.0
      %590 = vmatprep.subr.mxu0 0.0
      %591 = vmatpush1.msra.mxu0 0.0
      %592 = vmatprep.subr.mxu0 0.0
      %593 = vmatpush1.msra.mxu0 0.0
      %594 = vmatprep.subr.mxu0 0.0
      %595 = vmatpush1.msra.mxu0 0.0
      %596 = vmatprep.subr.mxu0 0.0
      %597 = vmatpush1.msra.mxu0 0.0
      %598 = vmatprep.subr.mxu0 0.0
      %599 = vmatpush1.msra.mxu0 0.0
      %600 = vmatprep.subr.mxu0 0.0
      %601 = vmatpush1.msra.mxu0 0.0
      %602 = vmatprep.subr.mxu0 0.0
      %603 = vmatpush1.msra.mxu0 0.0
      %604 = vmatprep.subr.mxu0 0.0
      %605 = vmatpush1.msra.mxu0 0.0
      %606 = vmatprep.subr.mxu0 0.0
      %607 = vmatpush1.msra.mxu0 0.0
      %608 = vmatprep.mubr.f32.mxu0 0.0
      %609 = vmatmul.mubr.f32.gmra.mrb[0].mxu0 %v542
      %v610 = vpop.f32.mrb[0].mxu0
      %v611 = vadd.f32 0.0, %v610
      %v612 = vpop.f32.mrb[0].mxu0
      %v613 = vadd.f32 0.0, %v612
      %614 = vdwg.mxu0
      %v616 = vsel %vm249, %v538, 0
      %618 = vmatprep.subr.mxu0 %v529
      %619 = vmatpush1.msra.mxu0 %v530
      %620 = vmatprep.subr.mxu0 0.0
      %621 = vmatpush1.msra.mxu0 0.0
      %622 = vmatprep.subr.mxu0 0.0
      %623 = vmatpush1.msra.mxu0 0.0
      %624 = vmatprep.subr.mxu0 0.0
      %625 = vmatpush1.msra.mxu0 0.0
      %626 = vmatprep.subr.mxu0 0.0
      %627 = vmatpush1.msra.mxu0 0.0
      %628 = vmatprep.subr.mxu0 0.0
      %629 = vmatpush1.msra.mxu0 0.0
      %630 = vmatprep.subr.mxu0 0.0
      %631 = vmatpush1.msra.mxu0 0.0
      %632 = vmatprep.subr.mxu0 0.0
      %633 = vmatpush1.msra.mxu0 0.0
      %634 = vmatprep.subr.mxu0 0.0
      %635 = vmatpush1.msra.mxu0 0.0
      %636 = vmatprep.subr.mxu0 0.0
      %637 = vmatpush1.msra.mxu0 0.0
      %638 = vmatprep.subr.mxu0 0.0
      %639 = vmatpush1.msra.mxu0 0.0
      %640 = vmatprep.subr.mxu0 0.0
      %641 = vmatpush1.msra.mxu0 0.0
      %642 = vmatprep.subr.mxu0 0.0
      %643 = vmatpush1.msra.mxu0 0.0
      %644 = vmatprep.subr.mxu0 0.0
      %645 = vmatpush1.msra.mxu0 0.0
      %646 = vmatprep.subr.mxu0 0.0
      %647 = vmatpush1.msra.mxu0 0.0
      %648 = vmatprep.subr.mxu0 0.0
      %649 = vmatpush1.msra.mxu0 0.0
      %650 = vmatprep.subr.mxu0 0.0
      %651 = vmatpush1.msra.mxu0 0.0
      %652 = vmatprep.subr.mxu0 0.0
      %653 = vmatpush1.msra.mxu0 0.0
      %654 = vmatprep.subr.mxu0 0.0
      %655 = vmatpush1.msra.mxu0 0.0
      %656 = vmatprep.subr.mxu0 0.0
      %657 = vmatpush1.msra.mxu0 0.0
      %658 = vmatprep.subr.mxu0 0.0
      %659 = vmatpush1.msra.mxu0 0.0
      %660 = vmatprep.subr.mxu0 0.0
      %661 = vmatpush1.msra.mxu0 0.0
      %662 = vmatprep.subr.mxu0 0.0
      %663 = vmatpush1.msra.mxu0 0.0
      %664 = vmatprep.subr.mxu0 0.0
      %665 = vmatpush1.msra.mxu0 0.0
      %666 = vmatprep.subr.mxu0 0.0
      %667 = vmatpush1.msra.mxu0 0.0
      %668 = vmatprep.subr.mxu0 0.0
      %669 = vmatpush1.msra.mxu0 0.0
      %670 = vmatprep.subr.mxu0 0.0
      %671 = vmatpush1.msra.mxu0 0.0
      %672 = vmatprep.subr.mxu0 0.0
      %673 = vmatpush1.msra.mxu0 0.0
      %674 = vmatprep.subr.mxu0 0.0
      %675 = vmatpush1.msra.mxu0 0.0
      %676 = vmatprep.subr.mxu0 0.0
      %677 = vmatpush1.msra.mxu0 0.0
      %678 = vmatprep.subr.mxu0 0.0
      %679 = vmatpush1.msra.mxu0 0.0
      %680 = vmatprep.subr.mxu0 0.0
      %681 = vmatpush1.msra.mxu0 0.0
      %682 = vmatprep.mubr.f32.mxu0 0.0
      %683 = vmatmul.mubr.f32.gmra.mrb[0].mxu0 %v616
      %v684 = vpop.f32.mrb[0].mxu0
      %v685 = vadd.f32 %v611, %v684
      %v686 = vpop.f32.mrb[0].mxu0
      %v687 = vadd.f32 %v613, %v686
      %688 = vdwg.mxu0
      %s689 = scalar_lea.vmem %s169, 40
      %v690 = vld [vmem:[%s689] sm:$0xff]
      %v692 = vsel %vm249, %v690, 0
      %694 = vmatprep.subr.mxu0 %v536
      %695 = vmatpush1.msra.mxu0 %v535
      %696 = vmatprep.subr.mxu0 0.0
      %697 = vmatpush1.msra.mxu0 0.0
      %698 = vmatprep.subr.mxu0 0.0
      %699 = vmatpush1.msra.mxu0 0.0
      %700 = vmatprep.subr.mxu0 0.0
      %701 = vmatpush1.msra.mxu0 0.0
      %702 = vmatprep.subr.mxu0 0.0
      %703 = vmatpush1.msra.mxu0 0.0
      %704 = vmatprep.subr.mxu0 0.0
      %705 = vmatpush1.msra.mxu0 0.0
      %706 = vmatprep.subr.mxu0 0.0
      %707 = vmatpush1.msra.mxu0 0.0
      %708 = vmatprep.subr.mxu0 0.0
      %709 = vmatpush1.msra.mxu0 0.0
      %710 = vmatprep.subr.mxu0 0.0
      %711 = vmatpush1.msra.mxu0 0.0
      %712 = vmatprep.subr.mxu0 0.0
      %713 = vmatpush1.msra.mxu0 0.0
      %714 = vmatprep.subr.mxu0 0.0
      %715 = vmatpush1.msra.mxu0 0.0
      %716 = vmatprep.subr.mxu0 0.0
      %717 = vmatpush1.msra.mxu0 0.0
      %718 = vmatprep.subr.mxu0 0.0
      %719 = vmatpush1.msra.mxu0 0.0
      %720 = vmatprep.subr.mxu0 0.0
      %721 = vmatpush1.msra.mxu0 0.0
      %722 = vmatprep.subr.mxu0 0.0
      %723 = vmatpush1.msra.mxu0 0.0
      %724 = vmatprep.subr.mxu0 0.0
      %725 = vmatpush1.msra.mxu0 0.0
      %726 = vmatprep.subr.mxu0 0.0
      %727 = vmatpush1.msra.mxu0 0.0
      %728 = vmatprep.subr.mxu0 0.0
      %729 = vmatpush1.msra.mxu0 0.0
      %730 = vmatprep.subr.mxu0 0.0
      %731 = vmatpush1.msra.mxu0 0.0
      %732 = vmatprep.subr.mxu0 0.0
      %733 = vmatpush1.msra.mxu0 0.0
      %734 = vmatprep.subr.mxu0 0.0
      %735 = vmatpush1.msra.mxu0 0.0
      %736 = vmatprep.subr.mxu0 0.0
      %737 = vmatpush1.msra.mxu0 0.0
      %738 = vmatprep.subr.mxu0 0.0
      %739 = vmatpush1.msra.mxu0 0.0
      %740 = vmatprep.subr.mxu0 0.0
      %741 = vmatpush1.msra.mxu0 0.0
      %742 = vmatprep.subr.mxu0 0.0
      %743 = vmatpush1.msra.mxu0 0.0
      %744 = vmatprep.subr.mxu0 0.0
      %745 = vmatpush1.msra.mxu0 0.0
      %746 = vmatprep.subr.mxu0 0.0
      %747 = vmatpush1.msra.mxu0 0.0
      %748 = vmatprep.subr.mxu0 0.0
      %749 = vmatpush1.msra.mxu0 0.0
      %750 = vmatprep.subr.mxu0 0.0
      %751 = vmatpush1.msra.mxu0 0.0
      %752 = vmatprep.subr.mxu0 0.0
      %753 = vmatpush1.msra.mxu0 0.0
      %754 = vmatprep.subr.mxu0 0.0
      %755 = vmatpush1.msra.mxu0 0.0
      %756 = vmatprep.subr.mxu0 0.0
      %757 = vmatpush1.msra.mxu0 0.0
      %758 = vmatprep.mubr.f32.mxu0 0.0
      %759 = vmatmul.mubr.f32.gmra.mrb[0].mxu0 %v692
      %v760 = vpop.f32.mrb[0].mxu0
      %v761 = vadd.f32 0.0, %v760
      %v762 = vpop.f32.mrb[0].mxu0
      %v763 = vadd.f32 0.0, %v762
      %764 = vdwg.mxu0
      %v765 = vadd.f32 %v685, %v761
      %v766 = vadd.f32 %v687, %v763
      %v767 = vmul.f32 %v765, %v480
      %v768 = vmul.f32 %v766, %v484
      %v769 = vadd.f32 %v767, %v768
      %770 = vadd.xlane.f32.xlu0 %v769
      %v771 = vpop.xlane.xlu0 %770
      %v772 = vmul.f32 %v767, %v767
      %v773 = vmul.f32 %v768, %v768
      %v774 = vadd.f32 %v772, %v773
      %775 = vadd.xlane.f32.xlu0 %v774
      %v776 = vpop.xlane.xlu0 %775
      %v777 = vmul.f32 %v771, 0.125
      %v778 = vmul.f32 %v776, 0.125
      %v779 = vmul.f32 %v777, %v777
      %v780 = vsub.f32 %v778, %v779
      %v781 = vmax.f32 %v780, 0.0
      %v782 = vsub.f32 %v765, %v777
      %v783 = vsub.f32 %v766, %v777
      %v784 = vadd.f32 %v781, 1e-05
      %v785 = vrsqrt.pop %v784
      %v786 = vmul.f32 %v782, %v785
      %v787 = vmul.f32 %v783, %v785
      %788 = vset.pattern.permute.xlu0 2
      %789 = vperm.xlu0 %788, %v229
      %v790 = vpop.permute.xlu0 %789
      %v792 = vmul.f32 %v786, %v790
      %v793 = vmul.f32 %v787, %v790
      %794 = vset.pattern.permute.xlu0 3
      %795 = vperm.xlu0 %794, %v229
      %v796 = vpop.permute.xlu0 %795
      %v798 = vadd.f32 %v792, %v796
      %v799 = vadd.f32 %v793, %v796
      %v800 = vadd.f32 %v798, %v226
      %v801 = vadd.f32 %v799, %v227
      %v802 = vmax.f32 %v800, 0.0
      %v803 = vmax.f32 %v801, 0.0
      %v804 = vmul.f32 %v802, %v480
      %v805 = vmul.f32 %v803, %v484
      %806 = vst [vmem:[%s4] sm:$0xff] %v804
      %807 = vst [vmem:[%s4 + $0x8] sm:$0xff] %v805
      // Predicated region
      $region72: #{downsample_forward.12} parent=31 // pred_check
        %p808 = pneg %p101
      $region73: #{downsample_forward.12} parent=31 // pred_check_branch
        %810 = sbr.rel (%p808) target = $region75
      $region74: #{downsample_forward.12} parent=31 // pred_region
        _
      $region75: #{downsample_forward.12} parent=31 // pred_fallthru
        _
      // Predicated region
      $region76: #{downsample_forward.12} parent=31 // pred_check
        %p811 = pneg %p101
      $region77: #{downsample_forward.12} parent=31 // pred_check_branch
        %813 = sbr.rel (%p811) target = $region79
      $region78: #{downsample_forward.12} parent=31 // pred_region
        _
      $region79: #{downsample_forward.12} parent=31 // pred_fallthru
        _
    $region32: #{downsample_forward.12} parent=5 // pred_fallthru
      _
    %p814 = scmp.le.s32.totalorder 2, %s10
    // Predicated region
    $region80: #{downsample_forward.12} parent=5 // pred_check
      %p815 = pneg %p814
    $region81: #{downsample_forward.12} parent=5 // pred_check_branch
      %817 = sbr.rel (%p815) target = $region83
    $region82: #{downsample_forward.12} parent=5 // pred_region
      %s818 = ssub.s32 %s10, 2
    $region83: #{downsample_forward.12} parent=5 // pred_fallthru
      _
  $region6: #{downsample_forward.12} parent=0 // loop_footer
    %s14 = sadd.s32 1, %s10
  $region7: #{downsample_forward.12} parent=0 // loop_footer_branch
    %9 = sbr.rel target = $region3
  $region8: #{downsample_forward.12} parent=0 // loop_exit
    _

// kernel: downsample_forward.13
$region0: #{downsample_forward.13}
  #allocation0 [shape = 'u32[]', space=smem, size = 0x4, offset = 0x4, fixed_abs, tag = 'smem constant byte address 0x4 - core index']
  #allocation1 [shape = 'u32[144,128]{1,0:T(1,128)}', space=vmem, size = 0x12000, scoped, tag = 'internal scratch']
  %s0 = inlined_call_operand.vmem [shape: f32[32,256], index: 0, kind: input, shape index: {}]
  %s1 = inlined_call_operand.vmem [shape: f32[8,256], index: 1, kind: output, shape index: {}]
  %s2 = sld [smem:[#allocation0]]
  $region14: #{downsample_forward.13} parent=0
    _
  %s4 = ssub.s32 1, %s2
  %s5 = scalar_select 0, %s4, %s2
  // Predicated region
  $region2: #{downsample_forward.13} parent=0 // pred_check
    _
  $region3: #{downsample_forward.13} parent=0 // pred_check_branch
    %7 = sbr.rel (0) target = $region5
  $region4: #{downsample_forward.13} parent=0 // pred_region
    _
  $region5: #{downsample_forward.13} parent=0 // pred_fallthru
    _
  %v8 = vld [vmem:[%s0] sm:$0xff]
  %v9 = vld [vmem:[%s0 + $0x8] sm:$0xff]
  %v10 = vld [vmem:[%s0 + $0x10] sm:$0xff]
  %v11 = vld [vmem:[%s0 + $0x18] sm:$0xff]
  %v12 = vld [vmem:[%s0 + $0x20] sm:$0xff]
  %v13 = vld [vmem:[%s0 + $0x28] sm:$0xff]
  %v14 = vld [vmem:[%s0 + $0x30] sm:$0xff]
  %v15 = vld [vmem:[%s0 + $0x38] sm:$0xff]
  %v16 = vadd.f32 %v8, 0.0
  %v17 = vadd.f32 %v9, 0.0
  %v18 = vadd.f32 %v16, %v10
  %v19 = vadd.f32 %v17, %v11
  %20 = vrot.lane.b32.xlu0 %v8, 127
  %v21 = vpop.permute.xlu0 %20
  %22 = vrot.lane.b32.xlu0 %v9, 127
  %v23 = vpop.permute.xlu0 %22
  %v24 = vlaneseq
  %v25 = vand.u32 %v24, 127
  %vm26 = vcmp.lt.s32.totalorder %v25, 127
  %v27 = vsel %vm26, %v21, %v23
  %v28 = vsel %vm26, %v23, %v21
  %v29 = vadd.f32 %v18, %v27
  %v30 = vadd.f32 %v19, %v28
  %v31 = vadd.f32 %v29, %v12
  %v32 = vadd.f32 %v30, %v13
  %v33 = vadd.f32 %v31, %v14
  %v34 = vadd.f32 %v32, %v15
  %35 = vrot.lane.b32.xlu0 %v12, 127
  %v36 = vpop.permute.xlu0 %35
  %37 = vrot.lane.b32.xlu0 %v13, 127
  %v38 = vpop.permute.xlu0 %37
  %v39 = vsel %vm26, %v36, %v38
  %v40 = vsel %vm26, %v38, %v36
  %v41 = vadd.f32 %v33, %v39
  %v42 = vadd.f32 %v34, %v40
  %43 = vrot.lane.b32.xlu0 %v8, 126
  %v44 = vpop.permute.xlu0 %43
  %45 = vrot.lane.b32.xlu0 %v9, 126
  %v46 = vpop.permute.xlu0 %45
  %vm47 = vcmp.lt.s32.totalorder %v25, 126
  %v48 = vsel %vm47, %v44, %v46
  %v49 = vsel %vm47, %v46, %v44
  %v50 = vadd.f32 %v41, %v48
  %v51 = vadd.f32 %v42, %v49
  %52 = vrot.lane.b32.xlu0 %v10, 126
  %v53 = vpop.permute.xlu0 %52
  %54 = vrot.lane.b32.xlu0 %v11, 126
  %v55 = vpop.permute.xlu0 %54
  %v56 = vsel %vm47, %v53, %v55
  %v57 = vsel %vm47, %v55, %v53
  %v58 = vadd.f32 %v50, %v56
  %v59 = vadd.f32 %v51, %v57
  %60 = vrot.lane.b32.xlu0 %v8, 125
  %v61 = vpop.permute.xlu0 %60
  %62 = vrot.lane.b32.xlu0 %v9, 125
  %v63 = vpop.permute.xlu0 %62
  %vm64 = vcmp.lt.s32.totalorder %v25, 125
  %v65 = vsel %vm64, %v61, %v63
  %v66 = vsel %vm64, %v63, %v61
  %v67 = vadd.f32 %v58, %v65
  %v68 = vadd.f32 %v59, %v66
  %v69 = vmul.f32 %v67, 0.11111111
  %v70 = vmul.f32 %v68, 0.11111111
  %71 = vst [vmem:[%s1] sm:$0xff] %v69
  %72 = vst [vmem:[%s1 + $0x8] sm:$0xff] %v70
  // Predicated region
  $region6: #{downsample_forward.13} parent=0 // pred_check
    _
  $region7: #{downsample_forward.13} parent=0 // pred_check_branch
    %74 = sbr.rel (0) target = $region9
  $region8: #{downsample_forward.13} parent=0 // pred_region
    _
  $region9: #{downsample_forward.13} parent=0 // pred_fallthru
    _
  // Predicated region
  $region10: #{downsample_forward.13} parent=0 // pred_check
    _
  $region11: #{downsample_forward.13} parent=0 // pred_check_branch
    %76 = sbr.rel (0) target = $region13
  $region12: #{downsample_forward.13} parent=0 // pred_region
    _
  $region13: #{downsample_forward.13} parent=0 // pred_fallthru
    _

</llo_original>
